<compile_context>
chip_gen: v7x
topology: tpu7x:2x2x1
jax: 0.10.0
libtpu: 0.0.40
codegen_flags: <defaults>
</compile_context>

<pallas_src>
import functools

import numpy as np
import jax
import jax.numpy as jnp
from jax.experimental import pallas as pl
from jax.experimental.pallas import tpu as pltpu


KH = KW = 3            # all three convs are 3x3, stride 1, VALID
C1, C2, C3 = 6, 16, 32  # conv output channels (fixed by the module)
FC1_N = 256
N_PAD = 128            # final q-value lane padding (lane-dense store)


# ------------------------------ fused kernel ------------------------------- #
def _dqn_kernel(x_ref, t1_ref, b1_ref, t2_ref, b2_ref, t3_ref, b3_ref,
                wfc1_ref, bfc1_ref, wfc2_ref, bfc2_ref,
                o_ref, a1_ref, a2_ref, a3_ref, *, batch, rows, hv):
    """Whole DQN forward, fully VMEM-resident (single grid point)."""

    def conv_layer(src_ref, t_ref, b_ref, dst_ref):
        n_cols = t_ref.shape[2]
        acc = jnp.zeros((rows, n_cols), jnp.float32)
        for dy in range(KH):                       # 3 MXU matmuls per layer
            acc += jnp.dot(src_ref[pl.ds(dy * batch, rows), :], t_ref[dy],
                           preferred_element_type=jnp.float32)
        dst_ref[pl.ds(0, rows), :] = jnp.maximum(acc + b_ref[...], 0.0)
        # Zero the shift-margin rows so later shifted reads stay finite.
        pad = dst_ref.shape[0] - rows
        dst_ref[pl.ds(rows, pad), :] = jnp.zeros((pad, n_cols), jnp.float32)

    conv_layer(x_ref, t1_ref, b1_ref, a1_ref)      # conv1 + ReLU
    conv_layer(a1_ref, t2_ref, b2_ref, a2_ref)     # conv2 + ReLU
    conv_layer(a2_ref, t3_ref, b3_ref, a3_ref)     # conv3 + ReLU

    # fc1: contract the (hv x hv x C3) valid region, one small matmul per y.
    k_fc = wfc1_ref.shape[1]                       # = hv * C3 (valid cols)
    acc = jnp.zeros((batch, wfc1_ref.shape[2]), jnp.float32)
    for y in range(hv):
        lhs = a3_ref[pl.ds(y * batch, batch), pl.ds(0, k_fc)]   # (B, hv*C3)
        acc += jnp.dot(lhs, wfc1_ref[y], preferred_element_type=jnp.float32)
    h = jnp.maximum(acc + bfc1_ref[...], 0.0)

    # fc2 (output features zero-padded to 128 lanes for a lane-dense store)
    o_ref[...] = jnp.dot(h, wfc2_ref[...],
                         preferred_element_type=jnp.float32) + bfc2_ref[...]


# --------------------- one-time parameter re-layout ------------------------ #
def prepare_params(params, input_dims, n_actions):
    """Repack PyTorch-layout parameters into kernel layouts (runs once)."""
    c_in, h, w = input_dims
    hv, wv = h - 6, w - 6
    prepped = {}

    # Conv weights -> block-Toeplitz matrices: T[dy] has shape (W*Cin, W*Cout),
    # T[dy][(xi*Cin+c), (xo*Cout+n)] = W[n, c, dy, xi-xo] for 0 <= xi-xo < KW.
    for name, c_prev in (("conv1", c_in), ("conv2", C1), ("conv3", C2)):
        wt, bias = params[name]
        wt = np.asarray(wt, np.float32)                       # (cout, cin, 3, 3)
        cout = wt.shape[0]
        t = np.zeros((KH, w * c_prev, w * cout), np.float32)
        for dy in range(KH):
            for dx in range(KW):
                blk = wt[:, :, dy, dx].T                      # (cin, cout)
                for xo in range(w - dx):
                    xi = xo + dx
                    t[dy, xi * c_prev:(xi + 1) * c_prev,
                      xo * cout:(xo + 1) * cout] = blk
        b_rep = np.tile(np.asarray(bias, np.float32), w)[None, :]   # (1, W*cout)
        prepped[name] = (jnp.asarray(t), jnp.asarray(b_rep))

    # fc1: PyTorch NCHW flatten (c, y, x) -> per-row-y blocks ordered (x, c).
    w_fc1, b_fc1 = params["fc1"]
    wf = np.asarray(w_fc1, np.float32).reshape(FC1_N, C3, hv, wv)   # (n,c,y,x)
    wf = wf.transpose(2, 3, 1, 0).reshape(hv, wv * C3, FC1_N)       # (y, x*c, n)
    prepped["fc1"] = (jnp.asarray(wf),
                      jnp.asarray(np.asarray(b_fc1, np.float32)[None, :]))

    # fc2: transpose + zero-pad the output feature dim to 128 lanes.
    w_fc2, b_fc2 = params["fc2"]
    w2 = np.zeros((FC1_N, N_PAD), np.float32)
    w2[:, :n_actions] = np.asarray(w_fc2, np.float32).T
    b2 = np.zeros((1, N_PAD), np.float32)
    b2[0, :n_actions] = np.asarray(b_fc2, np.float32)
    prepped["fc2"] = (jnp.asarray(w2), jnp.asarray(b2))
    return prepped


# ------------------------------ jitted wrapper ------------------------------ #
@functools.partial(jax.jit, static_argnames=("n_actions",))
def dqn_forward(x_nchw, prepped, *, n_actions):
    """Fused Pallas forward. x_nchw: (B, C, H, W) -> q_values (B, n_actions)."""
    B, C, H, W = x_nchw.shape
    rows = H * B                       # valid rows of the (y, b) grid
    rpad = (KH - 1) * B                # margin rows for the dy row shifts
    hv = H - 6

    t1, b1 = prepped["conv1"]
    t2, b2 = prepped["conv2"]
    t3, b3 = prepped["conv3"]
    wfc1, bfc1 = prepped["fc1"]
    wfc2, bfc2 = prepped["fc2"]

    # NCHW -> rows=(y, b), cols=(x, c); zero margin rows appended below.
    x2d = jnp.transpose(x_nchw.astype(jnp.float32), (2, 0, 3, 1)).reshape(rows, W * C)
    x2d = jnp.pad(x2d, ((0, rpad), (0, 0)))

    scratch_shapes = [(rows + rpad, W * C1), (rows + rpad, W * C2), (rows + rpad, W * C3)]
    operands = (x2d, t1, b1, t2, b2, t3, b3, wfc1, bfc1, wfc2, bfc2)

    # Whole-problem-in-VMEM guard (single fused call, no grid).
    vmem_bytes = sum(int(np.prod(a.shape)) * 4 for a in operands)
    vmem_bytes += sum(int(np.prod(s)) * 4 for s in scratch_shapes) + B * N_PAD * 4
    assert vmem_bytes < 12 * 1024 * 1024, (
        f"fused DQN kernel needs ~{vmem_bytes / 2**20:.1f} MiB VMEM; "
        "tile the (y,b) row axis with a grid before scaling up")

    q_pad = pl.pallas_call(
        functools.partial(_dqn_kernel, batch=B, rows=rows, hv=hv),
        out_shape=jax.ShapeDtypeStruct((B, N_PAD), jnp.float32),
        in_specs=[pl.BlockSpec(memory_space=pltpu.MemorySpace.VMEM)] * len(operands),
        out_specs=pl.BlockSpec(memory_space=pltpu.MemorySpace.VMEM),
        scratch_shapes=[pltpu.VMEM(s, jnp.float32) for s in scratch_shapes],
        compiler_params=pltpu.CompilerParams(vmem_limit_bytes=32 * 1024 * 1024),
    )(*operands)
    return q_pad[:, :n_actions]


# --------------------------- reference (plain JAX) -------------------------- #
def reference_forward(x_nchw, params):
    y = x_nchw.astype(jnp.float32)
    for name in ("conv1", "conv2", "conv3"):
        w, b = params[name]
        y = jax.lax.conv_general_dilated(
            y, w, window_strides=(1, 1), padding="VALID",
            dimension_numbers=("NCHW", "OIHW", "NCHW"))
        y = jnp.maximum(y + b[None, :, None, None], 0.0)
    flat = y.reshape(y.shape[0], -1)                   # NCHW flatten
    w_fc1, b_fc1 = params["fc1"]
    h = jnp.maximum(flat @ w_fc1.T + b_fc1, 0.0)
    w_fc2, b_fc2 = params["fc2"]
    return h @ w_fc2.T + b_fc2


# ----------------------------- parameter init ------------------------------ #
def init_params(key, input_dims, n_actions):
    """Deterministic PyTorch-style (U(-1/sqrt(fan_in), 1/sqrt(fan_in))) init."""
    c, h, w = input_dims
    flatten_dim = (h - 6) * (w - 6) * 32
    specs = {
        "conv1": ((6, c, 3, 3), c * 9),
        "conv2": ((16, 6, 3, 3), 6 * 9),
        "conv3": ((32, 16, 3, 3), 16 * 9),
        "fc1": ((256, flatten_dim), flatten_dim),
        "fc2": ((n_actions, 256), 256),
    }
    params = {}
    for name, (shape, fan_in) in specs.items():
        key, kw_, kb_ = jax.random.split(key, 3)
        bound = 1.0 / (fan_in ** 0.5)
        w_ = jax.random.uniform(kw_, shape, jnp.float32, -bound, bound)
        b_ = jax.random.uniform(kb_, (shape[0],), jnp.float32, -bound, bound)
        params[name] = (w_, b_)
    return params
    # TODO(synk): optimizer (Adam) and MSELoss are training-time-only; not part
    # of the forward pass, so not translated.


if __name__ == "__main__":
    key = jax.random.PRNGKey(0)
    B, C, H, W = 2, 4, 16, 16
    n_actions = 5
    k_x, k_p = jax.random.split(key)

    x = jax.random.normal(k_x, (B, C, H, W), dtype=jnp.float32)    # NCHW input
    params = init_params(k_p, (C, H, W), n_actions)
    prepped = prepare_params(params, (C, H, W), n_actions)          # one-time

    q = jax.block_until_ready(dqn_forward(x, prepped, n_actions=n_actions))
    q_ref = reference_forward(x, params)

    assert q.shape == (B, n_actions), q.shape
    max_err = float(jnp.max(jnp.abs(q - q_ref)))
    assert jnp.allclose(q, q_ref, rtol=1e-3, atol=1e-3), max_err
    print("KERNEL_OK")
</pallas_src>

<mosaic_0001>
module attributes {stable_mosaic.version = 11 : i64} {
  func.func @_dqn_kernel(%arg0: memref<36x64xf32, #tpu.memory_space<vmem>>, %arg1: memref<3x64x96xf32, #tpu.memory_space<vmem>>, %arg2: memref<1x96xf32, #tpu.memory_space<vmem>>, %arg3: memref<3x96x256xf32, #tpu.memory_space<vmem>>, %arg4: memref<1x256xf32, #tpu.memory_space<vmem>>, %arg5: memref<3x256x512xf32, #tpu.memory_space<vmem>>, %arg6: memref<1x512xf32, #tpu.memory_space<vmem>>, %arg7: memref<10x320x256xf32, #tpu.memory_space<vmem>>, %arg8: memref<1x256xf32, #tpu.memory_space<vmem>>, %arg9: memref<256x128xf32, #tpu.memory_space<vmem>>, %arg10: memref<1x128xf32, #tpu.memory_space<vmem>>, %arg11: memref<2x128xf32, #tpu.memory_space<vmem>>, %arg12: memref<36x96xf32, #tpu.memory_space<vmem>>, %arg13: memref<36x256xf32, #tpu.memory_space<vmem>>, %arg14: memref<36x512xf32, #tpu.memory_space<vmem>>) attributes {dimension_semantics = [], scalar_prefetch = 0 : i64, scratch_operands = 3 : i64, tpu.core_type = #tpu.core_type<tc>} {
    %cst = arith.constant 0.000000e+00 : f32
    %0 = vector.broadcast %cst : f32 to vector<32x96xf32>
    %c0 = arith.constant 0 : index
    %c0_0 = arith.constant 0 : index
    %1 = vector.load %arg0[%c0, %c0_0] : memref<36x64xf32, #tpu.memory_space<vmem>>, vector<32x64xf32>
    %c0_1 = arith.constant 0 : index
    %c0_2 = arith.constant 0 : index
    %c0_3 = arith.constant 0 : index
    %2 = vector.load %arg1[%c0_1, %c0_2, %c0_3] : memref<3x64x96xf32, #tpu.memory_space<vmem>>, vector<1x64x96xf32>
    %3 = vector.shape_cast %2 : vector<1x64x96xf32> to vector<64x96xf32>
    %cst_4 = arith.constant dense<0.000000e+00> : vector<32x96xf32>
    %4 = tpu.matmul %1, %3, %cst_4 {dimension_numbers = #tpu.dot_dimension_numbers<[1], [0], [0], [1], [0, 0, 1, 1], [], []>} : vector<32x64xf32>, vector<64x96xf32>, vector<32x96xf32> -> vector<32x96xf32>
    %5 = arith.addf %0, %4 : vector<32x96xf32>
    %c2 = arith.constant 2 : index
    %c0_5 = arith.constant 0 : index
    %6 = vector.load %arg0[%c2, %c0_5] : memref<36x64xf32, #tpu.memory_space<vmem>>, vector<32x64xf32>
    %c1 = arith.constant 1 : index
    %c0_6 = arith.constant 0 : index
    %c0_7 = arith.constant 0 : index
    %7 = vector.load %arg1[%c1, %c0_6, %c0_7] : memref<3x64x96xf32, #tpu.memory_space<vmem>>, vector<1x64x96xf32>
    %8 = vector.shape_cast %7 : vector<1x64x96xf32> to vector<64x96xf32>
    %cst_8 = arith.constant dense<0.000000e+00> : vector<32x96xf32>
    %9 = tpu.matmul %6, %8, %cst_8 {dimension_numbers = #tpu.dot_dimension_numbers<[1], [0], [0], [1], [0, 0, 1, 1], [], []>} : vector<32x64xf32>, vector<64x96xf32>, vector<32x96xf32> -> vector<32x96xf32>
    %10 = arith.addf %5, %9 : vector<32x96xf32>
    %c4 = arith.constant 4 : index
    %c0_9 = arith.constant 0 : index
    %11 = vector.load %arg0[%c4, %c0_9] : memref<36x64xf32, #tpu.memory_space<vmem>>, vector<32x64xf32>
    %c2_10 = arith.constant 2 : index
    %c0_11 = arith.constant 0 : index
    %c0_12 = arith.constant 0 : index
    %12 = vector.load %arg1[%c2_10, %c0_11, %c0_12] : memref<3x64x96xf32, #tpu.memory_space<vmem>>, vector<1x64x96xf32>
    %13 = vector.shape_cast %12 : vector<1x64x96xf32> to vector<64x96xf32>
    %cst_13 = arith.constant dense<0.000000e+00> : vector<32x96xf32>
    %14 = tpu.matmul %11, %13, %cst_13 {dimension_numbers = #tpu.dot_dimension_numbers<[1], [0], [0], [1], [0, 0, 1, 1], [], []>} : vector<32x64xf32>, vector<64x96xf32>, vector<32x96xf32> -> vector<32x96xf32>
    %15 = arith.addf %10, %14 : vector<32x96xf32>
    %c0_14 = arith.constant 0 : index
    %c0_15 = arith.constant 0 : index
    %16 = vector.load %arg2[%c0_14, %c0_15] : memref<1x96xf32, #tpu.memory_space<vmem>>, vector<1x96xf32>
    %17 = vector.broadcast %16 : vector<1x96xf32> to vector<32x96xf32>
    %18 = arith.addf %15, %17 : vector<32x96xf32>
    %cst_16 = arith.constant 0.000000e+00 : f32
    %19 = vector.broadcast %cst_16 : f32 to vector<32x96xf32>
    %20 = arith.maximumf %18, %19 : vector<32x96xf32>
    %c0_17 = arith.constant 0 : index
    %c0_18 = arith.constant 0 : index
    %21 = vector.load %arg12[%c0_17, %c0_18] : memref<36x96xf32, #tpu.memory_space<vmem>>, vector<32x96xf32>
    tpu.vector_store %arg12[%c0_17, %c0_18], %20 {strides = array<i32>} : memref<36x96xf32, #tpu.memory_space<vmem>>, vector<32x96xf32>,
    %cst_19 = arith.constant 0.000000e+00 : f32
    %22 = vector.broadcast %cst_19 : f32 to vector<4x96xf32>
    %c32 = arith.constant 32 : index
    %c0_20 = arith.constant 0 : index
    %23 = vector.load %arg12[%c32, %c0_20] : memref<36x96xf32, #tpu.memory_space<vmem>>, vector<4x96xf32>
    tpu.vector_store %arg12[%c32, %c0_20], %22 {strides = array<i32>} : memref<36x96xf32, #tpu.memory_space<vmem>>, vector<4x96xf32>,
    %cst_21 = arith.constant 0.000000e+00 : f32
    %24 = vector.broadcast %cst_21 : f32 to vector<32x256xf32>
    %c0_22 = arith.constant 0 : index
    %c0_23 = arith.constant 0 : index
    %25 = vector.load %arg12[%c0_22, %c0_23] : memref<36x96xf32, #tpu.memory_space<vmem>>, vector<32x96xf32>
    %c0_24 = arith.constant 0 : index
    %c0_25 = arith.constant 0 : index
    %c0_26 = arith.constant 0 : index
    %26 = vector.load %arg3[%c0_24, %c0_25, %c0_26] : memref<3x96x256xf32, #tpu.memory_space<vmem>>, vector<1x96x256xf32>
    %27 = vector.shape_cast %26 : vector<1x96x256xf32> to vector<96x256xf32>
    %cst_27 = arith.constant dense<0.000000e+00> : vector<32x256xf32>
    %28 = tpu.matmul %25, %27, %cst_27 {dimension_numbers = #tpu.dot_dimension_numbers<[1], [0], [0], [1], [0, 0, 1, 1], [], []>} : vector<32x96xf32>, vector<96x256xf32>, vector<32x256xf32> -> vector<32x256xf32>
    %29 = arith.addf %24, %28 : vector<32x256xf32>
    %c2_28 = arith.constant 2 : index
    %c0_29 = arith.constant 0 : index
    %30 = vector.load %arg12[%c2_28, %c0_29] : memref<36x96xf32, #tpu.memory_space<vmem>>, vector<32x96xf32>
    %c1_30 = arith.constant 1 : index
    %c0_31 = arith.constant 0 : index
    %c0_32 = arith.constant 0 : index
    %31 = vector.load %arg3[%c1_30, %c0_31, %c0_32] : memref<3x96x256xf32, #tpu.memory_space<vmem>>, vector<1x96x256xf32>
    %32 = vector.shape_cast %31 : vector<1x96x256xf32> to vector<96x256xf32>
    %cst_33 = arith.constant dense<0.000000e+00> : vector<32x256xf32>
    %33 = tpu.matmul %30, %32, %cst_33 {dimension_numbers = #tpu.dot_dimension_numbers<[1], [0], [0], [1], [0, 0, 1, 1], [], []>} : vector<32x96xf32>, vector<96x256xf32>, vector<32x256xf32> -> vector<32x256xf32>
    %34 = arith.addf %29, %33 : vector<32x256xf32>
    %c4_34 = arith.constant 4 : index
    %c0_35 = arith.constant 0 : index
    %35 = vector.load %arg12[%c4_34, %c0_35] : memref<36x96xf32, #tpu.memory_space<vmem>>, vector<32x96xf32>
    %c2_36 = arith.constant 2 : index
    %c0_37 = arith.constant 0 : index
    %c0_38 = arith.constant 0 : index
    %36 = vector.load %arg3[%c2_36, %c0_37, %c0_38] : memref<3x96x256xf32, #tpu.memory_space<vmem>>, vector<1x96x256xf32>
    %37 = vector.shape_cast %36 : vector<1x96x256xf32> to vector<96x256xf32>
    %cst_39 = arith.constant dense<0.000000e+00> : vector<32x256xf32>
    %38 = tpu.matmul %35, %37, %cst_39 {dimension_numbers = #tpu.dot_dimension_numbers<[1], [0], [0], [1], [0, 0, 1, 1], [], []>} : vector<32x96xf32>, vector<96x256xf32>, vector<32x256xf32> -> vector<32x256xf32>
    %39 = arith.addf %34, %38 : vector<32x256xf32>
    %c0_40 = arith.constant 0 : index
    %c0_41 = arith.constant 0 : index
    %40 = vector.load %arg4[%c0_40, %c0_41] : memref<1x256xf32, #tpu.memory_space<vmem>>, vector<1x256xf32>
    %41 = vector.broadcast %40 : vector<1x256xf32> to vector<32x256xf32>
    %42 = arith.addf %39, %41 : vector<32x256xf32>
    %cst_42 = arith.constant 0.000000e+00 : f32
    %43 = vector.broadcast %cst_42 : f32 to vector<32x256xf32>
    %44 = arith.maximumf %42, %43 : vector<32x256xf32>
    %c0_43 = arith.constant 0 : index
    %c0_44 = arith.constant 0 : index
    %45 = vector.load %arg13[%c0_43, %c0_44] : memref<36x256xf32, #tpu.memory_space<vmem>>, vector<32x256xf32>
    tpu.vector_store %arg13[%c0_43, %c0_44], %44 {strides = array<i32>} : memref<36x256xf32, #tpu.memory_space<vmem>>, vector<32x256xf32>,
    %cst_45 = arith.constant 0.000000e+00 : f32
    %46 = vector.broadcast %cst_45 : f32 to vector<4x256xf32>
    %c32_46 = arith.constant 32 : index
    %c0_47 = arith.constant 0 : index
    %47 = vector.load %arg13[%c32_46, %c0_47] : memref<36x256xf32, #tpu.memory_space<vmem>>, vector<4x256xf32>
    tpu.vector_store %arg13[%c32_46, %c0_47], %46 {strides = array<i32>} : memref<36x256xf32, #tpu.memory_space<vmem>>, vector<4x256xf32>,
    %cst_48 = arith.constant 0.000000e+00 : f32
    %48 = vector.broadcast %cst_48 : f32 to vector<32x512xf32>
    %c0_49 = arith.constant 0 : index
    %c0_50 = arith.constant 0 : index
    %49 = vector.load %arg13[%c0_49, %c0_50] : memref<36x256xf32, #tpu.memory_space<vmem>>, vector<32x256xf32>
    %c0_51 = arith.constant 0 : index
    %c0_52 = arith.constant 0 : index
    %c0_53 = arith.constant 0 : index
    %50 = vector.load %arg5[%c0_51, %c0_52, %c0_53] : memref<3x256x512xf32, #tpu.memory_space<vmem>>, vector<1x256x512xf32>
    %51 = vector.shape_cast %50 : vector<1x256x512xf32> to vector<256x512xf32>
    %cst_54 = arith.constant dense<0.000000e+00> : vector<32x512xf32>
    %52 = tpu.matmul %49, %51, %cst_54 {dimension_numbers = #tpu.dot_dimension_numbers<[1], [0], [0], [1], [0, 0, 1, 1], [], []>} : vector<32x256xf32>, vector<256x512xf32>, vector<32x512xf32> -> vector<32x512xf32>
    %53 = arith.addf %48, %52 : vector<32x512xf32>
    %c2_55 = arith.constant 2 : index
    %c0_56 = arith.constant 0 : index
    %54 = vector.load %arg13[%c2_55, %c0_56] : memref<36x256xf32, #tpu.memory_space<vmem>>, vector<32x256xf32>
    %c1_57 = arith.constant 1 : index
    %c0_58 = arith.constant 0 : index
    %c0_59 = arith.constant 0 : index
    %55 = vector.load %arg5[%c1_57, %c0_58, %c0_59] : memref<3x256x512xf32, #tpu.memory_space<vmem>>, vector<1x256x512xf32>
    %56 = vector.shape_cast %55 : vector<1x256x512xf32> to vector<256x512xf32>
    %cst_60 = arith.constant dense<0.000000e+00> : vector<32x512xf32>
    %57 = tpu.matmul %54, %56, %cst_60 {dimension_numbers = #tpu.dot_dimension_numbers<[1], [0], [0], [1], [0, 0, 1, 1], [], []>} : vector<32x256xf32>, vector<256x512xf32>, vector<32x512xf32> -> vector<32x512xf32>
    %58 = arith.addf %53, %57 : vector<32x512xf32>
    %c4_61 = arith.constant 4 : index
    %c0_62 = arith.constant 0 : index
    %59 = vector.load %arg13[%c4_61, %c0_62] : memref<36x256xf32, #tpu.memory_space<vmem>>, vector<32x256xf32>
    %c2_63 = arith.constant 2 : index
    %c0_64 = arith.constant 0 : index
    %c0_65 = arith.constant 0 : index
    %60 = vector.load %arg5[%c2_63, %c0_64, %c0_65] : memref<3x256x512xf32, #tpu.memory_space<vmem>>, vector<1x256x512xf32>
    %61 = vector.shape_cast %60 : vector<1x256x512xf32> to vector<256x512xf32>
    %cst_66 = arith.constant dense<0.000000e+00> : vector<32x512xf32>
    %62 = tpu.matmul %59, %61, %cst_66 {dimension_numbers = #tpu.dot_dimension_numbers<[1], [0], [0], [1], [0, 0, 1, 1], [], []>} : vector<32x256xf32>, vector<256x512xf32>, vector<32x512xf32> -> vector<32x512xf32>
    %63 = arith.addf %58, %62 : vector<32x512xf32>
    %c0_67 = arith.constant 0 : index
    %c0_68 = arith.constant 0 : index
    %64 = vector.load %arg6[%c0_67, %c0_68] : memref<1x512xf32, #tpu.memory_space<vmem>>, vector<1x512xf32>
    %65 = vector.broadcast %64 : vector<1x512xf32> to vector<32x512xf32>
    %66 = arith.addf %63, %65 : vector<32x512xf32>
    %cst_69 = arith.constant 0.000000e+00 : f32
    %67 = vector.broadcast %cst_69 : f32 to vector<32x512xf32>
    %68 = arith.maximumf %66, %67 : vector<32x512xf32>
    %c0_70 = arith.constant 0 : index
    %c0_71 = arith.constant 0 : index
    %69 = vector.load %arg14[%c0_70, %c0_71] : memref<36x512xf32, #tpu.memory_space<vmem>>, vector<32x512xf32>
    tpu.vector_store %arg14[%c0_70, %c0_71], %68 {strides = array<i32>} : memref<36x512xf32, #tpu.memory_space<vmem>>, vector<32x512xf32>,
    %cst_72 = arith.constant 0.000000e+00 : f32
    %70 = vector.broadcast %cst_72 : f32 to vector<4x512xf32>
    %c32_73 = arith.constant 32 : index
    %c0_74 = arith.constant 0 : index
    %71 = vector.load %arg14[%c32_73, %c0_74] : memref<36x512xf32, #tpu.memory_space<vmem>>, vector<4x512xf32>
    tpu.vector_store %arg14[%c32_73, %c0_74], %70 {strides = array<i32>} : memref<36x512xf32, #tpu.memory_space<vmem>>, vector<4x512xf32>,
    %cst_75 = arith.constant 0.000000e+00 : f32
    %72 = vector.broadcast %cst_75 : f32 to vector<2x256xf32>
    %c0_76 = arith.constant 0 : index
    %c0_77 = arith.constant 0 : index
    %73 = vector.load %arg14[%c0_76, %c0_77] : memref<36x512xf32, #tpu.memory_space<vmem>>, vector<2x320xf32>
    %c0_78 = arith.constant 0 : index
    %c0_79 = arith.constant 0 : index
    %c0_80 = arith.constant 0 : index
    %74 = vector.load %arg7[%c0_78, %c0_79, %c0_80] : memref<10x320x256xf32, #tpu.memory_space<vmem>>, vector<1x320x256xf32>
    %75 = vector.shape_cast %74 : vector<1x320x256xf32> to vector<320x256xf32>
    %cst_81 = arith.constant dense<0.000000e+00> : vector<2x256xf32>
    %76 = tpu.matmul %73, %75, %cst_81 {dimension_numbers = #tpu.dot_dimension_numbers<[1], [0], [0], [1], [0, 0, 1, 1], [], []>} : vector<2x320xf32>, vector<320x256xf32>, vector<2x256xf32> -> vector<2x256xf32>
    %77 = arith.addf %72, %76 : vector<2x256xf32>
    %c2_82 = arith.constant 2 : index
    %c0_83 = arith.constant 0 : index
    %78 = vector.load %arg14[%c2_82, %c0_83] : memref<36x512xf32, #tpu.memory_space<vmem>>, vector<2x320xf32>
    %c1_84 = arith.constant 1 : index
    %c0_85 = arith.constant 0 : index
    %c0_86 = arith.constant 0 : index
    %79 = vector.load %arg7[%c1_84, %c0_85, %c0_86] : memref<10x320x256xf32, #tpu.memory_space<vmem>>, vector<1x320x256xf32>
    %80 = vector.shape_cast %79 : vector<1x320x256xf32> to vector<320x256xf32>
    %cst_87 = arith.constant dense<0.000000e+00> : vector<2x256xf32>
    %81 = tpu.matmul %78, %80, %cst_87 {dimension_numbers = #tpu.dot_dimension_numbers<[1], [0], [0], [1], [0, 0, 1, 1], [], []>} : vector<2x320xf32>, vector<320x256xf32>, vector<2x256xf32> -> vector<2x256xf32>
    %82 = arith.addf %77, %81 : vector<2x256xf32>
    %c4_88 = arith.constant 4 : index
    %c0_89 = arith.constant 0 : index
    %83 = vector.load %arg14[%c4_88, %c0_89] : memref<36x512xf32, #tpu.memory_space<vmem>>, vector<2x320xf32>
    %c2_90 = arith.constant 2 : index
    %c0_91 = arith.constant 0 : index
    %c0_92 = arith.constant 0 : index
    %84 = vector.load %arg7[%c2_90, %c0_91, %c0_92] : memref<10x320x256xf32, #tpu.memory_space<vmem>>, vector<1x320x256xf32>
    %85 = vector.shape_cast %84 : vector<1x320x256xf32> to vector<320x256xf32>
    %cst_93 = arith.constant dense<0.000000e+00> : vector<2x256xf32>
    %86 = tpu.matmul %83, %85, %cst_93 {dimension_numbers = #tpu.dot_dimension_numbers<[1], [0], [0], [1], [0, 0, 1, 1], [], []>} : vector<2x320xf32>, vector<320x256xf32>, vector<2x256xf32> -> vector<2x256xf32>
    %87 = arith.addf %82, %86 : vector<2x256xf32>
    %c6 = arith.constant 6 : index
    %c0_94 = arith.constant 0 : index
    %88 = vector.load %arg14[%c6, %c0_94] : memref<36x512xf32, #tpu.memory_space<vmem>>, vector<2x320xf32>
    %c3 = arith.constant 3 : index
    %c0_95 = arith.constant 0 : index
    %c0_96 = arith.constant 0 : index
    %89 = vector.load %arg7[%c3, %c0_95, %c0_96] : memref<10x320x256xf32, #tpu.memory_space<vmem>>, vector<1x320x256xf32>
    %90 = vector.shape_cast %89 : vector<1x320x256xf32> to vector<320x256xf32>
    %cst_97 = arith.constant dense<0.000000e+00> : vector<2x256xf32>
    %91 = tpu.matmul %88, %90, %cst_97 {dimension_numbers = #tpu.dot_dimension_numbers<[1], [0], [0], [1], [0, 0, 1, 1], [], []>} : vector<2x320xf32>, vector<320x256xf32>, vector<2x256xf32> -> vector<2x256xf32>
    %92 = arith.addf %87, %91 : vector<2x256xf32>
    %c8 = arith.constant 8 : index
    %c0_98 = arith.constant 0 : index
    %93 = vector.load %arg14[%c8, %c0_98] : memref<36x512xf32, #tpu.memory_space<vmem>>, vector<2x320xf32>
    %c4_99 = arith.constant 4 : index
    %c0_100 = arith.constant 0 : index
    %c0_101 = arith.constant 0 : index
    %94 = vector.load %arg7[%c4_99, %c0_100, %c0_101] : memref<10x320x256xf32, #tpu.memory_space<vmem>>, vector<1x320x256xf32>
    %95 = vector.shape_cast %94 : vector<1x320x256xf32> to vector<320x256xf32>
    %cst_102 = arith.constant dense<0.000000e+00> : vector<2x256xf32>
    %96 = tpu.matmul %93, %95, %cst_102 {dimension_numbers = #tpu.dot_dimension_numbers<[1], [0], [0], [1], [0, 0, 1, 1], [], []>} : vector<2x320xf32>, vector<320x256xf32>, vector<2x256xf32> -> vector<2x256xf32>
    %97 = arith.addf %92, %96 : vector<2x256xf32>
    %c10 = arith.constant 10 : index
    %c0_103 = arith.constant 0 : index
    %98 = vector.load %arg14[%c10, %c0_103] : memref<36x512xf32, #tpu.memory_space<vmem>>, vector<2x320xf32>
    %c5 = arith.constant 5 : index
    %c0_104 = arith.constant 0 : index
    %c0_105 = arith.constant 0 : index
    %99 = vector.load %arg7[%c5, %c0_104, %c0_105] : memref<10x320x256xf32, #tpu.memory_space<vmem>>, vector<1x320x256xf32>
    %100 = vector.shape_cast %99 : vector<1x320x256xf32> to vector<320x256xf32>
    %cst_106 = arith.constant dense<0.000000e+00> : vector<2x256xf32>
    %101 = tpu.matmul %98, %100, %cst_106 {dimension_numbers = #tpu.dot_dimension_numbers<[1], [0], [0], [1], [0, 0, 1, 1], [], []>} : vector<2x320xf32>, vector<320x256xf32>, vector<2x256xf32> -> vector<2x256xf32>
    %102 = arith.addf %97, %101 : vector<2x256xf32>
    %c12 = arith.constant 12 : index
    %c0_107 = arith.constant 0 : index
    %103 = vector.load %arg14[%c12, %c0_107] : memref<36x512xf32, #tpu.memory_space<vmem>>, vector<2x320xf32>
    %c6_108 = arith.constant 6 : index
    %c0_109 = arith.constant 0 : index
    %c0_110 = arith.constant 0 : index
    %104 = vector.load %arg7[%c6_108, %c0_109, %c0_110] : memref<10x320x256xf32, #tpu.memory_space<vmem>>, vector<1x320x256xf32>
    %105 = vector.shape_cast %104 : vector<1x320x256xf32> to vector<320x256xf32>
    %cst_111 = arith.constant dense<0.000000e+00> : vector<2x256xf32>
    %106 = tpu.matmul %103, %105, %cst_111 {dimension_numbers = #tpu.dot_dimension_numbers<[1], [0], [0], [1], [0, 0, 1, 1], [], []>} : vector<2x320xf32>, vector<320x256xf32>, vector<2x256xf32> -> vector<2x256xf32>
    %107 = arith.addf %102, %106 : vector<2x256xf32>
    %c14 = arith.constant 14 : index
    %c0_112 = arith.constant 0 : index
    %108 = vector.load %arg14[%c14, %c0_112] : memref<36x512xf32, #tpu.memory_space<vmem>>, vector<2x320xf32>
    %c7 = arith.constant 7 : index
    %c0_113 = arith.constant 0 : index
    %c0_114 = arith.constant 0 : index
    %109 = vector.load %arg7[%c7, %c0_113, %c0_114] : memref<10x320x256xf32, #tpu.memory_space<vmem>>, vector<1x320x256xf32>
    %110 = vector.shape_cast %109 : vector<1x320x256xf32> to vector<320x256xf32>
    %cst_115 = arith.constant dense<0.000000e+00> : vector<2x256xf32>
    %111 = tpu.matmul %108, %110, %cst_115 {dimension_numbers = #tpu.dot_dimension_numbers<[1], [0], [0], [1], [0, 0, 1, 1], [], []>} : vector<2x320xf32>, vector<320x256xf32>, vector<2x256xf32> -> vector<2x256xf32>
    %112 = arith.addf %107, %111 : vector<2x256xf32>
    %c16 = arith.constant 16 : index
    %c0_116 = arith.constant 0 : index
    %113 = vector.load %arg14[%c16, %c0_116] : memref<36x512xf32, #tpu.memory_space<vmem>>, vector<2x320xf32>
    %c8_117 = arith.constant 8 : index
    %c0_118 = arith.constant 0 : index
    %c0_119 = arith.constant 0 : index
    %114 = vector.load %arg7[%c8_117, %c0_118, %c0_119] : memref<10x320x256xf32, #tpu.memory_space<vmem>>, vector<1x320x256xf32>
    %115 = vector.shape_cast %114 : vector<1x320x256xf32> to vector<320x256xf32>
    %cst_120 = arith.constant dense<0.000000e+00> : vector<2x256xf32>
    %116 = tpu.matmul %113, %115, %cst_120 {dimension_numbers = #tpu.dot_dimension_numbers<[1], [0], [0], [1], [0, 0, 1, 1], [], []>} : vector<2x320xf32>, vector<320x256xf32>, vector<2x256xf32> -> vector<2x256xf32>
    %117 = arith.addf %112, %116 : vector<2x256xf32>
    %c18 = arith.constant 18 : index
    %c0_121 = arith.constant 0 : index
    %118 = vector.load %arg14[%c18, %c0_121] : memref<36x512xf32, #tpu.memory_space<vmem>>, vector<2x320xf32>
    %c9 = arith.constant 9 : index
    %c0_122 = arith.constant 0 : index
    %c0_123 = arith.constant 0 : index
    %119 = vector.load %arg7[%c9, %c0_122, %c0_123] : memref<10x320x256xf32, #tpu.memory_space<vmem>>, vector<1x320x256xf32>
    %120 = vector.shape_cast %119 : vector<1x320x256xf32> to vector<320x256xf32>
    %cst_124 = arith.constant dense<0.000000e+00> : vector<2x256xf32>
    %121 = tpu.matmul %118, %120, %cst_124 {dimension_numbers = #tpu.dot_dimension_numbers<[1], [0], [0], [1], [0, 0, 1, 1], [], []>} : vector<2x320xf32>, vector<320x256xf32>, vector<2x256xf32> -> vector<2x256xf32>
    %122 = arith.addf %117, %121 : vector<2x256xf32>
    %c0_125 = arith.constant 0 : index
    %c0_126 = arith.constant 0 : index
    %123 = vector.load %arg8[%c0_125, %c0_126] : memref<1x256xf32, #tpu.memory_space<vmem>>, vector<1x256xf32>
    %124 = vector.broadcast %123 : vector<1x256xf32> to vector<2x256xf32>
    %125 = arith.addf %122, %124 : vector<2x256xf32>
    %cst_127 = arith.constant 0.000000e+00 : f32
    %126 = vector.broadcast %cst_127 : f32 to vector<2x256xf32>
    %127 = arith.maximumf %125, %126 : vector<2x256xf32>
    %c0_128 = arith.constant 0 : index
    %c0_129 = arith.constant 0 : index
    %128 = vector.load %arg9[%c0_128, %c0_129] : memref<256x128xf32, #tpu.memory_space<vmem>>, vector<256x128xf32>
    %cst_130 = arith.constant dense<0.000000e+00> : vector<2x128xf32>
    %129 = tpu.matmul %127, %128, %cst_130 {dimension_numbers = #tpu.dot_dimension_numbers<[1], [0], [0], [1], [0, 0, 1, 1], [], []>} : vector<2x256xf32>, vector<256x128xf32>, vector<2x128xf32> -> vector<2x128xf32>
    %c0_131 = arith.constant 0 : index
    %c0_132 = arith.constant 0 : index
    %130 = vector.load %arg10[%c0_131, %c0_132] : memref<1x128xf32, #tpu.memory_space<vmem>>, vector<1x128xf32>
    %131 = vector.broadcast %130 : vector<1x128xf32> to vector<2x128xf32>
    %132 = arith.addf %129, %131 : vector<2x128xf32>
    %c0_133 = arith.constant 0 : index
    %c0_134 = arith.constant 0 : index
    %133 = vector.load %arg11[%c0_133, %c0_134] : memref<2x128xf32, #tpu.memory_space<vmem>>, vector<2x128xf32>
    tpu.vector_store %arg11[%c0_133, %c0_134], %132 {strides = array<i32>} : memref<2x128xf32, #tpu.memory_space<vmem>>, vector<2x128xf32>,
    return
  }
}

</mosaic_0001>

<llo_original>
// kernel: dqn_forward.1
$region0: #{dqn_forward.1}
  #allocation0 [shape = 'u32[]', space=smem, size = 0x4, offset = 0x4, fixed_abs, tag = 'smem constant byte address 0x4 - core index']
  #allocation1 [shape = 'u32[144,128]{1,0:T(1,128)}', space=vmem, size = 0x12000, scoped, tag = 'internal scratch']
  #allocation2 [shape = 'f32[36,96]{1,0:T(8,128)}', space=vmem, size = 0x5000, scoped, tag = 'scratch operand']
  #allocation3 [shape = 'f32[36,256]{1,0:T(8,128)}', space=vmem, size = 0xa000, scoped, tag = 'scratch operand']
  #allocation4 [shape = 'f32[36,512]{1,0:T(8,128)}', space=vmem, size = 0x14000, scoped, tag = 'scratch operand']
  %s0 = inlined_call_operand.vmem [shape: f32[36,64], index: 0, kind: input, shape index: {}]
  %s1 = inlined_call_operand.hbm [shape: f32[3,64,96], index: 1, kind: input, shape index: {}]
  %s2 = inlined_call_operand.hbm [shape: f32[1,96], index: 2, kind: input, shape index: {}]
  %s3 = inlined_call_operand.hbm [shape: f32[3,96,256], index: 3, kind: input, shape index: {}]
  %s4 = inlined_call_operand.hbm [shape: f32[1,256], index: 4, kind: input, shape index: {}]
  %s5 = inlined_call_operand.hbm [shape: f32[3,256,512], index: 5, kind: input, shape index: {}]
  %s6 = inlined_call_operand.hbm [shape: f32[1,512], index: 6, kind: input, shape index: {}]
  %s7 = inlined_call_operand.hbm [shape: f32[10,320,256], index: 7, kind: input, shape index: {}]
  %s8 = inlined_call_operand.hbm [shape: f32[1,256], index: 8, kind: input, shape index: {}]
  %s9 = inlined_call_operand.hbm [shape: f32[256,128], index: 9, kind: input, shape index: {}]
  %s10 = inlined_call_operand.hbm [shape: f32[1,128], index: 10, kind: input, shape index: {}]
  %s11 = inlined_call_operand.hbm [shape: f32[2,128], index: 11, kind: output, shape index: {}]
  %s12 = sld [smem:[#allocation0]]
  $region94: #{dqn_forward.1} parent=0
    _
  %s14 = ssub.s32 1, %s12
  %s15 = scalar_select 0, %s14, %s12
  $region1: #{dqn_forward.1} parent=0
    #allocation5 [shape = 'u8[98304]{0}', space=vmem, size = 0x18000, scoped, tag = 'input window, operand 1, single buffered']
    #allocation6 [shape = 's32[1]{0}', space=sflag, size = 0x4, scoped, tag = 'scoped memory for dqn_forward.1']
    #allocation7 [shape = 's32[1]{0}', space=sflag, size = 0x4, scoped, tag = 'scoped memory for dqn_forward.1']
    #allocation8 [shape = 'u8[512]{0}', space=vmem, size = 0x400, scoped, tag = 'input window, operand 2, single buffered']
    #allocation9 [shape = 's32[1]{0}', space=sflag, size = 0x4, scoped, tag = 'scoped memory for dqn_forward.1']
    #allocation10 [shape = 'u8[294912]{0}', space=vmem, size = 0x48000, scoped, tag = 'input window, operand 3, single buffered']
    #allocation11 [shape = 'u8[1024]{0}', space=vmem, size = 0x400, scoped, tag = 'input window, operand 4, single buffered']
    #allocation12 [shape = 's32[1]{0}', space=sflag, size = 0x4, scoped, tag = 'scoped memory for dqn_forward.1']
    #allocation13 [shape = 'u8[1572864]{0}', space=vmem, size = 0x180000, scoped, tag = 'input window, operand 5, single buffered']
    #allocation14 [shape = 'u8[2048]{0}', space=vmem, size = 0x800, scoped, tag = 'input window, operand 6, single buffered']
    #allocation15 [shape = 's32[1]{0}', space=sflag, size = 0x4, scoped, tag = 'scoped memory for dqn_forward.1']
    #allocation16 [shape = 'u8[3276800]{0}', space=vmem, size = 0x320000, scoped, tag = 'input window, operand 7, single buffered']
    #allocation17 [shape = 'u8[1024]{0}', space=vmem, size = 0x400, scoped, tag = 'input window, operand 8, single buffered']
    #allocation18 [shape = 's32[1]{0}', space=sflag, size = 0x4, scoped, tag = 'scoped memory for dqn_forward.1']
    #allocation19 [shape = 'u8[131072]{0}', space=vmem, size = 0x20000, scoped, tag = 'input window, operand 9, single buffered']
    #allocation20 [shape = 'u8[512]{0}', space=vmem, size = 0x400, scoped, tag = 'input window, operand 10, single buffered']
    #allocation21 [shape = 's32[1]{0}', space=sflag, size = 0x4, scoped, tag = 'scoped memory for dqn_forward.1']
    #allocation22 [shape = 'u8[1024]{0}', space=vmem, size = 0x400, scoped, tag = 'output window, operand 0, single buffered']
    %16 = vsyncpa [#allocation6], 0
    %17 = vsyncpa [#allocation9], 0
    %18 = vsyncpa [#allocation12], 0
    %19 = vsyncpa [#allocation15], 0
    %20 = vsyncpa [#allocation18], 0
    %21 = vsyncpa [#allocation21], 0
    %22 = vsyncpa [#allocation7], 0
    // Predicated region
    $region2: #{dqn_forward.1} parent=1 // pred_check
      _
    $region3: #{dqn_forward.1} parent=1 // pred_check_branch
      %24 = sbr.rel (0) target = $region5
    $region4: #{dqn_forward.1} parent=1 // pred_region
      _
    $region5: #{dqn_forward.1} parent=1 // pred_fallthru
      _
    // Predicated region
    $region6: #{dqn_forward.1} parent=1 // pred_check
      _
    $region7: #{dqn_forward.1} parent=1 // pred_check_branch
      %26 = sbr.rel (0) target = $region9
    $region8: #{dqn_forward.1} parent=1 // pred_region
      %s28 = ssub.s32 3072, 3072
      %29 = vsyncadd [#allocation6], %s28
      %s30 = sshll.u32 [#allocation5], 4
      %s31 = int_to_ptr.vmem [resolvable:$true] %s30
      %36 = dma.hbm_to_vmem [thread:$0]  %s1, 3072, %s31, [#allocation6], 128, 128, 8
    $region9: #{dqn_forward.1} parent=1 // pred_fallthru
      _
    // Predicated region
    $region10: #{dqn_forward.1} parent=1 // pred_check
      _
    $region11: #{dqn_forward.1} parent=1 // pred_check_branch
      %38 = sbr.rel (0) target = $region13
    $region12: #{dqn_forward.1} parent=1 // pred_region
      %s40 = ssub.s32 16, 16
      %41 = vsyncadd [#allocation9], %s40
      %s43 = sshll.u32 [#allocation8], 4
      %s44 = int_to_ptr.vmem [resolvable:$true] %s43
      %46 = dma.hbm_to_vmem [thread:$0]  %s2, 16, %s44, [#allocation9]
    $region13: #{dqn_forward.1} parent=1 // pred_fallthru
      _
    // Predicated region
    $region14: #{dqn_forward.1} parent=1 // pred_check
      _
    $region15: #{dqn_forward.1} parent=1 // pred_check_branch
      %48 = sbr.rel (0) target = $region17
    $region16: #{dqn_forward.1} parent=1 // pred_region
      %s50 = ssub.s32 9216, 9216
      %51 = vsyncadd [#allocation9], %s50
      %s52 = sshll.u32 [#allocation10], 4
      %s53 = int_to_ptr.vmem [resolvable:$true] %s52
      %58 = dma.hbm_to_vmem [thread:$0]  %s3, 9216, %s53, [#allocation9], 256, 256, 16
    $region17: #{dqn_forward.1} parent=1 // pred_fallthru
      _
    // Predicated region
    $region18: #{dqn_forward.1} parent=1 // pred_check
      _
    $region19: #{dqn_forward.1} parent=1 // pred_check_branch
      %60 = sbr.rel (0) target = $region21
    $region20: #{dqn_forward.1} parent=1 // pred_region
      %s62 = ssub.s32 32, 32
      %63 = vsyncadd [#allocation12], %s62
      %s65 = sshll.u32 [#allocation11], 4
      %s66 = int_to_ptr.vmem [resolvable:$true] %s65
      %68 = dma.hbm_to_vmem [thread:$0]  %s4, 32, %s66, [#allocation12]
    $region21: #{dqn_forward.1} parent=1 // pred_fallthru
      _
    // Predicated region
    $region22: #{dqn_forward.1} parent=1 // pred_check
      _
    $region23: #{dqn_forward.1} parent=1 // pred_check_branch
      %70 = sbr.rel (0) target = $region25
    $region24: #{dqn_forward.1} parent=1 // pred_region
      %s72 = ssub.s32 49152, 49152
      %73 = vsyncadd [#allocation12], %s72
      %s74 = sshll.u32 [#allocation13], 4
      %s75 = int_to_ptr.vmem [resolvable:$true] %s74
      %80 = dma.hbm_to_vmem [thread:$0]  %s5, 49152, %s75, [#allocation12], 512, 512, 32
    $region25: #{dqn_forward.1} parent=1 // pred_fallthru
      _
    // Predicated region
    $region26: #{dqn_forward.1} parent=1 // pred_check
      _
    $region27: #{dqn_forward.1} parent=1 // pred_check_branch
      %82 = sbr.rel (0) target = $region29
    $region28: #{dqn_forward.1} parent=1 // pred_region
      %s84 = ssub.s32 64, 64
      %85 = vsyncadd [#allocation15], %s84
      %s87 = sshll.u32 [#allocation14], 4
      %s88 = int_to_ptr.vmem [resolvable:$true] %s87
      %90 = dma.hbm_to_vmem [thread:$0]  %s6, 64, %s88, [#allocation15]
    $region29: #{dqn_forward.1} parent=1 // pred_fallthru
      _
    // Predicated region
    $region30: #{dqn_forward.1} parent=1 // pred_check
      _
    $region31: #{dqn_forward.1} parent=1 // pred_check_branch
      %92 = sbr.rel (0) target = $region33
    $region32: #{dqn_forward.1} parent=1 // pred_region
      %s94 = ssub.s32 102400, 102400
      %95 = vsyncadd [#allocation15], %s94
      %s96 = sshll.u32 [#allocation16], 4
      %s97 = int_to_ptr.vmem [resolvable:$true] %s96
      %102 = dma.hbm_to_vmem [thread:$0]  %s7, 102400, %s97, [#allocation15], 256, 256, 16
    $region33: #{dqn_forward.1} parent=1 // pred_fallthru
      _
    // Predicated region
    $region34: #{dqn_forward.1} parent=1 // pred_check
      _
    $region35: #{dqn_forward.1} parent=1 // pred_check_branch
      %104 = sbr.rel (0) target = $region37
    $region36: #{dqn_forward.1} parent=1 // pred_region
      %s106 = ssub.s32 32, 32
      %107 = vsyncadd [#allocation18], %s106
      %s109 = sshll.u32 [#allocation17], 4
      %s110 = int_to_ptr.vmem [resolvable:$true] %s109
      %112 = dma.hbm_to_vmem [thread:$0]  %s8, 32, %s110, [#allocation18]
    $region37: #{dqn_forward.1} parent=1 // pred_fallthru
      _
    // Predicated region
    $region38: #{dqn_forward.1} parent=1 // pred_check
      _
    $region39: #{dqn_forward.1} parent=1 // pred_check_branch
      %114 = sbr.rel (0) target = $region41
    $region40: #{dqn_forward.1} parent=1 // pred_region
      %s116 = ssub.s32 4096, 4096
      %117 = vsyncadd [#allocation18], %s116
      %s118 = sshll.u32 [#allocation19], 4
      %s119 = int_to_ptr.vmem [resolvable:$true] %s118
      %124 = dma.hbm_to_vmem [thread:$0]  %s9, 4096, %s119, [#allocation18], 128, 128, 8
    $region41: #{dqn_forward.1} parent=1 // pred_fallthru
      _
    // Predicated region
    $region42: #{dqn_forward.1} parent=1 // pred_check
      _
    $region43: #{dqn_forward.1} parent=1 // pred_check_branch
      %126 = sbr.rel (0) target = $region45
    $region44: #{dqn_forward.1} parent=1 // pred_region
      %s128 = ssub.s32 16, 16
      %129 = vsyncadd [#allocation21], %s128
      %s131 = sshll.u32 [#allocation20], 4
      %s132 = int_to_ptr.vmem [resolvable:$true] %s131
      %134 = dma.hbm_to_vmem [thread:$0]  %s10, 16, %s132, [#allocation21]
    $region45: #{dqn_forward.1} parent=1 // pred_fallthru
      _
    // Predicated region
    $region46: #{dqn_forward.1} parent=1 // pred_check
      _
    $region47: #{dqn_forward.1} parent=1 // pred_check_branch
      %136 = sbr.rel (0) target = $region49
    $region48: #{dqn_forward.1} parent=1 // pred_region
      %137 = dma.done [#allocation6], 3072
    $region49: #{dqn_forward.1} parent=1 // pred_fallthru
      _
    // Predicated region
    $region50: #{dqn_forward.1} parent=1 // pred_check
      _
    $region51: #{dqn_forward.1} parent=1 // pred_check_branch
      %139 = sbr.rel (0) target = $region53
    $region52: #{dqn_forward.1} parent=1 // pred_region
      %140 = dma.done [#allocation9], 16
    $region53: #{dqn_forward.1} parent=1 // pred_fallthru
      _
    // Predicated region
    $region54: #{dqn_forward.1} parent=1 // pred_check
      _
    $region55: #{dqn_forward.1} parent=1 // pred_check_branch
      %142 = sbr.rel (0) target = $region57
    $region56: #{dqn_forward.1} parent=1 // pred_region
      %143 = dma.done [#allocation9], 9216
    $region57: #{dqn_forward.1} parent=1 // pred_fallthru
      _
    // Predicated region
    $region58: #{dqn_forward.1} parent=1 // pred_check
      _
    $region59: #{dqn_forward.1} parent=1 // pred_check_branch
      %145 = sbr.rel (0) target = $region61
    $region60: #{dqn_forward.1} parent=1 // pred_region
      %146 = dma.done [#allocation12], 32
    $region61: #{dqn_forward.1} parent=1 // pred_fallthru
      _
    // Predicated region
    $region62: #{dqn_forward.1} parent=1 // pred_check
      _
    $region63: #{dqn_forward.1} parent=1 // pred_check_branch
      %148 = sbr.rel (0) target = $region65
    $region64: #{dqn_forward.1} parent=1 // pred_region
      %149 = dma.done [#allocation12], 49152
    $region65: #{dqn_forward.1} parent=1 // pred_fallthru
      _
    // Predicated region
    $region66: #{dqn_forward.1} parent=1 // pred_check
      _
    $region67: #{dqn_forward.1} parent=1 // pred_check_branch
      %151 = sbr.rel (0) target = $region69
    $region68: #{dqn_forward.1} parent=1 // pred_region
      %152 = dma.done [#allocation15], 64
    $region69: #{dqn_forward.1} parent=1 // pred_fallthru
      _
    // Predicated region
    $region70: #{dqn_forward.1} parent=1 // pred_check
      _
    $region71: #{dqn_forward.1} parent=1 // pred_check_branch
      %154 = sbr.rel (0) target = $region73
    $region72: #{dqn_forward.1} parent=1 // pred_region
      %155 = dma.done [#allocation15], 102400
    $region73: #{dqn_forward.1} parent=1 // pred_fallthru
      _
    // Predicated region
    $region74: #{dqn_forward.1} parent=1 // pred_check
      _
    $region75: #{dqn_forward.1} parent=1 // pred_check_branch
      %157 = sbr.rel (0) target = $region77
    $region76: #{dqn_forward.1} parent=1 // pred_region
      %158 = dma.done [#allocation18], 32
    $region77: #{dqn_forward.1} parent=1 // pred_fallthru
      _
    // Predicated region
    $region78: #{dqn_forward.1} parent=1 // pred_check
      _
    $region79: #{dqn_forward.1} parent=1 // pred_check_branch
      %160 = sbr.rel (0) target = $region81
    $region80: #{dqn_forward.1} parent=1 // pred_region
      %161 = dma.done [#allocation18], 4096
    $region81: #{dqn_forward.1} parent=1 // pred_fallthru
      _
    // Predicated region
    $region82: #{dqn_forward.1} parent=1 // pred_check
      _
    $region83: #{dqn_forward.1} parent=1 // pred_check_branch
      %163 = sbr.rel (0) target = $region85
    $region84: #{dqn_forward.1} parent=1 // pred_region
      %164 = dma.done [#allocation21], 16
    $region85: #{dqn_forward.1} parent=1 // pred_fallthru
      _
    %v165 = vld [vmem:[%s0] sm:$0xff]
    %v166 = vld [vmem:[%s0 + $0x8] sm:$0xff]
    %v167 = vld [vmem:[%s0 + $0x10] sm:$0xff]
    %v168 = vld [vmem:[%s0 + $0x18] sm:$0xff]
    %v169 = vld [vmem:[#allocation5] sm:$0xff]
    %v170 = vld [vmem:[#allocation5 + $0x8] sm:$0xff]
    %v171 = vld [vmem:[#allocation5 + $0x10] sm:$0xff]
    %v172 = vld [vmem:[#allocation5 + $0x18] sm:$0xff]
    %v173 = vld [vmem:[#allocation5 + $0x20] sm:$0xff]
    %v174 = vld [vmem:[#allocation5 + $0x28] sm:$0xff]
    %v175 = vld [vmem:[#allocation5 + $0x30] sm:$0xff]
    %v176 = vld [vmem:[#allocation5 + $0x38] sm:$0xff]
    %v177 = vld [vmem:[%s0 + $0x2] sm:$0xff]
    %v178 = vld [vmem:[%s0 + $0xa] sm:$0xff]
    %v179 = vld [vmem:[%s0 + $0x12] sm:$0xff]
    %v180 = vld [vmem:[%s0 + $0x1a] sm:$0xff]
    %s181 = scalar_lea.vmem [#allocation5], 64
    %v182 = vld [vmem:[%s181] sm:$0xff]
    %v183 = vld [vmem:[%s181 + $0x8] sm:$0xff]
    %v184 = vld [vmem:[%s181 + $0x10] sm:$0xff]
    %v185 = vld [vmem:[%s181 + $0x18] sm:$0xff]
    %v186 = vld [vmem:[%s181 + $0x20] sm:$0xff]
    %v187 = vld [vmem:[%s181 + $0x28] sm:$0xff]
    %v188 = vld [vmem:[%s181 + $0x30] sm:$0xff]
    %v189 = vld [vmem:[%s181 + $0x38] sm:$0xff]
    %vm190 = vcmask 523264
    %v192 = vsel %vm190, %v177, 0
    %v195 = vsel %vm190, %v178, 0
    %v198 = vsel %vm190, %v179, 0
    %v201 = vsel %vm190, %v180, 0
    %203 = vmatprep.subr.mxu0 0.0
    %204 = vmatpush1.msra.mxu0 %v182
    %205 = vmatprep.subr.mxu0 0.0
    %206 = vmatpush1.msra.mxu0 %v183
    %207 = vmatprep.subr.mxu0 0.0
    %208 = vmatpush1.msra.mxu0 %v184
    %209 = vmatprep.subr.mxu0 0.0
    %210 = vmatpush1.msra.mxu0 %v185
    %211 = vmatprep.subr.mxu0 0.0
    %212 = vmatpush1.msra.mxu0 %v186
    %213 = vmatprep.subr.mxu0 0.0
    %214 = vmatpush1.msra.mxu0 %v187
    %215 = vmatprep.subr.mxu0 0.0
    %216 = vmatpush1.msra.mxu0 %v188
    %217 = vmatprep.subr.mxu0 0.0
    %218 = vmatpush1.msra.mxu0 %v189
    %219 = vmatprep.subr.mxu0 0.0
    %220 = vmatpush1.msra.mxu0 0.0
    %221 = vmatprep.subr.mxu0 0.0
    %222 = vmatpush1.msra.mxu0 0.0
    %223 = vmatprep.subr.mxu0 0.0
    %224 = vmatpush1.msra.mxu0 0.0
    %225 = vmatprep.subr.mxu0 0.0
    %226 = vmatpush1.msra.mxu0 0.0
    %227 = vmatprep.subr.mxu0 0.0
    %228 = vmatpush1.msra.mxu0 0.0
    %229 = vmatprep.subr.mxu0 0.0
    %230 = vmatpush1.msra.mxu0 0.0
    %231 = vmatprep.subr.mxu0 0.0
    %232 = vmatpush1.msra.mxu0 0.0
    %233 = vmatprep.subr.mxu0 0.0
    %234 = vmatpush1.msra.mxu0 0.0
    %235 = vmatprep.subr.mxu0 0.0
    %236 = vmatpush1.msra.mxu0 0.0
    %237 = vmatprep.subr.mxu0 0.0
    %238 = vmatpush1.msra.mxu0 0.0
    %239 = vmatprep.subr.mxu0 0.0
    %240 = vmatpush1.msra.mxu0 0.0
    %241 = vmatprep.subr.mxu0 0.0
    %242 = vmatpush1.msra.mxu0 0.0
    %243 = vmatprep.subr.mxu0 0.0
    %244 = vmatpush1.msra.mxu0 0.0
    %245 = vmatprep.subr.mxu0 0.0
    %246 = vmatpush1.msra.mxu0 0.0
    %247 = vmatprep.subr.mxu0 0.0
    %248 = vmatpush1.msra.mxu0 0.0
    %249 = vmatprep.subr.mxu0 0.0
    %250 = vmatpush1.msra.mxu0 0.0
    %251 = vmatprep.subr.mxu0 0.0
    %252 = vmatpush1.msra.mxu0 0.0
    %253 = vmatprep.subr.mxu0 0.0
    %254 = vmatpush1.msra.mxu0 0.0
    %255 = vmatprep.subr.mxu0 0.0
    %256 = vmatpush1.msra.mxu0 0.0
    %257 = vmatprep.subr.mxu0 0.0
    %258 = vmatpush1.msra.mxu0 0.0
    %259 = vmatprep.subr.mxu0 0.0
    %260 = vmatpush1.msra.mxu0 0.0
    %261 = vmatprep.subr.mxu0 0.0
    %262 = vmatpush1.msra.mxu0 0.0
    %263 = vmatprep.subr.mxu0 0.0
    %264 = vmatpush1.msra.mxu0 0.0
    %265 = vmatprep.subr.mxu0 0.0
    %266 = vmatpush1.msra.mxu0 0.0
    %267 = vmatprep.mubr.f32.mxu0 0.0
    %268 = vmatmul.mubr.f32.gmra.mrb[0].mxu0 %v192
    %v269 = vpop.f32.mrb[0].mxu0
    %v270 = vadd.f32 0.0, %v269
    %v271 = vpop.f32.mrb[0].mxu0
    %272 = vmatprep.mubr.f32.mxu0 0.0
    %273 = vmatmul.mubr.f32.gmra.mrb[0].mxu0 %v195
    %v274 = vpop.f32.mrb[0].mxu0
    %v275 = vadd.f32 0.0, %v274
    %v276 = vpop.f32.mrb[0].mxu0
    %277 = vmatprep.mubr.f32.mxu0 0.0
    %278 = vmatmul.mubr.f32.gmra.mrb[0].mxu0 %v198
    %v279 = vpop.f32.mrb[0].mxu0
    %v280 = vadd.f32 0.0, %v279
    %v281 = vpop.f32.mrb[0].mxu0
    %282 = vmatprep.mubr.f32.mxu0 0.0
    %283 = vmatmul.mubr.f32.gmra.mrb[0].mxu0 %v201
    %v284 = vpop.f32.mrb[0].mxu0
    %v285 = vadd.f32 0.0, %v284
    %v286 = vpop.f32.mrb[0].mxu0
    %287 = vdwg.mxu0
    %v289 = vsel %vm190, %v165, 0
    %v292 = vsel %vm190, %v166, 0
    %v295 = vsel %vm190, %v167, 0
    %v298 = vsel %vm190, %v168, 0
    %300 = vmatprep.subr.mxu0 0.0
    %301 = vmatpush1.msra.mxu0 %v169
    %302 = vmatprep.subr.mxu0 0.0
    %303 = vmatpush1.msra.mxu0 %v170
    %304 = vmatprep.subr.mxu0 0.0
    %305 = vmatpush1.msra.mxu0 %v171
    %306 = vmatprep.subr.mxu0 0.0
    %307 = vmatpush1.msra.mxu0 %v172
    %308 = vmatprep.subr.mxu0 0.0
    %309 = vmatpush1.msra.mxu0 %v173
    %310 = vmatprep.subr.mxu0 0.0
    %311 = vmatpush1.msra.mxu0 %v174
    %312 = vmatprep.subr.mxu0 0.0
    %313 = vmatpush1.msra.mxu0 %v175
    %314 = vmatprep.subr.mxu0 0.0
    %315 = vmatpush1.msra.mxu0 %v176
    %316 = vmatprep.subr.mxu0 0.0
    %317 = vmatpush1.msra.mxu0 0.0
    %318 = vmatprep.subr.mxu0 0.0
    %319 = vmatpush1.msra.mxu0 0.0
    %320 = vmatprep.subr.mxu0 0.0
    %321 = vmatpush1.msra.mxu0 0.0
    %322 = vmatprep.subr.mxu0 0.0
    %323 = vmatpush1.msra.mxu0 0.0
    %324 = vmatprep.subr.mxu0 0.0
    %325 = vmatpush1.msra.mxu0 0.0
    %326 = vmatprep.subr.mxu0 0.0
    %327 = vmatpush1.msra.mxu0 0.0
    %328 = vmatprep.subr.mxu0 0.0
    %329 = vmatpush1.msra.mxu0 0.0
    %330 = vmatprep.subr.mxu0 0.0
    %331 = vmatpush1.msra.mxu0 0.0
    %332 = vmatprep.subr.mxu0 0.0
    %333 = vmatpush1.msra.mxu0 0.0
    %334 = vmatprep.subr.mxu0 0.0
    %335 = vmatpush1.msra.mxu0 0.0
    %336 = vmatprep.subr.mxu0 0.0
    %337 = vmatpush1.msra.mxu0 0.0
    %338 = vmatprep.subr.mxu0 0.0
    %339 = vmatpush1.msra.mxu0 0.0
    %340 = vmatprep.subr.mxu0 0.0
    %341 = vmatpush1.msra.mxu0 0.0
    %342 = vmatprep.subr.mxu0 0.0
    %343 = vmatpush1.msra.mxu0 0.0
    %344 = vmatprep.subr.mxu0 0.0
    %345 = vmatpush1.msra.mxu0 0.0
    %346 = vmatprep.subr.mxu0 0.0
    %347 = vmatpush1.msra.mxu0 0.0
    %348 = vmatprep.subr.mxu0 0.0
    %349 = vmatpush1.msra.mxu0 0.0
    %350 = vmatprep.subr.mxu0 0.0
    %351 = vmatpush1.msra.mxu0 0.0
    %352 = vmatprep.subr.mxu0 0.0
    %353 = vmatpush1.msra.mxu0 0.0
    %354 = vmatprep.subr.mxu0 0.0
    %355 = vmatpush1.msra.mxu0 0.0
    %356 = vmatprep.subr.mxu0 0.0
    %357 = vmatpush1.msra.mxu0 0.0
    %358 = vmatprep.subr.mxu0 0.0
    %359 = vmatpush1.msra.mxu0 0.0
    %360 = vmatprep.subr.mxu0 0.0
    %361 = vmatpush1.msra.mxu0 0.0
    %362 = vmatprep.subr.mxu0 0.0
    %363 = vmatpush1.msra.mxu0 0.0
    %364 = vmatprep.mubr.f32.mxu0 0.0
    %365 = vmatmul.mubr.f32.gmra.mrb[0].mxu0 %v289
    %v366 = vpop.f32.mrb[0].mxu0
    %v367 = vadd.f32 %v270, %v366
    %v368 = vpop.f32.mrb[0].mxu0
    %369 = vmatprep.mubr.f32.mxu0 0.0
    %370 = vmatmul.mubr.f32.gmra.mrb[0].mxu0 %v292
    %v371 = vpop.f32.mrb[0].mxu0
    %v372 = vadd.f32 %v275, %v371
    %v373 = vpop.f32.mrb[0].mxu0
    %374 = vmatprep.mubr.f32.mxu0 0.0
    %375 = vmatmul.mubr.f32.gmra.mrb[0].mxu0 %v295
    %v376 = vpop.f32.mrb[0].mxu0
    %v377 = vadd.f32 %v280, %v376
    %v378 = vpop.f32.mrb[0].mxu0
    %379 = vmatprep.mubr.f32.mxu0 0.0
    %380 = vmatmul.mubr.f32.gmra.mrb[0].mxu0 %v298
    %v381 = vpop.f32.mrb[0].mxu0
    %v382 = vadd.f32 %v285, %v381
    %v383 = vpop.f32.mrb[0].mxu0
    %384 = vdwg.mxu0
    %v385 = vld [vmem:[%s0 + $0x4] sm:$0xff]
    %v386 = vld [vmem:[%s0 + $0xc] sm:$0xff]
    %v387 = vld [vmem:[%s0 + $0x14] sm:$0xff]
    %v388 = vld [vmem:[%s0 + $0x1c] sm:$0xff]
    %s389 = scalar_lea.vmem [#allocation5], 128
    %v390 = vld [vmem:[%s389] sm:$0xff]
    %v391 = vld [vmem:[%s389 + $0x8] sm:$0xff]
    %v392 = vld [vmem:[%s389 + $0x10] sm:$0xff]
    %v393 = vld [vmem:[%s389 + $0x18] sm:$0xff]
    %v394 = vld [vmem:[%s389 + $0x20] sm:$0xff]
    %v395 = vld [vmem:[%s389 + $0x28] sm:$0xff]
    %v396 = vld [vmem:[%s389 + $0x30] sm:$0xff]
    %v397 = vld [vmem:[%s389 + $0x38] sm:$0xff]
    %v399 = vsel %vm190, %v385, 0
    %v402 = vsel %vm190, %v386, 0
    %v405 = vsel %vm190, %v387, 0
    %v408 = vsel %vm190, %v388, 0
    %410 = vmatprep.subr.mxu0 0.0
    %411 = vmatpush1.msra.mxu0 %v390
    %412 = vmatprep.subr.mxu0 0.0
    %413 = vmatpush1.msra.mxu0 %v391
    %414 = vmatprep.subr.mxu0 0.0
    %415 = vmatpush1.msra.mxu0 %v392
    %416 = vmatprep.subr.mxu0 0.0
    %417 = vmatpush1.msra.mxu0 %v393
    %418 = vmatprep.subr.mxu0 0.0
    %419 = vmatpush1.msra.mxu0 %v394
    %420 = vmatprep.subr.mxu0 0.0
    %421 = vmatpush1.msra.mxu0 %v395
    %422 = vmatprep.subr.mxu0 0.0
    %423 = vmatpush1.msra.mxu0 %v396
    %424 = vmatprep.subr.mxu0 0.0
    %425 = vmatpush1.msra.mxu0 %v397
    %426 = vmatprep.subr.mxu0 0.0
    %427 = vmatpush1.msra.mxu0 0.0
    %428 = vmatprep.subr.mxu0 0.0
    %429 = vmatpush1.msra.mxu0 0.0
    %430 = vmatprep.subr.mxu0 0.0
    %431 = vmatpush1.msra.mxu0 0.0
    %432 = vmatprep.subr.mxu0 0.0
    %433 = vmatpush1.msra.mxu0 0.0
    %434 = vmatprep.subr.mxu0 0.0
    %435 = vmatpush1.msra.mxu0 0.0
    %436 = vmatprep.subr.mxu0 0.0
    %437 = vmatpush1.msra.mxu0 0.0
    %438 = vmatprep.subr.mxu0 0.0
    %439 = vmatpush1.msra.mxu0 0.0
    %440 = vmatprep.subr.mxu0 0.0
    %441 = vmatpush1.msra.mxu0 0.0
    %442 = vmatprep.subr.mxu0 0.0
    %443 = vmatpush1.msra.mxu0 0.0
    %444 = vmatprep.subr.mxu0 0.0
    %445 = vmatpush1.msra.mxu0 0.0
    %446 = vmatprep.subr.mxu0 0.0
    %447 = vmatpush1.msra.mxu0 0.0
    %448 = vmatprep.subr.mxu0 0.0
    %449 = vmatpush1.msra.mxu0 0.0
    %450 = vmatprep.subr.mxu0 0.0
    %451 = vmatpush1.msra.mxu0 0.0
    %452 = vmatprep.subr.mxu0 0.0
    %453 = vmatpush1.msra.mxu0 0.0
    %454 = vmatprep.subr.mxu0 0.0
    %455 = vmatpush1.msra.mxu0 0.0
    %456 = vmatprep.subr.mxu0 0.0
    %457 = vmatpush1.msra.mxu0 0.0
    %458 = vmatprep.subr.mxu0 0.0
    %459 = vmatpush1.msra.mxu0 0.0
    %460 = vmatprep.subr.mxu0 0.0
    %461 = vmatpush1.msra.mxu0 0.0
    %462 = vmatprep.subr.mxu0 0.0
    %463 = vmatpush1.msra.mxu0 0.0
    %464 = vmatprep.subr.mxu0 0.0
    %465 = vmatpush1.msra.mxu0 0.0
    %466 = vmatprep.subr.mxu0 0.0
    %467 = vmatpush1.msra.mxu0 0.0
    %468 = vmatprep.subr.mxu0 0.0
    %469 = vmatpush1.msra.mxu0 0.0
    %470 = vmatprep.subr.mxu0 0.0
    %471 = vmatpush1.msra.mxu0 0.0
    %472 = vmatprep.subr.mxu0 0.0
    %473 = vmatpush1.msra.mxu0 0.0
    %474 = vmatprep.mubr.f32.mxu0 0.0
    %475 = vmatmul.mubr.f32.gmra.mrb[0].mxu0 %v399
    %v476 = vpop.f32.mrb[0].mxu0
    %v477 = vadd.f32 0.0, %v476
    %v478 = vpop.f32.mrb[0].mxu0
    %479 = vmatprep.mubr.f32.mxu0 0.0
    %480 = vmatmul.mubr.f32.gmra.mrb[0].mxu0 %v402
    %v481 = vpop.f32.mrb[0].mxu0
    %v482 = vadd.f32 0.0, %v481
    %v483 = vpop.f32.mrb[0].mxu0
    %484 = vmatprep.mubr.f32.mxu0 0.0
    %485 = vmatmul.mubr.f32.gmra.mrb[0].mxu0 %v405
    %v486 = vpop.f32.mrb[0].mxu0
    %v487 = vadd.f32 0.0, %v486
    %v488 = vpop.f32.mrb[0].mxu0
    %489 = vmatprep.mubr.f32.mxu0 0.0
    %490 = vmatmul.mubr.f32.gmra.mrb[0].mxu0 %v408
    %v491 = vpop.f32.mrb[0].mxu0
    %v492 = vadd.f32 0.0, %v491
    %v493 = vpop.f32.mrb[0].mxu0
    %494 = vdwg.mxu0
    %v495 = vadd.f32 %v367, %v477
    %v496 = vadd.f32 %v372, %v482
    %v497 = vadd.f32 %v377, %v487
    %v498 = vadd.f32 %v382, %v492
    %v499 = vld [vmem:[#allocation8] sm:$0x1]
    %v501 = vlaneseq
    %v502 = vshrl.u32 %v501, 7
    %v503 = vsub.s32 0, %v502
    %v504 = vrot.slane %v499, %v503
    %v506 = vadd.f32 %v495, %v504
    %v507 = vadd.f32 %v496, %v504
    %v508 = vadd.f32 %v497, %v504
    %v509 = vadd.f32 %v498, %v504
    %v510 = vmax.f32 %v506, 0.0
    %v511 = vmax.f32 %v507, 0.0
    %v512 = vmax.f32 %v508, 0.0
    %v513 = vmax.f32 %v509, 0.0
    %vm514 = vcmask 785408
    %515 = vst.msk [vmem:[#allocation2] sm:$0xff] %vm514, %v510
    %516 = vst.msk [vmem:[#allocation2 + $0x8] sm:$0xff] %vm514, %v511
    %517 = vst.msk [vmem:[#allocation2 + $0x10] sm:$0xff] %vm514, %v512
    %518 = vst.msk [vmem:[#allocation2 + $0x18] sm:$0xff] %vm514, %v513
    %vm519 = vcmask 781312
    %520 = vst.msk [vmem:[#allocation2 + $0x20] sm:$0xf] %vm519, 0.0
    %v521 = vld [vmem:[#allocation2] sm:$0xff]
    %v522 = vld [vmem:[#allocation2 + $0x8] sm:$0xff]
    %v523 = vld [vmem:[#allocation2 + $0x10] sm:$0xff]
    %v524 = vld [vmem:[#allocation2 + $0x18] sm:$0xff]
    %v525 = vld [vmem:[#allocation10] sm:$0xff]
    %v526 = vld [vmem:[#allocation10 + $0x8] sm:$0xff]
    %v527 = vld [vmem:[#allocation10 + $0x10] sm:$0xff]
    %v528 = vld [vmem:[#allocation10 + $0x18] sm:$0xff]
    %v529 = vld [vmem:[#allocation10 + $0x20] sm:$0xff]
    %v530 = vld [vmem:[#allocation10 + $0x28] sm:$0xff]
    %v531 = vld [vmem:[#allocation10 + $0x30] sm:$0xff]
    %v532 = vld [vmem:[#allocation10 + $0x38] sm:$0xff]
    %v533 = vld [vmem:[#allocation10 + $0x40] sm:$0xff]
    %v534 = vld [vmem:[#allocation10 + $0x48] sm:$0xff]
    %v535 = vld [vmem:[#allocation10 + $0x50] sm:$0xff]
    %v536 = vld [vmem:[#allocation10 + $0x58] sm:$0xff]
    %v537 = vld [vmem:[#allocation10 + $0x60] sm:$0xff]
    %v538 = vld [vmem:[#allocation10 + $0x68] sm:$0xff]
    %v539 = vld [vmem:[#allocation10 + $0x70] sm:$0xff]
    %v540 = vld [vmem:[#allocation10 + $0x78] sm:$0xff]
    %v541 = vld [vmem:[#allocation10 + $0x80] sm:$0xff]
    %v542 = vld [vmem:[#allocation10 + $0x88] sm:$0xff]
    %v543 = vld [vmem:[#allocation10 + $0x90] sm:$0xff]
    %v544 = vld [vmem:[#allocation10 + $0x98] sm:$0xff]
    %v545 = vld [vmem:[#allocation10 + $0xa0] sm:$0xff]
    %v546 = vld [vmem:[#allocation10 + $0xa8] sm:$0xff]
    %v547 = vld [vmem:[#allocation10 + $0xb0] sm:$0xff]
    %v548 = vld [vmem:[#allocation10 + $0xb8] sm:$0xff]
    %v549 = vld [vmem:[#allocation2 + $0x2] sm:$0xff]
    %v550 = vld [vmem:[#allocation2 + $0xa] sm:$0xff]
    %v551 = vld [vmem:[#allocation2 + $0x12] sm:$0xff]
    %v552 = vld [vmem:[#allocation2 + $0x1a] sm:$0xff]
    %s553 = scalar_lea.vmem [#allocation10], 192
    %v554 = vld [vmem:[%s553] sm:$0xff]
    %v555 = vld [vmem:[%s553 + $0x8] sm:$0xff]
    %v556 = vld [vmem:[%s553 + $0x10] sm:$0xff]
    %v557 = vld [vmem:[%s553 + $0x18] sm:$0xff]
    %v558 = vld [vmem:[%s553 + $0x20] sm:$0xff]
    %v559 = vld [vmem:[%s553 + $0x28] sm:$0xff]
    %v560 = vld [vmem:[%s553 + $0x30] sm:$0xff]
    %v561 = vld [vmem:[%s553 + $0x38] sm:$0xff]
    %v562 = vld [vmem:[%s553 + $0x40] sm:$0xff]
    %v563 = vld [vmem:[%s553 + $0x48] sm:$0xff]
    %v564 = vld [vmem:[%s553 + $0x50] sm:$0xff]
    %v565 = vld [vmem:[%s553 + $0x58] sm:$0xff]
    %v566 = vld [vmem:[%s553 + $0x60] sm:$0xff]
    %v567 = vld [vmem:[%s553 + $0x68] sm:$0xff]
    %v568 = vld [vmem:[%s553 + $0x70] sm:$0xff]
    %v569 = vld [vmem:[%s553 + $0x78] sm:$0xff]
    %v570 = vld [vmem:[%s553 + $0x80] sm:$0xff]
    %v571 = vld [vmem:[%s553 + $0x88] sm:$0xff]
    %v572 = vld [vmem:[%s553 + $0x90] sm:$0xff]
    %v573 = vld [vmem:[%s553 + $0x98] sm:$0xff]
    %v574 = vld [vmem:[%s553 + $0xa0] sm:$0xff]
    %v575 = vld [vmem:[%s553 + $0xa8] sm:$0xff]
    %v576 = vld [vmem:[%s553 + $0xb0] sm:$0xff]
    %v577 = vld [vmem:[%s553 + $0xb8] sm:$0xff]
    %v579 = vsel %vm514, %v549, 0
    %v582 = vsel %vm514, %v550, 0
    %v585 = vsel %vm514, %v551, 0
    %v588 = vsel %vm514, %v552, 0
    %590 = vmatprep.subr.mxu0 %v555
    %591 = vmatpush1.msra.mxu0 %v554
    %592 = vmatprep.subr.mxu0 %v557
    %593 = vmatpush1.msra.mxu0 %v556
    %594 = vmatprep.subr.mxu0 %v559
    %595 = vmatpush1.msra.mxu0 %v558
    %596 = vmatprep.subr.mxu0 %v561
    %597 = vmatpush1.msra.mxu0 %v560
    %598 = vmatprep.subr.mxu0 %v563
    %599 = vmatpush1.msra.mxu0 %v562
    %600 = vmatprep.subr.mxu0 %v565
    %601 = vmatpush1.msra.mxu0 %v564
    %602 = vmatprep.subr.mxu0 %v567
    %603 = vmatpush1.msra.mxu0 %v566
    %604 = vmatprep.subr.mxu0 %v569
    %605 = vmatpush1.msra.mxu0 %v568
    %606 = vmatprep.subr.mxu0 %v571
    %607 = vmatpush1.msra.mxu0 %v570
    %608 = vmatprep.subr.mxu0 %v573
    %609 = vmatpush1.msra.mxu0 %v572
    %610 = vmatprep.subr.mxu0 %v575
    %611 = vmatpush1.msra.mxu0 %v574
    %612 = vmatprep.subr.mxu0 %v577
    %613 = vmatpush1.msra.mxu0 %v576
    %614 = vmatprep.subr.mxu0 0.0
    %615 = vmatpush1.msra.mxu0 0.0
    %616 = vmatprep.subr.mxu0 0.0
    %617 = vmatpush1.msra.mxu0 0.0
    %618 = vmatprep.subr.mxu0 0.0
    %619 = vmatpush1.msra.mxu0 0.0
    %620 = vmatprep.subr.mxu0 0.0
    %621 = vmatpush1.msra.mxu0 0.0
    %622 = vmatprep.subr.mxu0 0.0
    %623 = vmatpush1.msra.mxu0 0.0
    %624 = vmatprep.subr.mxu0 0.0
    %625 = vmatpush1.msra.mxu0 0.0
    %626 = vmatprep.subr.mxu0 0.0
    %627 = vmatpush1.msra.mxu0 0.0
    %628 = vmatprep.subr.mxu0 0.0
    %629 = vmatpush1.msra.mxu0 0.0
    %630 = vmatprep.subr.mxu0 0.0
    %631 = vmatpush1.msra.mxu0 0.0
    %632 = vmatprep.subr.mxu0 0.0
    %633 = vmatpush1.msra.mxu0 0.0
    %634 = vmatprep.subr.mxu0 0.0
    %635 = vmatpush1.msra.mxu0 0.0
    %636 = vmatprep.subr.mxu0 0.0
    %637 = vmatpush1.msra.mxu0 0.0
    %638 = vmatprep.subr.mxu0 0.0
    %639 = vmatpush1.msra.mxu0 0.0
    %640 = vmatprep.subr.mxu0 0.0
    %641 = vmatpush1.msra.mxu0 0.0
    %642 = vmatprep.subr.mxu0 0.0
    %643 = vmatpush1.msra.mxu0 0.0
    %644 = vmatprep.subr.mxu0 0.0
    %645 = vmatpush1.msra.mxu0 0.0
    %646 = vmatprep.subr.mxu0 0.0
    %647 = vmatpush1.msra.mxu0 0.0
    %648 = vmatprep.subr.mxu0 0.0
    %649 = vmatpush1.msra.mxu0 0.0
    %650 = vmatprep.subr.mxu0 0.0
    %651 = vmatpush1.msra.mxu0 0.0
    %652 = vmatprep.subr.mxu0 0.0
    %653 = vmatpush1.msra.mxu0 0.0
    %654 = vmatprep.mubr.f32.mxu0 0.0
    %655 = vmatmul.mubr.f32.gmra.mrb[0].mxu0 %v579
    %v656 = vpop.f32.mrb[0].mxu0
    %v657 = vadd.f32 0.0, %v656
    %v658 = vpop.f32.mrb[0].mxu0
    %v659 = vadd.f32 0.0, %v658
    %660 = vmatprep.mubr.f32.mxu0 0.0
    %661 = vmatmul.mubr.f32.gmra.mrb[0].mxu0 %v582
    %v662 = vpop.f32.mrb[0].mxu0
    %v663 = vadd.f32 0.0, %v662
    %v664 = vpop.f32.mrb[0].mxu0
    %v665 = vadd.f32 0.0, %v664
    %666 = vmatprep.mubr.f32.mxu0 0.0
    %667 = vmatmul.mubr.f32.gmra.mrb[0].mxu0 %v585
    %v668 = vpop.f32.mrb[0].mxu0
    %v669 = vadd.f32 0.0, %v668
    %v670 = vpop.f32.mrb[0].mxu0
    %v671 = vadd.f32 0.0, %v670
    %672 = vmatprep.mubr.f32.mxu0 0.0
    %673 = vmatmul.mubr.f32.gmra.mrb[0].mxu0 %v588
    %v674 = vpop.f32.mrb[0].mxu0
    %v675 = vadd.f32 0.0, %v674
    %v676 = vpop.f32.mrb[0].mxu0
    %v677 = vadd.f32 0.0, %v676
    %678 = vdwg.mxu0
    %v680 = vsel %vm514, %v521, 0
    %v683 = vsel %vm514, %v522, 0
    %v686 = vsel %vm514, %v523, 0
    %v689 = vsel %vm514, %v524, 0
    %691 = vmatprep.subr.mxu0 %v526
    %692 = vmatpush1.msra.mxu0 %v525
    %693 = vmatprep.subr.mxu0 %v528
    %694 = vmatpush1.msra.mxu0 %v527
    %695 = vmatprep.subr.mxu0 %v530
    %696 = vmatpush1.msra.mxu0 %v529
    %697 = vmatprep.subr.mxu0 %v532
    %698 = vmatpush1.msra.mxu0 %v531
    %699 = vmatprep.subr.mxu0 %v534
    %700 = vmatpush1.msra.mxu0 %v533
    %701 = vmatprep.subr.mxu0 %v536
    %702 = vmatpush1.msra.mxu0 %v535
    %703 = vmatprep.subr.mxu0 %v538
    %704 = vmatpush1.msra.mxu0 %v537
    %705 = vmatprep.subr.mxu0 %v540
    %706 = vmatpush1.msra.mxu0 %v539
    %707 = vmatprep.subr.mxu0 %v542
    %708 = vmatpush1.msra.mxu0 %v541
    %709 = vmatprep.subr.mxu0 %v544
    %710 = vmatpush1.msra.mxu0 %v543
    %711 = vmatprep.subr.mxu0 %v546
    %712 = vmatpush1.msra.mxu0 %v545
    %713 = vmatprep.subr.mxu0 %v548
    %714 = vmatpush1.msra.mxu0 %v547
    %715 = vmatprep.subr.mxu0 0.0
    %716 = vmatpush1.msra.mxu0 0.0
    %717 = vmatprep.subr.mxu0 0.0
    %718 = vmatpush1.msra.mxu0 0.0
    %719 = vmatprep.subr.mxu0 0.0
    %720 = vmatpush1.msra.mxu0 0.0
    %721 = vmatprep.subr.mxu0 0.0
    %722 = vmatpush1.msra.mxu0 0.0
    %723 = vmatprep.subr.mxu0 0.0
    %724 = vmatpush1.msra.mxu0 0.0
    %725 = vmatprep.subr.mxu0 0.0
    %726 = vmatpush1.msra.mxu0 0.0
    %727 = vmatprep.subr.mxu0 0.0
    %728 = vmatpush1.msra.mxu0 0.0
    %729 = vmatprep.subr.mxu0 0.0
    %730 = vmatpush1.msra.mxu0 0.0
    %731 = vmatprep.subr.mxu0 0.0
    %732 = vmatpush1.msra.mxu0 0.0
    %733 = vmatprep.subr.mxu0 0.0
    %734 = vmatpush1.msra.mxu0 0.0
    %735 = vmatprep.subr.mxu0 0.0
    %736 = vmatpush1.msra.mxu0 0.0
    %737 = vmatprep.subr.mxu0 0.0
    %738 = vmatpush1.msra.mxu0 0.0
    %739 = vmatprep.subr.mxu0 0.0
    %740 = vmatpush1.msra.mxu0 0.0
    %741 = vmatprep.subr.mxu0 0.0
    %742 = vmatpush1.msra.mxu0 0.0
    %743 = vmatprep.subr.mxu0 0.0
    %744 = vmatpush1.msra.mxu0 0.0
    %745 = vmatprep.subr.mxu0 0.0
    %746 = vmatpush1.msra.mxu0 0.0
    %747 = vmatprep.subr.mxu0 0.0
    %748 = vmatpush1.msra.mxu0 0.0
    %749 = vmatprep.subr.mxu0 0.0
    %750 = vmatpush1.msra.mxu0 0.0
    %751 = vmatprep.subr.mxu0 0.0
    %752 = vmatpush1.msra.mxu0 0.0
    %753 = vmatprep.subr.mxu0 0.0
    %754 = vmatpush1.msra.mxu0 0.0
    %755 = vmatprep.mubr.f32.mxu0 0.0
    %756 = vmatmul.mubr.f32.gmra.mrb[0].mxu0 %v680
    %v757 = vpop.f32.mrb[0].mxu0
    %v758 = vadd.f32 %v657, %v757
    %v759 = vpop.f32.mrb[0].mxu0
    %v760 = vadd.f32 %v659, %v759
    %761 = vmatprep.mubr.f32.mxu0 0.0
    %762 = vmatmul.mubr.f32.gmra.mrb[0].mxu0 %v683
    %v763 = vpop.f32.mrb[0].mxu0
    %v764 = vadd.f32 %v663, %v763
    %v765 = vpop.f32.mrb[0].mxu0
    %v766 = vadd.f32 %v665, %v765
    %767 = vmatprep.mubr.f32.mxu0 0.0
    %768 = vmatmul.mubr.f32.gmra.mrb[0].mxu0 %v686
    %v769 = vpop.f32.mrb[0].mxu0
    %v770 = vadd.f32 %v669, %v769
    %v771 = vpop.f32.mrb[0].mxu0
    %v772 = vadd.f32 %v671, %v771
    %773 = vmatprep.mubr.f32.mxu0 0.0
    %774 = vmatmul.mubr.f32.gmra.mrb[0].mxu0 %v689
    %v775 = vpop.f32.mrb[0].mxu0
    %v776 = vadd.f32 %v675, %v775
    %v777 = vpop.f32.mrb[0].mxu0
    %v778 = vadd.f32 %v677, %v777
    %779 = vdwg.mxu0
    %v780 = vld [vmem:[#allocation2 + $0x4] sm:$0xff]
    %v781 = vld [vmem:[#allocation2 + $0xc] sm:$0xff]
    %v782 = vld [vmem:[#allocation2 + $0x14] sm:$0xff]
    %v783 = vld [vmem:[#allocation2 + $0x1c] sm:$0xff]
    %s784 = scalar_lea.vmem [#allocation10], 384
    %v785 = vld [vmem:[%s784] sm:$0xff]
    %v786 = vld [vmem:[%s784 + $0x8] sm:$0xff]
    %v787 = vld [vmem:[%s784 + $0x10] sm:$0xff]
    %v788 = vld [vmem:[%s784 + $0x18] sm:$0xff]
    %v789 = vld [vmem:[%s784 + $0x20] sm:$0xff]
    %v790 = vld [vmem:[%s784 + $0x28] sm:$0xff]
    %v791 = vld [vmem:[%s784 + $0x30] sm:$0xff]
    %v792 = vld [vmem:[%s784 + $0x38] sm:$0xff]
    %v793 = vld [vmem:[%s784 + $0x40] sm:$0xff]
    %v794 = vld [vmem:[%s784 + $0x48] sm:$0xff]
    %v795 = vld [vmem:[%s784 + $0x50] sm:$0xff]
    %v796 = vld [vmem:[%s784 + $0x58] sm:$0xff]
    %v797 = vld [vmem:[%s784 + $0x60] sm:$0xff]
    %v798 = vld [vmem:[%s784 + $0x68] sm:$0xff]
    %v799 = vld [vmem:[%s784 + $0x70] sm:$0xff]
    %v800 = vld [vmem:[%s784 + $0x78] sm:$0xff]
    %v801 = vld [vmem:[%s784 + $0x80] sm:$0xff]
    %v802 = vld [vmem:[%s784 + $0x88] sm:$0xff]
    %v803 = vld [vmem:[%s784 + $0x90] sm:$0xff]
    %v804 = vld [vmem:[%s784 + $0x98] sm:$0xff]
    %v805 = vld [vmem:[%s784 + $0xa0] sm:$0xff]
    %v806 = vld [vmem:[%s784 + $0xa8] sm:$0xff]
    %v807 = vld [vmem:[%s784 + $0xb0] sm:$0xff]
    %v808 = vld [vmem:[%s784 + $0xb8] sm:$0xff]
    %v810 = vsel %vm514, %v780, 0
    %v813 = vsel %vm514, %v781, 0
    %v816 = vsel %vm514, %v782, 0
    %v819 = vsel %vm514, %v783, 0
    %821 = vmatprep.subr.mxu0 %v786
    %822 = vmatpush1.msra.mxu0 %v785
    %823 = vmatprep.subr.mxu0 %v788
    %824 = vmatpush1.msra.mxu0 %v787
    %825 = vmatprep.subr.mxu0 %v790
    %826 = vmatpush1.msra.mxu0 %v789
    %827 = vmatprep.subr.mxu0 %v792
    %828 = vmatpush1.msra.mxu0 %v791
    %829 = vmatprep.subr.mxu0 %v794
    %830 = vmatpush1.msra.mxu0 %v793
    %831 = vmatprep.subr.mxu0 %v796
    %832 = vmatpush1.msra.mxu0 %v795
    %833 = vmatprep.subr.mxu0 %v798
    %834 = vmatpush1.msra.mxu0 %v797
    %835 = vmatprep.subr.mxu0 %v800
    %836 = vmatpush1.msra.mxu0 %v799
    %837 = vmatprep.subr.mxu0 %v802
    %838 = vmatpush1.msra.mxu0 %v801
    %839 = vmatprep.subr.mxu0 %v804
    %840 = vmatpush1.msra.mxu0 %v803
    %841 = vmatprep.subr.mxu0 %v806
    %842 = vmatpush1.msra.mxu0 %v805
    %843 = vmatprep.subr.mxu0 %v808
    %844 = vmatpush1.msra.mxu0 %v807
    %845 = vmatprep.subr.mxu0 0.0
    %846 = vmatpush1.msra.mxu0 0.0
    %847 = vmatprep.subr.mxu0 0.0
    %848 = vmatpush1.msra.mxu0 0.0
    %849 = vmatprep.subr.mxu0 0.0
    %850 = vmatpush1.msra.mxu0 0.0
    %851 = vmatprep.subr.mxu0 0.0
    %852 = vmatpush1.msra.mxu0 0.0
    %853 = vmatprep.subr.mxu0 0.0
    %854 = vmatpush1.msra.mxu0 0.0
    %855 = vmatprep.subr.mxu0 0.0
    %856 = vmatpush1.msra.mxu0 0.0
    %857 = vmatprep.subr.mxu0 0.0
    %858 = vmatpush1.msra.mxu0 0.0
    %859 = vmatprep.subr.mxu0 0.0
    %860 = vmatpush1.msra.mxu0 0.0
    %861 = vmatprep.subr.mxu0 0.0
    %862 = vmatpush1.msra.mxu0 0.0
    %863 = vmatprep.subr.mxu0 0.0
    %864 = vmatpush1.msra.mxu0 0.0
    %865 = vmatprep.subr.mxu0 0.0
    %866 = vmatpush1.msra.mxu0 0.0
    %867 = vmatprep.subr.mxu0 0.0
    %868 = vmatpush1.msra.mxu0 0.0
    %869 = vmatprep.subr.mxu0 0.0
    %870 = vmatpush1.msra.mxu0 0.0
    %871 = vmatprep.subr.mxu0 0.0
    %872 = vmatpush1.msra.mxu0 0.0
    %873 = vmatprep.subr.mxu0 0.0
    %874 = vmatpush1.msra.mxu0 0.0
    %875 = vmatprep.subr.mxu0 0.0
    %876 = vmatpush1.msra.mxu0 0.0
    %877 = vmatprep.subr.mxu0 0.0
    %878 = vmatpush1.msra.mxu0 0.0
    %879 = vmatprep.subr.mxu0 0.0
    %880 = vmatpush1.msra.mxu0 0.0
    %881 = vmatprep.subr.mxu0 0.0
    %882 = vmatpush1.msra.mxu0 0.0
    %883 = vmatprep.subr.mxu0 0.0
    %884 = vmatpush1.msra.mxu0 0.0
    %885 = vmatprep.mubr.f32.mxu0 0.0
    %886 = vmatmul.mubr.f32.gmra.mrb[0].mxu0 %v810
    %v887 = vpop.f32.mrb[0].mxu0
    %v888 = vadd.f32 0.0, %v887
    %v889 = vpop.f32.mrb[0].mxu0
    %v890 = vadd.f32 0.0, %v889
    %891 = vmatprep.mubr.f32.mxu0 0.0
    %892 = vmatmul.mubr.f32.gmra.mrb[0].mxu0 %v813
    %v893 = vpop.f32.mrb[0].mxu0
    %v894 = vadd.f32 0.0, %v893
    %v895 = vpop.f32.mrb[0].mxu0
    %v896 = vadd.f32 0.0, %v895
    %897 = vmatprep.mubr.f32.mxu0 0.0
    %898 = vmatmul.mubr.f32.gmra.mrb[0].mxu0 %v816
    %v899 = vpop.f32.mrb[0].mxu0
    %v900 = vadd.f32 0.0, %v899
    %v901 = vpop.f32.mrb[0].mxu0
    %v902 = vadd.f32 0.0, %v901
    %903 = vmatprep.mubr.f32.mxu0 0.0
    %904 = vmatmul.mubr.f32.gmra.mrb[0].mxu0 %v819
    %v905 = vpop.f32.mrb[0].mxu0
    %v906 = vadd.f32 0.0, %v905
    %v907 = vpop.f32.mrb[0].mxu0
    %v908 = vadd.f32 0.0, %v907
    %909 = vdwg.mxu0
    %v910 = vadd.f32 %v758, %v888
    %v911 = vadd.f32 %v760, %v890
    %v912 = vadd.f32 %v764, %v894
    %v913 = vadd.f32 %v766, %v896
    %v914 = vadd.f32 %v770, %v900
    %v915 = vadd.f32 %v772, %v902
    %v916 = vadd.f32 %v776, %v906
    %v917 = vadd.f32 %v778, %v908
    %v918 = vld [vmem:[#allocation11] sm:$0x3]
    %v920 = vlaneseq
    %v921 = vshrl.u32 %v920, 7
    %v922 = vsub.s32 0, %v921
    %v923 = vrot.slane %v918, %v922
    %v924 = vlaneseq
    %v925 = vshrl.u32 %v924, 7
    %v926 = vsub.s32 1, %v925
    %v927 = vrot.slane %v918, %v926
    %v930 = vadd.f32 %v910, %v923
    %v931 = vadd.f32 %v911, %v927
    %v932 = vadd.f32 %v912, %v923
    %v933 = vadd.f32 %v913, %v927
    %v934 = vadd.f32 %v914, %v923
    %v935 = vadd.f32 %v915, %v927
    %v936 = vadd.f32 %v916, %v923
    %v937 = vadd.f32 %v917, %v927
    %v938 = vmax.f32 %v930, 0.0
    %v939 = vmax.f32 %v931, 0.0
    %v940 = vmax.f32 %v932, 0.0
    %v941 = vmax.f32 %v933, 0.0
    %v942 = vmax.f32 %v934, 0.0
    %v943 = vmax.f32 %v935, 0.0
    %v944 = vmax.f32 %v936, 0.0
    %v945 = vmax.f32 %v937, 0.0
    %946 = vst [vmem:[#allocation3] sm:$0xff] %v938
    %947 = vst [vmem:[#allocation3 + $0x8] sm:$0xff] %v939
    %948 = vst [vmem:[#allocation3 + $0x10] sm:$0xff] %v940
    %949 = vst [vmem:[#allocation3 + $0x18] sm:$0xff] %v941
    %950 = vst [vmem:[#allocation3 + $0x20] sm:$0xff] %v942
    %951 = vst [vmem:[#allocation3 + $0x28] sm:$0xff] %v943
    %952 = vst [vmem:[#allocation3 + $0x30] sm:$0xff] %v944
    %953 = vst [vmem:[#allocation3 + $0x38] sm:$0xff] %v945
    %954 = vst [vmem:[#allocation3 + $0x40] sm:$0xf] 0.0
    %955 = vst [vmem:[#allocation3 + $0x48] sm:$0xf] 0.0
    %v956 = vld [vmem:[#allocation3] sm:$0xff]
    %v957 = vld [vmem:[#allocation3 + $0x8] sm:$0xff]
    %v958 = vld [vmem:[#allocation3 + $0x10] sm:$0xff]
    %v959 = vld [vmem:[#allocation3 + $0x18] sm:$0xff]
    %v960 = vld [vmem:[#allocation3 + $0x20] sm:$0xff]
    %v961 = vld [vmem:[#allocation3 + $0x28] sm:$0xff]
    %v962 = vld [vmem:[#allocation3 + $0x30] sm:$0xff]
    %v963 = vld [vmem:[#allocation3 + $0x38] sm:$0xff]
    %v964 = vld [vmem:[#allocation13] sm:$0xff]
    %v965 = vld [vmem:[#allocation13 + $0x8] sm:$0xff]
    %v966 = vld [vmem:[#allocation13 + $0x10] sm:$0xff]
    %v967 = vld [vmem:[#allocation13 + $0x18] sm:$0xff]
    %v968 = vld [vmem:[#allocation13 + $0x20] sm:$0xff]
    %v969 = vld [vmem:[#allocation13 + $0x28] sm:$0xff]
    %v970 = vld [vmem:[#allocation13 + $0x30] sm:$0xff]
    %v971 = vld [vmem:[#allocation13 + $0x38] sm:$0xff]
    %v972 = vld [vmem:[#allocation13 + $0x40] sm:$0xff]
    %v973 = vld [vmem:[#allocation13 + $0x48] sm:$0xff]
    %v974 = vld [vmem:[#allocation13 + $0x50] sm:$0xff]
    %v975 = vld [vmem:[#allocation13 + $0x58] sm:$0xff]
    %v976 = vld [vmem:[#allocation13 + $0x60] sm:$0xff]
    %v977 = vld [vmem:[#allocation13 + $0x68] sm:$0xff]
    %v978 = vld [vmem:[#allocation13 + $0x70] sm:$0xff]
    %v979 = vld [vmem:[#allocation13 + $0x78] sm:$0xff]
    %v980 = vld [vmem:[#allocation13 + $0x80] sm:$0xff]
    %v981 = vld [vmem:[#allocation13 + $0x88] sm:$0xff]
    %v982 = vld [vmem:[#allocation13 + $0x90] sm:$0xff]
    %v983 = vld [vmem:[#allocation13 + $0x98] sm:$0xff]
    %v984 = vld [vmem:[#allocation13 + $0xa0] sm:$0xff]
    %v985 = vld [vmem:[#allocation13 + $0xa8] sm:$0xff]
    %v986 = vld [vmem:[#allocation13 + $0xb0] sm:$0xff]
    %v987 = vld [vmem:[#allocation13 + $0xb8] sm:$0xff]
    %v988 = vld [vmem:[#allocation13 + $0xc0] sm:$0xff]
    %v989 = vld [vmem:[#allocation13 + $0xc8] sm:$0xff]
    %v990 = vld [vmem:[#allocation13 + $0xd0] sm:$0xff]
    %v991 = vld [vmem:[#allocation13 + $0xd8] sm:$0xff]
    %v992 = vld [vmem:[#allocation13 + $0xe0] sm:$0xff]
    %v993 = vld [vmem:[#allocation13 + $0xe8] sm:$0xff]
    %v994 = vld [vmem:[#allocation13 + $0xf0] sm:$0xff]
    %v995 = vld [vmem:[#allocation13 + $0xf8] sm:$0xff]
    %v996 = vld [vmem:[#allocation13 + $0x100] sm:$0xff]
    %v997 = vld [vmem:[#allocation13 + $0x108] sm:$0xff]
    %v998 = vld [vmem:[#allocation13 + $0x110] sm:$0xff]
    %v999 = vld [vmem:[#allocation13 + $0x118] sm:$0xff]
    %v1000 = vld [vmem:[#allocation13 + $0x120] sm:$0xff]
    %v1001 = vld [vmem:[#allocation13 + $0x128] sm:$0xff]
    %v1002 = vld [vmem:[#allocation13 + $0x130] sm:$0xff]
    %v1003 = vld [vmem:[#allocation13 + $0x138] sm:$0xff]
    %v1004 = vld [vmem:[#allocation13 + $0x140] sm:$0xff]
    %v1005 = vld [vmem:[#allocation13 + $0x148] sm:$0xff]
    %v1006 = vld [vmem:[#allocation13 + $0x150] sm:$0xff]
    %v1007 = vld [vmem:[#allocation13 + $0x158] sm:$0xff]
    %v1008 = vld [vmem:[#allocation13 + $0x160] sm:$0xff]
    %v1009 = vld [vmem:[#allocation13 + $0x168] sm:$0xff]
    %v1010 = vld [vmem:[#allocation13 + $0x170] sm:$0xff]
    %v1011 = vld [vmem:[#allocation13 + $0x178] sm:$0xff]
    %v1012 = vld [vmem:[#allocation13 + $0x180] sm:$0xff]
    %v1013 = vld [vmem:[#allocation13 + $0x188] sm:$0xff]
    %v1014 = vld [vmem:[#allocation13 + $0x190] sm:$0xff]
    %v1015 = vld [vmem:[#allocation13 + $0x198] sm:$0xff]
    %v1016 = vld [vmem:[#allocation13 + $0x1a0] sm:$0xff]
    %v1017 = vld [vmem:[#allocation13 + $0x1a8] sm:$0xff]
    %v1018 = vld [vmem:[#allocation13 + $0x1b0] sm:$0xff]
    %v1019 = vld [vmem:[#allocation13 + $0x1b8] sm:$0xff]
    %v1020 = vld [vmem:[#allocation13 + $0x1c0] sm:$0xff]
    %v1021 = vld [vmem:[#allocation13 + $0x1c8] sm:$0xff]
    %v1022 = vld [vmem:[#allocation13 + $0x1d0] sm:$0xff]
    %v1023 = vld [vmem:[#allocation13 + $0x1d8] sm:$0xff]
    %v1024 = vld [vmem:[#allocation13 + $0x1e0] sm:$0xff]
    %v1025 = vld [vmem:[#allocation13 + $0x1e8] sm:$0xff]
    %v1026 = vld [vmem:[#allocation13 + $0x1f0] sm:$0xff]
    %v1027 = vld [vmem:[#allocation13 + $0x1f8] sm:$0xff]
    %v1028 = vld [vmem:[#allocation13 + $0x200] sm:$0xff]
    %v1029 = vld [vmem:[#allocation13 + $0x208] sm:$0xff]
    %v1030 = vld [vmem:[#allocation13 + $0x210] sm:$0xff]
    %v1031 = vld [vmem:[#allocation13 + $0x218] sm:$0xff]
    %v1032 = vld [vmem:[#allocation13 + $0x220] sm:$0xff]
    %v1033 = vld [vmem:[#allocation13 + $0x228] sm:$0xff]
    %v1034 = vld [vmem:[#allocation13 + $0x230] sm:$0xff]
    %v1035 = vld [vmem:[#allocation13 + $0x238] sm:$0xff]
    %v1036 = vld [vmem:[#allocation13 + $0x240] sm:$0xff]
    %v1037 = vld [vmem:[#allocation13 + $0x248] sm:$0xff]
    %v1038 = vld [vmem:[#allocation13 + $0x250] sm:$0xff]
    %v1039 = vld [vmem:[#allocation13 + $0x258] sm:$0xff]
    %v1040 = vld [vmem:[#allocation13 + $0x260] sm:$0xff]
    %v1041 = vld [vmem:[#allocation13 + $0x268] sm:$0xff]
    %v1042 = vld [vmem:[#allocation13 + $0x270] sm:$0xff]
    %v1043 = vld [vmem:[#allocation13 + $0x278] sm:$0xff]
    %v1044 = vld [vmem:[#allocation13 + $0x280] sm:$0xff]
    %v1045 = vld [vmem:[#allocation13 + $0x288] sm:$0xff]
    %v1046 = vld [vmem:[#allocation13 + $0x290] sm:$0xff]
    %v1047 = vld [vmem:[#allocation13 + $0x298] sm:$0xff]
    %v1048 = vld [vmem:[#allocation13 + $0x2a0] sm:$0xff]
    %v1049 = vld [vmem:[#allocation13 + $0x2a8] sm:$0xff]
    %v1050 = vld [vmem:[#allocation13 + $0x2b0] sm:$0xff]
    %v1051 = vld [vmem:[#allocation13 + $0x2b8] sm:$0xff]
    %v1052 = vld [vmem:[#allocation13 + $0x2c0] sm:$0xff]
    %v1053 = vld [vmem:[#allocation13 + $0x2c8] sm:$0xff]
    %v1054 = vld [vmem:[#allocation13 + $0x2d0] sm:$0xff]
    %v1055 = vld [vmem:[#allocation13 + $0x2d8] sm:$0xff]
    %v1056 = vld [vmem:[#allocation13 + $0x2e0] sm:$0xff]
    %v1057 = vld [vmem:[#allocation13 + $0x2e8] sm:$0xff]
    %v1058 = vld [vmem:[#allocation13 + $0x2f0] sm:$0xff]
    %v1059 = vld [vmem:[#allocation13 + $0x2f8] sm:$0xff]
    %v1060 = vld [vmem:[#allocation13 + $0x300] sm:$0xff]
    %v1061 = vld [vmem:[#allocation13 + $0x308] sm:$0xff]
    %v1062 = vld [vmem:[#allocation13 + $0x310] sm:$0xff]
    %v1063 = vld [vmem:[#allocation13 + $0x318] sm:$0xff]
    %v1064 = vld [vmem:[#allocation13 + $0x320] sm:$0xff]
    %v1065 = vld [vmem:[#allocation13 + $0x328] sm:$0xff]
    %v1066 = vld [vmem:[#allocation13 + $0x330] sm:$0xff]
    %v1067 = vld [vmem:[#allocation13 + $0x338] sm:$0xff]
    %v1068 = vld [vmem:[#allocation13 + $0x340] sm:$0xff]
    %v1069 = vld [vmem:[#allocation13 + $0x348] sm:$0xff]
    %v1070 = vld [vmem:[#allocation13 + $0x350] sm:$0xff]
    %v1071 = vld [vmem:[#allocation13 + $0x358] sm:$0xff]
    %v1072 = vld [vmem:[#allocation13 + $0x360] sm:$0xff]
    %v1073 = vld [vmem:[#allocation13 + $0x368] sm:$0xff]
    %v1074 = vld [vmem:[#allocation13 + $0x370] sm:$0xff]
    %v1075 = vld [vmem:[#allocation13 + $0x378] sm:$0xff]
    %v1076 = vld [vmem:[#allocation13 + $0x380] sm:$0xff]
    %v1077 = vld [vmem:[#allocation13 + $0x388] sm:$0xff]
    %v1078 = vld [vmem:[#allocation13 + $0x390] sm:$0xff]
    %v1079 = vld [vmem:[#allocation13 + $0x398] sm:$0xff]
    %v1080 = vld [vmem:[#allocation13 + $0x3a0] sm:$0xff]
    %v1081 = vld [vmem:[#allocation13 + $0x3a8] sm:$0xff]
    %v1082 = vld [vmem:[#allocation13 + $0x3b0] sm:$0xff]
    %v1083 = vld [vmem:[#allocation13 + $0x3b8] sm:$0xff]
    %v1084 = vld [vmem:[#allocation13 + $0x3c0] sm:$0xff]
    %v1085 = vld [vmem:[#allocation13 + $0x3c8] sm:$0xff]
    %v1086 = vld [vmem:[#allocation13 + $0x3d0] sm:$0xff]
    %v1087 = vld [vmem:[#allocation13 + $0x3d8] sm:$0xff]
    %v1088 = vld [vmem:[#allocation13 + $0x3e0] sm:$0xff]
    %v1089 = vld [vmem:[#allocation13 + $0x3e8] sm:$0xff]
    %v1090 = vld [vmem:[#allocation13 + $0x3f0] sm:$0xff]
    %v1091 = vld [vmem:[#allocation13 + $0x3f8] sm:$0xff]
    %v1092 = vld [vmem:[#allocation3] sm:$0xfc]
    %v1093 = vld [vmem:[#allocation3 + $0x8] sm:$0xfc]
    %v1094 = vld [vmem:[#allocation3 + $0x40] sm:$0x3]
    %v1095 = vld [vmem:[#allocation3 + $0x48] sm:$0x3]
    %s1096 = scalar_lea.vmem [#allocation13], 1024
    %v1097 = vld [vmem:[%s1096] sm:$0xff]
    %v1098 = vld [vmem:[%s1096 + $0x8] sm:$0xff]
    %v1099 = vld [vmem:[%s1096 + $0x10] sm:$0xff]
    %v1100 = vld [vmem:[%s1096 + $0x18] sm:$0xff]
    %v1101 = vld [vmem:[%s1096 + $0x20] sm:$0xff]
    %v1102 = vld [vmem:[%s1096 + $0x28] sm:$0xff]
    %v1103 = vld [vmem:[%s1096 + $0x30] sm:$0xff]
    %v1104 = vld [vmem:[%s1096 + $0x38] sm:$0xff]
    %v1105 = vld [vmem:[%s1096 + $0x40] sm:$0xff]
    %v1106 = vld [vmem:[%s1096 + $0x48] sm:$0xff]
    %v1107 = vld [vmem:[%s1096 + $0x50] sm:$0xff]
    %v1108 = vld [vmem:[%s1096 + $0x58] sm:$0xff]
    %v1109 = vld [vmem:[%s1096 + $0x60] sm:$0xff]
    %v1110 = vld [vmem:[%s1096 + $0x68] sm:$0xff]
    %v1111 = vld [vmem:[%s1096 + $0x70] sm:$0xff]
    %v1112 = vld [vmem:[%s1096 + $0x78] sm:$0xff]
    %v1113 = vld [vmem:[%s1096 + $0x80] sm:$0xff]
    %v1114 = vld [vmem:[%s1096 + $0x88] sm:$0xff]
    %v1115 = vld [vmem:[%s1096 + $0x90] sm:$0xff]
    %v1116 = vld [vmem:[%s1096 + $0x98] sm:$0xff]
    %v1117 = vld [vmem:[%s1096 + $0xa0] sm:$0xff]
    %v1118 = vld [vmem:[%s1096 + $0xa8] sm:$0xff]
    %v1119 = vld [vmem:[%s1096 + $0xb0] sm:$0xff]
    %v1120 = vld [vmem:[%s1096 + $0xb8] sm:$0xff]
    %v1121 = vld [vmem:[%s1096 + $0xc0] sm:$0xff]
    %v1122 = vld [vmem:[%s1096 + $0xc8] sm:$0xff]
    %v1123 = vld [vmem:[%s1096 + $0xd0] sm:$0xff]
    %v1124 = vld [vmem:[%s1096 + $0xd8] sm:$0xff]
    %v1125 = vld [vmem:[%s1096 + $0xe0] sm:$0xff]
    %v1126 = vld [vmem:[%s1096 + $0xe8] sm:$0xff]
    %v1127 = vld [vmem:[%s1096 + $0xf0] sm:$0xff]
    %v1128 = vld [vmem:[%s1096 + $0xf8] sm:$0xff]
    %v1129 = vld [vmem:[%s1096 + $0x100] sm:$0xff]
    %v1130 = vld [vmem:[%s1096 + $0x108] sm:$0xff]
    %v1131 = vld [vmem:[%s1096 + $0x110] sm:$0xff]
    %v1132 = vld [vmem:[%s1096 + $0x118] sm:$0xff]
    %v1133 = vld [vmem:[%s1096 + $0x120] sm:$0xff]
    %v1134 = vld [vmem:[%s1096 + $0x128] sm:$0xff]
    %v1135 = vld [vmem:[%s1096 + $0x130] sm:$0xff]
    %v1136 = vld [vmem:[%s1096 + $0x138] sm:$0xff]
    %v1137 = vld [vmem:[%s1096 + $0x140] sm:$0xff]
    %v1138 = vld [vmem:[%s1096 + $0x148] sm:$0xff]
    %v1139 = vld [vmem:[%s1096 + $0x150] sm:$0xff]
    %v1140 = vld [vmem:[%s1096 + $0x158] sm:$0xff]
    %v1141 = vld [vmem:[%s1096 + $0x160] sm:$0xff]
    %v1142 = vld [vmem:[%s1096 + $0x168] sm:$0xff]
    %v1143 = vld [vmem:[%s1096 + $0x170] sm:$0xff]
    %v1144 = vld [vmem:[%s1096 + $0x178] sm:$0xff]
    %v1145 = vld [vmem:[%s1096 + $0x180] sm:$0xff]
    %v1146 = vld [vmem:[%s1096 + $0x188] sm:$0xff]
    %v1147 = vld [vmem:[%s1096 + $0x190] sm:$0xff]
    %v1148 = vld [vmem:[%s1096 + $0x198] sm:$0xff]
    %v1149 = vld [vmem:[%s1096 + $0x1a0] sm:$0xff]
    %v1150 = vld [vmem:[%s1096 + $0x1a8] sm:$0xff]
    %v1151 = vld [vmem:[%s1096 + $0x1b0] sm:$0xff]
    %v1152 = vld [vmem:[%s1096 + $0x1b8] sm:$0xff]
    %v1153 = vld [vmem:[%s1096 + $0x1c0] sm:$0xff]
    %v1154 = vld [vmem:[%s1096 + $0x1c8] sm:$0xff]
    %v1155 = vld [vmem:[%s1096 + $0x1d0] sm:$0xff]
    %v1156 = vld [vmem:[%s1096 + $0x1d8] sm:$0xff]
    %v1157 = vld [vmem:[%s1096 + $0x1e0] sm:$0xff]
    %v1158 = vld [vmem:[%s1096 + $0x1e8] sm:$0xff]
    %v1159 = vld [vmem:[%s1096 + $0x1f0] sm:$0xff]
    %v1160 = vld [vmem:[%s1096 + $0x1f8] sm:$0xff]
    %v1161 = vld [vmem:[%s1096 + $0x200] sm:$0xff]
    %v1162 = vld [vmem:[%s1096 + $0x208] sm:$0xff]
    %v1163 = vld [vmem:[%s1096 + $0x210] sm:$0xff]
    %v1164 = vld [vmem:[%s1096 + $0x218] sm:$0xff]
    %v1165 = vld [vmem:[%s1096 + $0x220] sm:$0xff]
    %v1166 = vld [vmem:[%s1096 + $0x228] sm:$0xff]
    %v1167 = vld [vmem:[%s1096 + $0x230] sm:$0xff]
    %v1168 = vld [vmem:[%s1096 + $0x238] sm:$0xff]
    %v1169 = vld [vmem:[%s1096 + $0x240] sm:$0xff]
    %v1170 = vld [vmem:[%s1096 + $0x248] sm:$0xff]
    %v1171 = vld [vmem:[%s1096 + $0x250] sm:$0xff]
    %v1172 = vld [vmem:[%s1096 + $0x258] sm:$0xff]
    %v1173 = vld [vmem:[%s1096 + $0x260] sm:$0xff]
    %v1174 = vld [vmem:[%s1096 + $0x268] sm:$0xff]
    %v1175 = vld [vmem:[%s1096 + $0x270] sm:$0xff]
    %v1176 = vld [vmem:[%s1096 + $0x278] sm:$0xff]
    %v1177 = vld [vmem:[%s1096 + $0x280] sm:$0xff]
    %v1178 = vld [vmem:[%s1096 + $0x288] sm:$0xff]
    %v1179 = vld [vmem:[%s1096 + $0x290] sm:$0xff]
    %v1180 = vld [vmem:[%s1096 + $0x298] sm:$0xff]
    %v1181 = vld [vmem:[%s1096 + $0x2a0] sm:$0xff]
    %v1182 = vld [vmem:[%s1096 + $0x2a8] sm:$0xff]
    %v1183 = vld [vmem:[%s1096 + $0x2b0] sm:$0xff]
    %v1184 = vld [vmem:[%s1096 + $0x2b8] sm:$0xff]
    %v1185 = vld [vmem:[%s1096 + $0x2c0] sm:$0xff]
    %v1186 = vld [vmem:[%s1096 + $0x2c8] sm:$0xff]
    %v1187 = vld [vmem:[%s1096 + $0x2d0] sm:$0xff]
    %v1188 = vld [vmem:[%s1096 + $0x2d8] sm:$0xff]
    %v1189 = vld [vmem:[%s1096 + $0x2e0] sm:$0xff]
    %v1190 = vld [vmem:[%s1096 + $0x2e8] sm:$0xff]
    %v1191 = vld [vmem:[%s1096 + $0x2f0] sm:$0xff]
    %v1192 = vld [vmem:[%s1096 + $0x2f8] sm:$0xff]
    %v1193 = vld [vmem:[%s1096 + $0x300] sm:$0xff]
    %v1194 = vld [vmem:[%s1096 + $0x308] sm:$0xff]
    %v1195 = vld [vmem:[%s1096 + $0x310] sm:$0xff]
    %v1196 = vld [vmem:[%s1096 + $0x318] sm:$0xff]
    %v1197 = vld [vmem:[%s1096 + $0x320] sm:$0xff]
    %v1198 = vld [vmem:[%s1096 + $0x328] sm:$0xff]
    %v1199 = vld [vmem:[%s1096 + $0x330] sm:$0xff]
    %v1200 = vld [vmem:[%s1096 + $0x338] sm:$0xff]
    %v1201 = vld [vmem:[%s1096 + $0x340] sm:$0xff]
    %v1202 = vld [vmem:[%s1096 + $0x348] sm:$0xff]
    %v1203 = vld [vmem:[%s1096 + $0x350] sm:$0xff]
    %v1204 = vld [vmem:[%s1096 + $0x358] sm:$0xff]
    %v1205 = vld [vmem:[%s1096 + $0x360] sm:$0xff]
    %v1206 = vld [vmem:[%s1096 + $0x368] sm:$0xff]
    %v1207 = vld [vmem:[%s1096 + $0x370] sm:$0xff]
    %v1208 = vld [vmem:[%s1096 + $0x378] sm:$0xff]
    %v1209 = vld [vmem:[%s1096 + $0x380] sm:$0xff]
    %v1210 = vld [vmem:[%s1096 + $0x388] sm:$0xff]
    %v1211 = vld [vmem:[%s1096 + $0x390] sm:$0xff]
    %v1212 = vld [vmem:[%s1096 + $0x398] sm:$0xff]
    %v1213 = vld [vmem:[%s1096 + $0x3a0] sm:$0xff]
    %v1214 = vld [vmem:[%s1096 + $0x3a8] sm:$0xff]
    %v1215 = vld [vmem:[%s1096 + $0x3b0] sm:$0xff]
    %v1216 = vld [vmem:[%s1096 + $0x3b8] sm:$0xff]
    %v1217 = vld [vmem:[%s1096 + $0x3c0] sm:$0xff]
    %v1218 = vld [vmem:[%s1096 + $0x3c8] sm:$0xff]
    %v1219 = vld [vmem:[%s1096 + $0x3d0] sm:$0xff]
    %v1220 = vld [vmem:[%s1096 + $0x3d8] sm:$0xff]
    %v1221 = vld [vmem:[%s1096 + $0x3e0] sm:$0xff]
    %v1222 = vld [vmem:[%s1096 + $0x3e8] sm:$0xff]
    %v1223 = vld [vmem:[%s1096 + $0x3f0] sm:$0xff]
    %v1224 = vld [vmem:[%s1096 + $0x3f8] sm:$0xff]
    %vm1235 = vcmask 1045504
    %v1236 = vrot.slane %v1092, 2
    %v1237 = vrot.slane %v958, 2
    %v1238 = vsel %vm1235, %v1236, %v1237
    %v1239 = vrot.slane %v1093, 2
    %v1240 = vrot.slane %v959, 2
    %v1241 = vsel %vm1235, %v1239, %v1240
    %v1242 = vrot.slane %v960, 2
    %v1243 = vsel %vm1235, %v1237, %v1242
    %v1244 = vrot.slane %v961, 2
    %v1245 = vsel %vm1235, %v1240, %v1244
    %v1246 = vrot.slane %v962, 2
    %v1247 = vsel %vm1235, %v1242, %v1246
    %v1248 = vrot.slane %v963, 2
    %v1249 = vsel %vm1235, %v1244, %v1248
    %v1250 = vrot.slane %v1094, 2
    %v1251 = vsel %vm1235, %v1246, %v1250
    %v1252 = vrot.slane %v1095, 2
    %v1253 = vsel %vm1235, %v1248, %v1252
    %1262 = vmatprep.subr.mxu0 %v1098
    %1263 = vmatpush1.msra.mxu0 %v1097
    %1264 = vmatprep.subr.mxu0 %v1102
    %1265 = vmatpush1.msra.mxu0 %v1101
    %1266 = vmatprep.subr.mxu0 %v1106
    %1267 = vmatpush1.msra.mxu0 %v1105
    %1268 = vmatprep.subr.mxu0 %v1110
    %1269 = vmatpush1.msra.mxu0 %v1109
    %1270 = vmatprep.subr.mxu0 %v1114
    %1271 = vmatpush1.msra.mxu0 %v1113
    %1272 = vmatprep.subr.mxu0 %v1118
    %1273 = vmatpush1.msra.mxu0 %v1117
    %1274 = vmatprep.subr.mxu0 %v1122
    %1275 = vmatpush1.msra.mxu0 %v1121
    %1276 = vmatprep.subr.mxu0 %v1126
    %1277 = vmatpush1.msra.mxu0 %v1125
    %1278 = vmatprep.subr.mxu0 %v1130
    %1279 = vmatpush1.msra.mxu0 %v1129
    %1280 = vmatprep.subr.mxu0 %v1134
    %1281 = vmatpush1.msra.mxu0 %v1133
    %1282 = vmatprep.subr.mxu0 %v1138
    %1283 = vmatpush1.msra.mxu0 %v1137
    %1284 = vmatprep.subr.mxu0 %v1142
    %1285 = vmatpush1.msra.mxu0 %v1141
    %1286 = vmatprep.subr.mxu0 %v1146
    %1287 = vmatpush1.msra.mxu0 %v1145
    %1288 = vmatprep.subr.mxu0 %v1150
    %1289 = vmatpush1.msra.mxu0 %v1149
    %1290 = vmatprep.subr.mxu0 %v1154
    %1291 = vmatpush1.msra.mxu0 %v1153
    %1292 = vmatprep.subr.mxu0 %v1158
    %1293 = vmatpush1.msra.mxu0 %v1157
    %1294 = vmatprep.subr.mxu0 %v1162
    %1295 = vmatpush1.msra.mxu0 %v1161
    %1296 = vmatprep.subr.mxu0 %v1166
    %1297 = vmatpush1.msra.mxu0 %v1165
    %1298 = vmatprep.subr.mxu0 %v1170
    %1299 = vmatpush1.msra.mxu0 %v1169
    %1300 = vmatprep.subr.mxu0 %v1174
    %1301 = vmatpush1.msra.mxu0 %v1173
    %1302 = vmatprep.subr.mxu0 %v1178
    %1303 = vmatpush1.msra.mxu0 %v1177
    %1304 = vmatprep.subr.mxu0 %v1182
    %1305 = vmatpush1.msra.mxu0 %v1181
    %1306 = vmatprep.subr.mxu0 %v1186
    %1307 = vmatpush1.msra.mxu0 %v1185
    %1308 = vmatprep.subr.mxu0 %v1190
    %1309 = vmatpush1.msra.mxu0 %v1189
    %1310 = vmatprep.subr.mxu0 %v1194
    %1311 = vmatpush1.msra.mxu0 %v1193
    %1312 = vmatprep.subr.mxu0 %v1198
    %1313 = vmatpush1.msra.mxu0 %v1197
    %1314 = vmatprep.subr.mxu0 %v1202
    %1315 = vmatpush1.msra.mxu0 %v1201
    %1316 = vmatprep.subr.mxu0 %v1206
    %1317 = vmatpush1.msra.mxu0 %v1205
    %1318 = vmatprep.subr.mxu0 %v1210
    %1319 = vmatpush1.msra.mxu0 %v1209
    %1320 = vmatprep.subr.mxu0 %v1214
    %1321 = vmatpush1.msra.mxu0 %v1213
    %1322 = vmatprep.subr.mxu0 %v1218
    %1323 = vmatpush1.msra.mxu0 %v1217
    %1324 = vmatprep.subr.mxu0 %v1222
    %1325 = vmatpush1.msra.mxu0 %v1221
    %1326 = vmatprep.mubr.f32.mxu0 %v1241
    %1327 = vmatmul.mubr.f32.gmra.mrb[0].mxu0 %v1238
    %v1328 = vpop.f32.mrb[0].mxu0
    %v1329 = vadd.f32 0.0, %v1328
    %v1330 = vpop.f32.mrb[0].mxu0
    %v1331 = vadd.f32 0.0, %v1330
    %1332 = vmatprep.mubr.f32.mxu0 %v1245
    %1333 = vmatmul.mubr.f32.gmra.mrb[0].mxu0 %v1243
    %v1334 = vpop.f32.mrb[0].mxu0
    %v1335 = vadd.f32 0.0, %v1334
    %v1336 = vpop.f32.mrb[0].mxu0
    %v1337 = vadd.f32 0.0, %v1336
    %1338 = vmatprep.mubr.f32.mxu0 %v1249
    %1339 = vmatmul.mubr.f32.gmra.mrb[0].mxu0 %v1247
    %v1340 = vpop.f32.mrb[0].mxu0
    %v1341 = vadd.f32 0.0, %v1340
    %v1342 = vpop.f32.mrb[0].mxu0
    %v1343 = vadd.f32 0.0, %v1342
    %1344 = vmatprep.mubr.f32.mxu0 %v1253
    %1345 = vmatmul.mubr.f32.gmra.mrb[0].mxu0 %v1251
    %v1346 = vpop.f32.mrb[0].mxu0
    %v1347 = vadd.f32 0.0, %v1346
    %v1348 = vpop.f32.mrb[0].mxu0
    %v1349 = vadd.f32 0.0, %v1348
    %1350 = vdwg.mxu0
    %1351 = vmatprep.subr.mxu0 %v1100
    %1352 = vmatpush1.msra.mxu0 %v1099
    %1353 = vmatprep.subr.mxu0 %v1104
    %1354 = vmatpush1.msra.mxu0 %v1103
    %1355 = vmatprep.subr.mxu0 %v1108
    %1356 = vmatpush1.msra.mxu0 %v1107
    %1357 = vmatprep.subr.mxu0 %v1112
    %1358 = vmatpush1.msra.mxu0 %v1111
    %1359 = vmatprep.subr.mxu0 %v1116
    %1360 = vmatpush1.msra.mxu0 %v1115
    %1361 = vmatprep.subr.mxu0 %v1120
    %1362 = vmatpush1.msra.mxu0 %v1119
    %1363 = vmatprep.subr.mxu0 %v1124
    %1364 = vmatpush1.msra.mxu0 %v1123
    %1365 = vmatprep.subr.mxu0 %v1128
    %1366 = vmatpush1.msra.mxu0 %v1127
    %1367 = vmatprep.subr.mxu0 %v1132
    %1368 = vmatpush1.msra.mxu0 %v1131
    %1369 = vmatprep.subr.mxu0 %v1136
    %1370 = vmatpush1.msra.mxu0 %v1135
    %1371 = vmatprep.subr.mxu0 %v1140
    %1372 = vmatpush1.msra.mxu0 %v1139
    %1373 = vmatprep.subr.mxu0 %v1144
    %1374 = vmatpush1.msra.mxu0 %v1143
    %1375 = vmatprep.subr.mxu0 %v1148
    %1376 = vmatpush1.msra.mxu0 %v1147
    %1377 = vmatprep.subr.mxu0 %v1152
    %1378 = vmatpush1.msra.mxu0 %v1151
    %1379 = vmatprep.subr.mxu0 %v1156
    %1380 = vmatpush1.msra.mxu0 %v1155
    %1381 = vmatprep.subr.mxu0 %v1160
    %1382 = vmatpush1.msra.mxu0 %v1159
    %1383 = vmatprep.subr.mxu0 %v1164
    %1384 = vmatpush1.msra.mxu0 %v1163
    %1385 = vmatprep.subr.mxu0 %v1168
    %1386 = vmatpush1.msra.mxu0 %v1167
    %1387 = vmatprep.subr.mxu0 %v1172
    %1388 = vmatpush1.msra.mxu0 %v1171
    %1389 = vmatprep.subr.mxu0 %v1176
    %1390 = vmatpush1.msra.mxu0 %v1175
    %1391 = vmatprep.subr.mxu0 %v1180
    %1392 = vmatpush1.msra.mxu0 %v1179
    %1393 = vmatprep.subr.mxu0 %v1184
    %1394 = vmatpush1.msra.mxu0 %v1183
    %1395 = vmatprep.subr.mxu0 %v1188
    %1396 = vmatpush1.msra.mxu0 %v1187
    %1397 = vmatprep.subr.mxu0 %v1192
    %1398 = vmatpush1.msra.mxu0 %v1191
    %1399 = vmatprep.subr.mxu0 %v1196
    %1400 = vmatpush1.msra.mxu0 %v1195
    %1401 = vmatprep.subr.mxu0 %v1200
    %1402 = vmatpush1.msra.mxu0 %v1199
    %1403 = vmatprep.subr.mxu0 %v1204
    %1404 = vmatpush1.msra.mxu0 %v1203
    %1405 = vmatprep.subr.mxu0 %v1208
    %1406 = vmatpush1.msra.mxu0 %v1207
    %1407 = vmatprep.subr.mxu0 %v1212
    %1408 = vmatpush1.msra.mxu0 %v1211
    %1409 = vmatprep.subr.mxu0 %v1216
    %1410 = vmatpush1.msra.mxu0 %v1215
    %1411 = vmatprep.subr.mxu0 %v1220
    %1412 = vmatpush1.msra.mxu0 %v1219
    %1413 = vmatprep.subr.mxu0 %v1224
    %1414 = vmatpush1.msra.mxu0 %v1223
    %1415 = vmatprep.mubr.f32.mxu0 %v1241
    %1416 = vmatmul.mubr.f32.gmra.mrb[0].mxu0 %v1238
    %v1417 = vpop.f32.mrb[0].mxu0
    %v1418 = vadd.f32 0.0, %v1417
    %v1419 = vpop.f32.mrb[0].mxu0
    %v1420 = vadd.f32 0.0, %v1419
    %1421 = vmatprep.mubr.f32.mxu0 %v1245
    %1422 = vmatmul.mubr.f32.gmra.mrb[0].mxu0 %v1243
    %v1423 = vpop.f32.mrb[0].mxu0
    %v1424 = vadd.f32 0.0, %v1423
    %v1425 = vpop.f32.mrb[0].mxu0
    %v1426 = vadd.f32 0.0, %v1425
    %1427 = vmatprep.mubr.f32.mxu0 %v1249
    %1428 = vmatmul.mubr.f32.gmra.mrb[0].mxu0 %v1247
    %v1429 = vpop.f32.mrb[0].mxu0
    %v1430 = vadd.f32 0.0, %v1429
    %v1431 = vpop.f32.mrb[0].mxu0
    %v1432 = vadd.f32 0.0, %v1431
    %1433 = vmatprep.mubr.f32.mxu0 %v1253
    %1434 = vmatmul.mubr.f32.gmra.mrb[0].mxu0 %v1251
    %v1435 = vpop.f32.mrb[0].mxu0
    %v1436 = vadd.f32 0.0, %v1435
    %v1437 = vpop.f32.mrb[0].mxu0
    %v1438 = vadd.f32 0.0, %v1437
    %1439 = vdwg.mxu0
    %1440 = vmatprep.subr.mxu0 %v965
    %1441 = vmatpush1.msra.mxu0 %v964
    %1442 = vmatprep.subr.mxu0 %v969
    %1443 = vmatpush1.msra.mxu0 %v968
    %1444 = vmatprep.subr.mxu0 %v973
    %1445 = vmatpush1.msra.mxu0 %v972
    %1446 = vmatprep.subr.mxu0 %v977
    %1447 = vmatpush1.msra.mxu0 %v976
    %1448 = vmatprep.subr.mxu0 %v981
    %1449 = vmatpush1.msra.mxu0 %v980
    %1450 = vmatprep.subr.mxu0 %v985
    %1451 = vmatpush1.msra.mxu0 %v984
    %1452 = vmatprep.subr.mxu0 %v989
    %1453 = vmatpush1.msra.mxu0 %v988
    %1454 = vmatprep.subr.mxu0 %v993
    %1455 = vmatpush1.msra.mxu0 %v992
    %1456 = vmatprep.subr.mxu0 %v997
    %1457 = vmatpush1.msra.mxu0 %v996
    %1458 = vmatprep.subr.mxu0 %v1001
    %1459 = vmatpush1.msra.mxu0 %v1000
    %1460 = vmatprep.subr.mxu0 %v1005
    %1461 = vmatpush1.msra.mxu0 %v1004
    %1462 = vmatprep.subr.mxu0 %v1009
    %1463 = vmatpush1.msra.mxu0 %v1008
    %1464 = vmatprep.subr.mxu0 %v1013
    %1465 = vmatpush1.msra.mxu0 %v1012
    %1466 = vmatprep.subr.mxu0 %v1017
    %1467 = vmatpush1.msra.mxu0 %v1016
    %1468 = vmatprep.subr.mxu0 %v1021
    %1469 = vmatpush1.msra.mxu0 %v1020
    %1470 = vmatprep.subr.mxu0 %v1025
    %1471 = vmatpush1.msra.mxu0 %v1024
    %1472 = vmatprep.subr.mxu0 %v1029
    %1473 = vmatpush1.msra.mxu0 %v1028
    %1474 = vmatprep.subr.mxu0 %v1033
    %1475 = vmatpush1.msra.mxu0 %v1032
    %1476 = vmatprep.subr.mxu0 %v1037
    %1477 = vmatpush1.msra.mxu0 %v1036
    %1478 = vmatprep.subr.mxu0 %v1041
    %1479 = vmatpush1.msra.mxu0 %v1040
    %1480 = vmatprep.subr.mxu0 %v1045
    %1481 = vmatpush1.msra.mxu0 %v1044
    %1482 = vmatprep.subr.mxu0 %v1049
    %1483 = vmatpush1.msra.mxu0 %v1048
    %1484 = vmatprep.subr.mxu0 %v1053
    %1485 = vmatpush1.msra.mxu0 %v1052
    %1486 = vmatprep.subr.mxu0 %v1057
    %1487 = vmatpush1.msra.mxu0 %v1056
    %1488 = vmatprep.subr.mxu0 %v1061
    %1489 = vmatpush1.msra.mxu0 %v1060
    %1490 = vmatprep.subr.mxu0 %v1065
    %1491 = vmatpush1.msra.mxu0 %v1064
    %1492 = vmatprep.subr.mxu0 %v1069
    %1493 = vmatpush1.msra.mxu0 %v1068
    %1494 = vmatprep.subr.mxu0 %v1073
    %1495 = vmatpush1.msra.mxu0 %v1072
    %1496 = vmatprep.subr.mxu0 %v1077
    %1497 = vmatpush1.msra.mxu0 %v1076
    %1498 = vmatprep.subr.mxu0 %v1081
    %1499 = vmatpush1.msra.mxu0 %v1080
    %1500 = vmatprep.subr.mxu0 %v1085
    %1501 = vmatpush1.msra.mxu0 %v1084
    %1502 = vmatprep.subr.mxu0 %v1089
    %1503 = vmatpush1.msra.mxu0 %v1088
    %1504 = vmatprep.mubr.f32.mxu0 %v957
    %1505 = vmatmul.mubr.f32.gmra.mrb[0].mxu0 %v956
    %v1506 = vpop.f32.mrb[0].mxu0
    %v1507 = vadd.f32 %v1329, %v1506
    %v1508 = vpop.f32.mrb[0].mxu0
    %v1509 = vadd.f32 %v1331, %v1508
    %1510 = vmatprep.mubr.f32.mxu0 %v959
    %1511 = vmatmul.mubr.f32.gmra.mrb[0].mxu0 %v958
    %v1512 = vpop.f32.mrb[0].mxu0
    %v1513 = vadd.f32 %v1335, %v1512
    %v1514 = vpop.f32.mrb[0].mxu0
    %v1515 = vadd.f32 %v1337, %v1514
    %1516 = vmatprep.mubr.f32.mxu0 %v961
    %1517 = vmatmul.mubr.f32.gmra.mrb[0].mxu0 %v960
    %v1518 = vpop.f32.mrb[0].mxu0
    %v1519 = vadd.f32 %v1341, %v1518
    %v1520 = vpop.f32.mrb[0].mxu0
    %v1521 = vadd.f32 %v1343, %v1520
    %1522 = vmatprep.mubr.f32.mxu0 %v963
    %1523 = vmatmul.mubr.f32.gmra.mrb[0].mxu0 %v962
    %v1524 = vpop.f32.mrb[0].mxu0
    %v1525 = vadd.f32 %v1347, %v1524
    %v1526 = vpop.f32.mrb[0].mxu0
    %v1527 = vadd.f32 %v1349, %v1526
    %1528 = vdwg.mxu0
    %1529 = vmatprep.subr.mxu0 %v967
    %1530 = vmatpush1.msra.mxu0 %v966
    %1531 = vmatprep.subr.mxu0 %v971
    %1532 = vmatpush1.msra.mxu0 %v970
    %1533 = vmatprep.subr.mxu0 %v975
    %1534 = vmatpush1.msra.mxu0 %v974
    %1535 = vmatprep.subr.mxu0 %v979
    %1536 = vmatpush1.msra.mxu0 %v978
    %1537 = vmatprep.subr.mxu0 %v983
    %1538 = vmatpush1.msra.mxu0 %v982
    %1539 = vmatprep.subr.mxu0 %v987
    %1540 = vmatpush1.msra.mxu0 %v986
    %1541 = vmatprep.subr.mxu0 %v991
    %1542 = vmatpush1.msra.mxu0 %v990
    %1543 = vmatprep.subr.mxu0 %v995
    %1544 = vmatpush1.msra.mxu0 %v994
    %1545 = vmatprep.subr.mxu0 %v999
    %1546 = vmatpush1.msra.mxu0 %v998
    %1547 = vmatprep.subr.mxu0 %v1003
    %1548 = vmatpush1.msra.mxu0 %v1002
    %1549 = vmatprep.subr.mxu0 %v1007
    %1550 = vmatpush1.msra.mxu0 %v1006
    %1551 = vmatprep.subr.mxu0 %v1011
    %1552 = vmatpush1.msra.mxu0 %v1010
    %1553 = vmatprep.subr.mxu0 %v1015
    %1554 = vmatpush1.msra.mxu0 %v1014
    %1555 = vmatprep.subr.mxu0 %v1019
    %1556 = vmatpush1.msra.mxu0 %v1018
    %1557 = vmatprep.subr.mxu0 %v1023
    %1558 = vmatpush1.msra.mxu0 %v1022
    %1559 = vmatprep.subr.mxu0 %v1027
    %1560 = vmatpush1.msra.mxu0 %v1026
    %1561 = vmatprep.subr.mxu0 %v1031
    %1562 = vmatpush1.msra.mxu0 %v1030
    %1563 = vmatprep.subr.mxu0 %v1035
    %1564 = vmatpush1.msra.mxu0 %v1034
    %1565 = vmatprep.subr.mxu0 %v1039
    %1566 = vmatpush1.msra.mxu0 %v1038
    %1567 = vmatprep.subr.mxu0 %v1043
    %1568 = vmatpush1.msra.mxu0 %v1042
    %1569 = vmatprep.subr.mxu0 %v1047
    %1570 = vmatpush1.msra.mxu0 %v1046
    %1571 = vmatprep.subr.mxu0 %v1051
    %1572 = vmatpush1.msra.mxu0 %v1050
    %1573 = vmatprep.subr.mxu0 %v1055
    %1574 = vmatpush1.msra.mxu0 %v1054
    %1575 = vmatprep.subr.mxu0 %v1059
    %1576 = vmatpush1.msra.mxu0 %v1058
    %1577 = vmatprep.subr.mxu0 %v1063
    %1578 = vmatpush1.msra.mxu0 %v1062
    %1579 = vmatprep.subr.mxu0 %v1067
    %1580 = vmatpush1.msra.mxu0 %v1066
    %1581 = vmatprep.subr.mxu0 %v1071
    %1582 = vmatpush1.msra.mxu0 %v1070
    %1583 = vmatprep.subr.mxu0 %v1075
    %1584 = vmatpush1.msra.mxu0 %v1074
    %1585 = vmatprep.subr.mxu0 %v1079
    %1586 = vmatpush1.msra.mxu0 %v1078
    %1587 = vmatprep.subr.mxu0 %v1083
    %1588 = vmatpush1.msra.mxu0 %v1082
    %1589 = vmatprep.subr.mxu0 %v1087
    %1590 = vmatpush1.msra.mxu0 %v1086
    %1591 = vmatprep.subr.mxu0 %v1091
    %1592 = vmatpush1.msra.mxu0 %v1090
    %1593 = vmatprep.mubr.f32.mxu0 %v957
    %1594 = vmatmul.mubr.f32.gmra.mrb[0].mxu0 %v956
    %v1595 = vpop.f32.mrb[0].mxu0
    %v1596 = vadd.f32 %v1418, %v1595
    %v1597 = vpop.f32.mrb[0].mxu0
    %v1598 = vadd.f32 %v1420, %v1597
    %1599 = vmatprep.mubr.f32.mxu0 %v959
    %1600 = vmatmul.mubr.f32.gmra.mrb[0].mxu0 %v958
    %v1601 = vpop.f32.mrb[0].mxu0
    %v1602 = vadd.f32 %v1424, %v1601
    %v1603 = vpop.f32.mrb[0].mxu0
    %v1604 = vadd.f32 %v1426, %v1603
    %1605 = vmatprep.mubr.f32.mxu0 %v961
    %1606 = vmatmul.mubr.f32.gmra.mrb[0].mxu0 %v960
    %v1607 = vpop.f32.mrb[0].mxu0
    %v1608 = vadd.f32 %v1430, %v1607
    %v1609 = vpop.f32.mrb[0].mxu0
    %v1610 = vadd.f32 %v1432, %v1609
    %1611 = vmatprep.mubr.f32.mxu0 %v963
    %1612 = vmatmul.mubr.f32.gmra.mrb[0].mxu0 %v962
    %v1613 = vpop.f32.mrb[0].mxu0
    %v1614 = vadd.f32 %v1436, %v1613
    %v1615 = vpop.f32.mrb[0].mxu0
    %v1616 = vadd.f32 %v1438, %v1615
    %1617 = vdwg.mxu0
    %v1618 = vld [vmem:[#allocation3] sm:$0xf0]
    %v1619 = vld [vmem:[#allocation3 + $0x8] sm:$0xf0]
    %v1620 = vld [vmem:[#allocation3 + $0x40] sm:$0xf]
    %v1621 = vld [vmem:[#allocation3 + $0x48] sm:$0xf]
    %s1622 = scalar_lea.vmem [#allocation13], 2048
    %v1623 = vld [vmem:[%s1622] sm:$0xff]
    %v1624 = vld [vmem:[%s1622 + $0x8] sm:$0xff]
    %v1625 = vld [vmem:[%s1622 + $0x10] sm:$0xff]
    %v1626 = vld [vmem:[%s1622 + $0x18] sm:$0xff]
    %v1627 = vld [vmem:[%s1622 + $0x20] sm:$0xff]
    %v1628 = vld [vmem:[%s1622 + $0x28] sm:$0xff]
    %v1629 = vld [vmem:[%s1622 + $0x30] sm:$0xff]
    %v1630 = vld [vmem:[%s1622 + $0x38] sm:$0xff]
    %v1631 = vld [vmem:[%s1622 + $0x40] sm:$0xff]
    %v1632 = vld [vmem:[%s1622 + $0x48] sm:$0xff]
    %v1633 = vld [vmem:[%s1622 + $0x50] sm:$0xff]
    %v1634 = vld [vmem:[%s1622 + $0x58] sm:$0xff]
    %v1635 = vld [vmem:[%s1622 + $0x60] sm:$0xff]
    %v1636 = vld [vmem:[%s1622 + $0x68] sm:$0xff]
    %v1637 = vld [vmem:[%s1622 + $0x70] sm:$0xff]
    %v1638 = vld [vmem:[%s1622 + $0x78] sm:$0xff]
    %v1639 = vld [vmem:[%s1622 + $0x80] sm:$0xff]
    %v1640 = vld [vmem:[%s1622 + $0x88] sm:$0xff]
    %v1641 = vld [vmem:[%s1622 + $0x90] sm:$0xff]
    %v1642 = vld [vmem:[%s1622 + $0x98] sm:$0xff]
    %v1643 = vld [vmem:[%s1622 + $0xa0] sm:$0xff]
    %v1644 = vld [vmem:[%s1622 + $0xa8] sm:$0xff]
    %v1645 = vld [vmem:[%s1622 + $0xb0] sm:$0xff]
    %v1646 = vld [vmem:[%s1622 + $0xb8] sm:$0xff]
    %v1647 = vld [vmem:[%s1622 + $0xc0] sm:$0xff]
    %v1648 = vld [vmem:[%s1622 + $0xc8] sm:$0xff]
    %v1649 = vld [vmem:[%s1622 + $0xd0] sm:$0xff]
    %v1650 = vld [vmem:[%s1622 + $0xd8] sm:$0xff]
    %v1651 = vld [vmem:[%s1622 + $0xe0] sm:$0xff]
    %v1652 = vld [vmem:[%s1622 + $0xe8] sm:$0xff]
    %v1653 = vld [vmem:[%s1622 + $0xf0] sm:$0xff]
    %v1654 = vld [vmem:[%s1622 + $0xf8] sm:$0xff]
    %v1655 = vld [vmem:[%s1622 + $0x100] sm:$0xff]
    %v1656 = vld [vmem:[%s1622 + $0x108] sm:$0xff]
    %v1657 = vld [vmem:[%s1622 + $0x110] sm:$0xff]
    %v1658 = vld [vmem:[%s1622 + $0x118] sm:$0xff]
    %v1659 = vld [vmem:[%s1622 + $0x120] sm:$0xff]
    %v1660 = vld [vmem:[%s1622 + $0x128] sm:$0xff]
    %v1661 = vld [vmem:[%s1622 + $0x130] sm:$0xff]
    %v1662 = vld [vmem:[%s1622 + $0x138] sm:$0xff]
    %v1663 = vld [vmem:[%s1622 + $0x140] sm:$0xff]
    %v1664 = vld [vmem:[%s1622 + $0x148] sm:$0xff]
    %v1665 = vld [vmem:[%s1622 + $0x150] sm:$0xff]
    %v1666 = vld [vmem:[%s1622 + $0x158] sm:$0xff]
    %v1667 = vld [vmem:[%s1622 + $0x160] sm:$0xff]
    %v1668 = vld [vmem:[%s1622 + $0x168] sm:$0xff]
    %v1669 = vld [vmem:[%s1622 + $0x170] sm:$0xff]
    %v1670 = vld [vmem:[%s1622 + $0x178] sm:$0xff]
    %v1671 = vld [vmem:[%s1622 + $0x180] sm:$0xff]
    %v1672 = vld [vmem:[%s1622 + $0x188] sm:$0xff]
    %v1673 = vld [vmem:[%s1622 + $0x190] sm:$0xff]
    %v1674 = vld [vmem:[%s1622 + $0x198] sm:$0xff]
    %v1675 = vld [vmem:[%s1622 + $0x1a0] sm:$0xff]
    %v1676 = vld [vmem:[%s1622 + $0x1a8] sm:$0xff]
    %v1677 = vld [vmem:[%s1622 + $0x1b0] sm:$0xff]
    %v1678 = vld [vmem:[%s1622 + $0x1b8] sm:$0xff]
    %v1679 = vld [vmem:[%s1622 + $0x1c0] sm:$0xff]
    %v1680 = vld [vmem:[%s1622 + $0x1c8] sm:$0xff]
    %v1681 = vld [vmem:[%s1622 + $0x1d0] sm:$0xff]
    %v1682 = vld [vmem:[%s1622 + $0x1d8] sm:$0xff]
    %v1683 = vld [vmem:[%s1622 + $0x1e0] sm:$0xff]
    %v1684 = vld [vmem:[%s1622 + $0x1e8] sm:$0xff]
    %v1685 = vld [vmem:[%s1622 + $0x1f0] sm:$0xff]
    %v1686 = vld [vmem:[%s1622 + $0x1f8] sm:$0xff]
    %v1687 = vld [vmem:[%s1622 + $0x200] sm:$0xff]
    %v1688 = vld [vmem:[%s1622 + $0x208] sm:$0xff]
    %v1689 = vld [vmem:[%s1622 + $0x210] sm:$0xff]
    %v1690 = vld [vmem:[%s1622 + $0x218] sm:$0xff]
    %v1691 = vld [vmem:[%s1622 + $0x220] sm:$0xff]
    %v1692 = vld [vmem:[%s1622 + $0x228] sm:$0xff]
    %v1693 = vld [vmem:[%s1622 + $0x230] sm:$0xff]
    %v1694 = vld [vmem:[%s1622 + $0x238] sm:$0xff]
    %v1695 = vld [vmem:[%s1622 + $0x240] sm:$0xff]
    %v1696 = vld [vmem:[%s1622 + $0x248] sm:$0xff]
    %v1697 = vld [vmem:[%s1622 + $0x250] sm:$0xff]
    %v1698 = vld [vmem:[%s1622 + $0x258] sm:$0xff]
    %v1699 = vld [vmem:[%s1622 + $0x260] sm:$0xff]
    %v1700 = vld [vmem:[%s1622 + $0x268] sm:$0xff]
    %v1701 = vld [vmem:[%s1622 + $0x270] sm:$0xff]
    %v1702 = vld [vmem:[%s1622 + $0x278] sm:$0xff]
    %v1703 = vld [vmem:[%s1622 + $0x280] sm:$0xff]
    %v1704 = vld [vmem:[%s1622 + $0x288] sm:$0xff]
    %v1705 = vld [vmem:[%s1622 + $0x290] sm:$0xff]
    %v1706 = vld [vmem:[%s1622 + $0x298] sm:$0xff]
    %v1707 = vld [vmem:[%s1622 + $0x2a0] sm:$0xff]
    %v1708 = vld [vmem:[%s1622 + $0x2a8] sm:$0xff]
    %v1709 = vld [vmem:[%s1622 + $0x2b0] sm:$0xff]
    %v1710 = vld [vmem:[%s1622 + $0x2b8] sm:$0xff]
    %v1711 = vld [vmem:[%s1622 + $0x2c0] sm:$0xff]
    %v1712 = vld [vmem:[%s1622 + $0x2c8] sm:$0xff]
    %v1713 = vld [vmem:[%s1622 + $0x2d0] sm:$0xff]
    %v1714 = vld [vmem:[%s1622 + $0x2d8] sm:$0xff]
    %v1715 = vld [vmem:[%s1622 + $0x2e0] sm:$0xff]
    %v1716 = vld [vmem:[%s1622 + $0x2e8] sm:$0xff]
    %v1717 = vld [vmem:[%s1622 + $0x2f0] sm:$0xff]
    %v1718 = vld [vmem:[%s1622 + $0x2f8] sm:$0xff]
    %v1719 = vld [vmem:[%s1622 + $0x300] sm:$0xff]
    %v1720 = vld [vmem:[%s1622 + $0x308] sm:$0xff]
    %v1721 = vld [vmem:[%s1622 + $0x310] sm:$0xff]
    %v1722 = vld [vmem:[%s1622 + $0x318] sm:$0xff]
    %v1723 = vld [vmem:[%s1622 + $0x320] sm:$0xff]
    %v1724 = vld [vmem:[%s1622 + $0x328] sm:$0xff]
    %v1725 = vld [vmem:[%s1622 + $0x330] sm:$0xff]
    %v1726 = vld [vmem:[%s1622 + $0x338] sm:$0xff]
    %v1727 = vld [vmem:[%s1622 + $0x340] sm:$0xff]
    %v1728 = vld [vmem:[%s1622 + $0x348] sm:$0xff]
    %v1729 = vld [vmem:[%s1622 + $0x350] sm:$0xff]
    %v1730 = vld [vmem:[%s1622 + $0x358] sm:$0xff]
    %v1731 = vld [vmem:[%s1622 + $0x360] sm:$0xff]
    %v1732 = vld [vmem:[%s1622 + $0x368] sm:$0xff]
    %v1733 = vld [vmem:[%s1622 + $0x370] sm:$0xff]
    %v1734 = vld [vmem:[%s1622 + $0x378] sm:$0xff]
    %v1735 = vld [vmem:[%s1622 + $0x380] sm:$0xff]
    %v1736 = vld [vmem:[%s1622 + $0x388] sm:$0xff]
    %v1737 = vld [vmem:[%s1622 + $0x390] sm:$0xff]
    %v1738 = vld [vmem:[%s1622 + $0x398] sm:$0xff]
    %v1739 = vld [vmem:[%s1622 + $0x3a0] sm:$0xff]
    %v1740 = vld [vmem:[%s1622 + $0x3a8] sm:$0xff]
    %v1741 = vld [vmem:[%s1622 + $0x3b0] sm:$0xff]
    %v1742 = vld [vmem:[%s1622 + $0x3b8] sm:$0xff]
    %v1743 = vld [vmem:[%s1622 + $0x3c0] sm:$0xff]
    %v1744 = vld [vmem:[%s1622 + $0x3c8] sm:$0xff]
    %v1745 = vld [vmem:[%s1622 + $0x3d0] sm:$0xff]
    %v1746 = vld [vmem:[%s1622 + $0x3d8] sm:$0xff]
    %v1747 = vld [vmem:[%s1622 + $0x3e0] sm:$0xff]
    %v1748 = vld [vmem:[%s1622 + $0x3e8] sm:$0xff]
    %v1749 = vld [vmem:[%s1622 + $0x3f0] sm:$0xff]
    %v1750 = vld [vmem:[%s1622 + $0x3f8] sm:$0xff]
    %vm1755 = vcmask 1043456
    %v1756 = vrot.slane %v1618, 4
    %v1757 = vrot.slane %v958, 4
    %v1758 = vsel %vm1755, %v1756, %v1757
    %v1759 = vrot.slane %v1619, 4
    %v1760 = vrot.slane %v959, 4
    %v1761 = vsel %vm1755, %v1759, %v1760
    %v1762 = vrot.slane %v960, 4
    %v1763 = vsel %vm1755, %v1757, %v1762
    %v1764 = vrot.slane %v961, 4
    %v1765 = vsel %vm1755, %v1760, %v1764
    %v1766 = vrot.slane %v962, 4
    %v1767 = vsel %vm1755, %v1762, %v1766
    %v1768 = vrot.slane %v963, 4
    %v1769 = vsel %vm1755, %v1764, %v1768
    %v1770 = vrot.slane %v1620, 4
    %v1771 = vsel %vm1755, %v1766, %v1770
    %v1772 = vrot.slane %v1621, 4
    %v1773 = vsel %vm1755, %v1768, %v1772
    %1782 = vmatprep.subr.mxu0 %v1624
    %1783 = vmatpush1.msra.mxu0 %v1623
    %1784 = vmatprep.subr.mxu0 %v1628
    %1785 = vmatpush1.msra.mxu0 %v1627
    %1786 = vmatprep.subr.mxu0 %v1632
    %1787 = vmatpush1.msra.mxu0 %v1631
    %1788 = vmatprep.subr.mxu0 %v1636
    %1789 = vmatpush1.msra.mxu0 %v1635
    %1790 = vmatprep.subr.mxu0 %v1640
    %1791 = vmatpush1.msra.mxu0 %v1639
    %1792 = vmatprep.subr.mxu0 %v1644
    %1793 = vmatpush1.msra.mxu0 %v1643
    %1794 = vmatprep.subr.mxu0 %v1648
    %1795 = vmatpush1.msra.mxu0 %v1647
    %1796 = vmatprep.subr.mxu0 %v1652
    %1797 = vmatpush1.msra.mxu0 %v1651
    %1798 = vmatprep.subr.mxu0 %v1656
    %1799 = vmatpush1.msra.mxu0 %v1655
    %1800 = vmatprep.subr.mxu0 %v1660
    %1801 = vmatpush1.msra.mxu0 %v1659
    %1802 = vmatprep.subr.mxu0 %v1664
    %1803 = vmatpush1.msra.mxu0 %v1663
    %1804 = vmatprep.subr.mxu0 %v1668
    %1805 = vmatpush1.msra.mxu0 %v1667
    %1806 = vmatprep.subr.mxu0 %v1672
    %1807 = vmatpush1.msra.mxu0 %v1671
    %1808 = vmatprep.subr.mxu0 %v1676
    %1809 = vmatpush1.msra.mxu0 %v1675
    %1810 = vmatprep.subr.mxu0 %v1680
    %1811 = vmatpush1.msra.mxu0 %v1679
    %1812 = vmatprep.subr.mxu0 %v1684
    %1813 = vmatpush1.msra.mxu0 %v1683
    %1814 = vmatprep.subr.mxu0 %v1688
    %1815 = vmatpush1.msra.mxu0 %v1687
    %1816 = vmatprep.subr.mxu0 %v1692
    %1817 = vmatpush1.msra.mxu0 %v1691
    %1818 = vmatprep.subr.mxu0 %v1696
    %1819 = vmatpush1.msra.mxu0 %v1695
    %1820 = vmatprep.subr.mxu0 %v1700
    %1821 = vmatpush1.msra.mxu0 %v1699
    %1822 = vmatprep.subr.mxu0 %v1704
    %1823 = vmatpush1.msra.mxu0 %v1703
    %1824 = vmatprep.subr.mxu0 %v1708
    %1825 = vmatpush1.msra.mxu0 %v1707
    %1826 = vmatprep.subr.mxu0 %v1712
    %1827 = vmatpush1.msra.mxu0 %v1711
    %1828 = vmatprep.subr.mxu0 %v1716
    %1829 = vmatpush1.msra.mxu0 %v1715
    %1830 = vmatprep.subr.mxu0 %v1720
    %1831 = vmatpush1.msra.mxu0 %v1719
    %1832 = vmatprep.subr.mxu0 %v1724
    %1833 = vmatpush1.msra.mxu0 %v1723
    %1834 = vmatprep.subr.mxu0 %v1728
    %1835 = vmatpush1.msra.mxu0 %v1727
    %1836 = vmatprep.subr.mxu0 %v1732
    %1837 = vmatpush1.msra.mxu0 %v1731
    %1838 = vmatprep.subr.mxu0 %v1736
    %1839 = vmatpush1.msra.mxu0 %v1735
    %1840 = vmatprep.subr.mxu0 %v1740
    %1841 = vmatpush1.msra.mxu0 %v1739
    %1842 = vmatprep.subr.mxu0 %v1744
    %1843 = vmatpush1.msra.mxu0 %v1743
    %1844 = vmatprep.subr.mxu0 %v1748
    %1845 = vmatpush1.msra.mxu0 %v1747
    %1846 = vmatprep.mubr.f32.mxu0 %v1761
    %1847 = vmatmul.mubr.f32.gmra.mrb[0].mxu0 %v1758
    %v1848 = vpop.f32.mrb[0].mxu0
    %v1849 = vadd.f32 0.0, %v1848
    %v1850 = vpop.f32.mrb[0].mxu0
    %v1851 = vadd.f32 0.0, %v1850
    %1852 = vmatprep.mubr.f32.mxu0 %v1765
    %1853 = vmatmul.mubr.f32.gmra.mrb[0].mxu0 %v1763
    %v1854 = vpop.f32.mrb[0].mxu0
    %v1855 = vadd.f32 0.0, %v1854
    %v1856 = vpop.f32.mrb[0].mxu0
    %v1857 = vadd.f32 0.0, %v1856
    %1858 = vmatprep.mubr.f32.mxu0 %v1769
    %1859 = vmatmul.mubr.f32.gmra.mrb[0].mxu0 %v1767
    %v1860 = vpop.f32.mrb[0].mxu0
    %v1861 = vadd.f32 0.0, %v1860
    %v1862 = vpop.f32.mrb[0].mxu0
    %v1863 = vadd.f32 0.0, %v1862
    %1864 = vmatprep.mubr.f32.mxu0 %v1773
    %1865 = vmatmul.mubr.f32.gmra.mrb[0].mxu0 %v1771
    %v1866 = vpop.f32.mrb[0].mxu0
    %v1867 = vadd.f32 0.0, %v1866
    %v1868 = vpop.f32.mrb[0].mxu0
    %v1869 = vadd.f32 0.0, %v1868
    %1870 = vdwg.mxu0
    %1871 = vmatprep.subr.mxu0 %v1626
    %1872 = vmatpush1.msra.mxu0 %v1625
    %1873 = vmatprep.subr.mxu0 %v1630
    %1874 = vmatpush1.msra.mxu0 %v1629
    %1875 = vmatprep.subr.mxu0 %v1634
    %1876 = vmatpush1.msra.mxu0 %v1633
    %1877 = vmatprep.subr.mxu0 %v1638
    %1878 = vmatpush1.msra.mxu0 %v1637
    %1879 = vmatprep.subr.mxu0 %v1642
    %1880 = vmatpush1.msra.mxu0 %v1641
    %1881 = vmatprep.subr.mxu0 %v1646
    %1882 = vmatpush1.msra.mxu0 %v1645
    %1883 = vmatprep.subr.mxu0 %v1650
    %1884 = vmatpush1.msra.mxu0 %v1649
    %1885 = vmatprep.subr.mxu0 %v1654
    %1886 = vmatpush1.msra.mxu0 %v1653
    %1887 = vmatprep.subr.mxu0 %v1658
    %1888 = vmatpush1.msra.mxu0 %v1657
    %1889 = vmatprep.subr.mxu0 %v1662
    %1890 = vmatpush1.msra.mxu0 %v1661
    %1891 = vmatprep.subr.mxu0 %v1666
    %1892 = vmatpush1.msra.mxu0 %v1665
    %1893 = vmatprep.subr.mxu0 %v1670
    %1894 = vmatpush1.msra.mxu0 %v1669
    %1895 = vmatprep.subr.mxu0 %v1674
    %1896 = vmatpush1.msra.mxu0 %v1673
    %1897 = vmatprep.subr.mxu0 %v1678
    %1898 = vmatpush1.msra.mxu0 %v1677
    %1899 = vmatprep.subr.mxu0 %v1682
    %1900 = vmatpush1.msra.mxu0 %v1681
    %1901 = vmatprep.subr.mxu0 %v1686
    %1902 = vmatpush1.msra.mxu0 %v1685
    %1903 = vmatprep.subr.mxu0 %v1690
    %1904 = vmatpush1.msra.mxu0 %v1689
    %1905 = vmatprep.subr.mxu0 %v1694
    %1906 = vmatpush1.msra.mxu0 %v1693
    %1907 = vmatprep.subr.mxu0 %v1698
    %1908 = vmatpush1.msra.mxu0 %v1697
    %1909 = vmatprep.subr.mxu0 %v1702
    %1910 = vmatpush1.msra.mxu0 %v1701
    %1911 = vmatprep.subr.mxu0 %v1706
    %1912 = vmatpush1.msra.mxu0 %v1705
    %1913 = vmatprep.subr.mxu0 %v1710
    %1914 = vmatpush1.msra.mxu0 %v1709
    %1915 = vmatprep.subr.mxu0 %v1714
    %1916 = vmatpush1.msra.mxu0 %v1713
    %1917 = vmatprep.subr.mxu0 %v1718
    %1918 = vmatpush1.msra.mxu0 %v1717
    %1919 = vmatprep.subr.mxu0 %v1722
    %1920 = vmatpush1.msra.mxu0 %v1721
    %1921 = vmatprep.subr.mxu0 %v1726
    %1922 = vmatpush1.msra.mxu0 %v1725
    %1923 = vmatprep.subr.mxu0 %v1730
    %1924 = vmatpush1.msra.mxu0 %v1729
    %1925 = vmatprep.subr.mxu0 %v1734
    %1926 = vmatpush1.msra.mxu0 %v1733
    %1927 = vmatprep.subr.mxu0 %v1738
    %1928 = vmatpush1.msra.mxu0 %v1737
    %1929 = vmatprep.subr.mxu0 %v1742
    %1930 = vmatpush1.msra.mxu0 %v1741
    %1931 = vmatprep.subr.mxu0 %v1746
    %1932 = vmatpush1.msra.mxu0 %v1745
    %1933 = vmatprep.subr.mxu0 %v1750
    %1934 = vmatpush1.msra.mxu0 %v1749
    %1935 = vmatprep.mubr.f32.mxu0 %v1761
    %1936 = vmatmul.mubr.f32.gmra.mrb[0].mxu0 %v1758
    %v1937 = vpop.f32.mrb[0].mxu0
    %v1938 = vadd.f32 0.0, %v1937
    %v1939 = vpop.f32.mrb[0].mxu0
    %v1940 = vadd.f32 0.0, %v1939
    %1941 = vmatprep.mubr.f32.mxu0 %v1765
    %1942 = vmatmul.mubr.f32.gmra.mrb[0].mxu0 %v1763
    %v1943 = vpop.f32.mrb[0].mxu0
    %v1944 = vadd.f32 0.0, %v1943
    %v1945 = vpop.f32.mrb[0].mxu0
    %v1946 = vadd.f32 0.0, %v1945
    %1947 = vmatprep.mubr.f32.mxu0 %v1769
    %1948 = vmatmul.mubr.f32.gmra.mrb[0].mxu0 %v1767
    %v1949 = vpop.f32.mrb[0].mxu0
    %v1950 = vadd.f32 0.0, %v1949
    %v1951 = vpop.f32.mrb[0].mxu0
    %v1952 = vadd.f32 0.0, %v1951
    %1953 = vmatprep.mubr.f32.mxu0 %v1773
    %1954 = vmatmul.mubr.f32.gmra.mrb[0].mxu0 %v1771
    %v1955 = vpop.f32.mrb[0].mxu0
    %v1956 = vadd.f32 0.0, %v1955
    %v1957 = vpop.f32.mrb[0].mxu0
    %v1958 = vadd.f32 0.0, %v1957
    %1959 = vdwg.mxu0
    %v1960 = vadd.f32 %v1507, %v1849
    %v1961 = vadd.f32 %v1509, %v1851
    %v1962 = vadd.f32 %v1596, %v1938
    %v1963 = vadd.f32 %v1598, %v1940
    %v1964 = vadd.f32 %v1513, %v1855
    %v1965 = vadd.f32 %v1515, %v1857
    %v1966 = vadd.f32 %v1602, %v1944
    %v1967 = vadd.f32 %v1604, %v1946
    %v1968 = vadd.f32 %v1519, %v1861
    %v1969 = vadd.f32 %v1521, %v1863
    %v1970 = vadd.f32 %v1608, %v1950
    %v1971 = vadd.f32 %v1610, %v1952
    %v1972 = vadd.f32 %v1525, %v1867
    %v1973 = vadd.f32 %v1527, %v1869
    %v1974 = vadd.f32 %v1614, %v1956
    %v1975 = vadd.f32 %v1616, %v1958
    %v1976 = vld [vmem:[#allocation14] sm:$0xf]
    %v1978 = vlaneseq
    %v1979 = vshrl.u32 %v1978, 7
    %v1980 = vsub.s32 0, %v1979
    %v1981 = vrot.slane %v1976, %v1980
    %v1982 = vlaneseq
    %v1983 = vshrl.u32 %v1982, 7
    %v1984 = vsub.s32 1, %v1983
    %v1985 = vrot.slane %v1976, %v1984
    %v1986 = vlaneseq
    %v1987 = vshrl.u32 %v1986, 7
    %v1988 = vsub.s32 2, %v1987
    %v1989 = vrot.slane %v1976, %v1988
    %v1990 = vlaneseq
    %v1991 = vshrl.u32 %v1990, 7
    %v1992 = vsub.s32 3, %v1991
    %v1993 = vrot.slane %v1976, %v1992
    %v1998 = vadd.f32 %v1960, %v1981
    %v1999 = vadd.f32 %v1961, %v1985
    %v2000 = vadd.f32 %v1962, %v1989
    %v2001 = vadd.f32 %v1963, %v1993
    %v2002 = vadd.f32 %v1964, %v1981
    %v2003 = vadd.f32 %v1965, %v1985
    %v2004 = vadd.f32 %v1966, %v1989
    %v2005 = vadd.f32 %v1967, %v1993
    %v2006 = vadd.f32 %v1968, %v1981
    %v2007 = vadd.f32 %v1969, %v1985
    %v2008 = vadd.f32 %v1970, %v1989
    %v2009 = vadd.f32 %v1971, %v1993
    %v2010 = vadd.f32 %v1972, %v1981
    %v2011 = vadd.f32 %v1973, %v1985
    %v2012 = vadd.f32 %v1974, %v1989
    %v2013 = vadd.f32 %v1975, %v1993
    %v2014 = vmax.f32 %v1998, 0.0
    %v2015 = vmax.f32 %v1999, 0.0
    %v2016 = vmax.f32 %v2000, 0.0
    %v2017 = vmax.f32 %v2001, 0.0
    %v2018 = vmax.f32 %v2002, 0.0
    %v2019 = vmax.f32 %v2003, 0.0
    %v2020 = vmax.f32 %v2004, 0.0
    %v2021 = vmax.f32 %v2005, 0.0
    %v2022 = vmax.f32 %v2006, 0.0
    %v2023 = vmax.f32 %v2007, 0.0
    %v2024 = vmax.f32 %v2008, 0.0
    %v2025 = vmax.f32 %v2009, 0.0
    %v2026 = vmax.f32 %v2010, 0.0
    %v2027 = vmax.f32 %v2011, 0.0
    %v2028 = vmax.f32 %v2012, 0.0
    %v2029 = vmax.f32 %v2013, 0.0
    %2030 = vst [vmem:[#allocation4] sm:$0xff] %v2014
    %2031 = vst [vmem:[#allocation4 + $0x8] sm:$0xff] %v2015
    %2032 = vst [vmem:[#allocation4 + $0x10] sm:$0xff] %v2016
    %2033 = vst [vmem:[#allocation4 + $0x18] sm:$0xff] %v2017
    %2034 = vst [vmem:[#allocation4 + $0x20] sm:$0xff] %v2018
    %2035 = vst [vmem:[#allocation4 + $0x28] sm:$0xff] %v2019
    %2036 = vst [vmem:[#allocation4 + $0x30] sm:$0xff] %v2020
    %2037 = vst [vmem:[#allocation4 + $0x38] sm:$0xff] %v2021
    %2038 = vst [vmem:[#allocation4 + $0x40] sm:$0xff] %v2022
    %2039 = vst [vmem:[#allocation4 + $0x48] sm:$0xff] %v2023
    %2040 = vst [vmem:[#allocation4 + $0x50] sm:$0xff] %v2024
    %2041 = vst [vmem:[#allocation4 + $0x58] sm:$0xff] %v2025
    %2042 = vst [vmem:[#allocation4 + $0x60] sm:$0xff] %v2026
    %2043 = vst [vmem:[#allocation4 + $0x68] sm:$0xff] %v2027
    %2044 = vst [vmem:[#allocation4 + $0x70] sm:$0xff] %v2028
    %2045 = vst [vmem:[#allocation4 + $0x78] sm:$0xff] %v2029
    %2046 = vst [vmem:[#allocation4 + $0x80] sm:$0xf] 0.0
    %2047 = vst [vmem:[#allocation4 + $0x88] sm:$0xf] 0.0
    %2048 = vst [vmem:[#allocation4 + $0x90] sm:$0xf] 0.0
    %2049 = vst [vmem:[#allocation4 + $0x98] sm:$0xf] 0.0
    %v2050 = vld [vmem:[#allocation4] sm:$0x3]
    %v2051 = vld [vmem:[#allocation4 + $0x8] sm:$0x3]
    %v2052 = vld [vmem:[#allocation4 + $0x10] sm:$0x3]
    %v2053 = vld [vmem:[#allocation16] sm:$0xff]
    %v2054 = vld [vmem:[#allocation16 + $0x8] sm:$0xff]
    %v2055 = vld [vmem:[#allocation16 + $0x10] sm:$0xff]
    %v2056 = vld [vmem:[#allocation16 + $0x18] sm:$0xff]
    %v2057 = vld [vmem:[#allocation16 + $0x20] sm:$0xff]
    %v2058 = vld [vmem:[#allocation16 + $0x28] sm:$0xff]
    %v2059 = vld [vmem:[#allocation16 + $0x30] sm:$0xff]
    %v2060 = vld [vmem:[#allocation16 + $0x38] sm:$0xff]
    %v2061 = vld [vmem:[#allocation16 + $0x40] sm:$0xff]
    %v2062 = vld [vmem:[#allocation16 + $0x48] sm:$0xff]
    %v2063 = vld [vmem:[#allocation16 + $0x50] sm:$0xff]
    %v2064 = vld [vmem:[#allocation16 + $0x58] sm:$0xff]
    %v2065 = vld [vmem:[#allocation16 + $0x60] sm:$0xff]
    %v2066 = vld [vmem:[#allocation16 + $0x68] sm:$0xff]
    %v2067 = vld [vmem:[#allocation16 + $0x70] sm:$0xff]
    %v2068 = vld [vmem:[#allocation16 + $0x78] sm:$0xff]
    %v2069 = vld [vmem:[#allocation16 + $0x80] sm:$0xff]
    %v2070 = vld [vmem:[#allocation16 + $0x88] sm:$0xff]
    %v2071 = vld [vmem:[#allocation16 + $0x90] sm:$0xff]
    %v2072 = vld [vmem:[#allocation16 + $0x98] sm:$0xff]
    %v2073 = vld [vmem:[#allocation16 + $0xa0] sm:$0xff]
    %v2074 = vld [vmem:[#allocation16 + $0xa8] sm:$0xff]
    %v2075 = vld [vmem:[#allocation16 + $0xb0] sm:$0xff]
    %v2076 = vld [vmem:[#allocation16 + $0xb8] sm:$0xff]
    %v2077 = vld [vmem:[#allocation16 + $0xc0] sm:$0xff]
    %v2078 = vld [vmem:[#allocation16 + $0xc8] sm:$0xff]
    %v2079 = vld [vmem:[#allocation16 + $0xd0] sm:$0xff]
    %v2080 = vld [vmem:[#allocation16 + $0xd8] sm:$0xff]
    %v2081 = vld [vmem:[#allocation16 + $0xe0] sm:$0xff]
    %v2082 = vld [vmem:[#allocation16 + $0xe8] sm:$0xff]
    %v2083 = vld [vmem:[#allocation16 + $0xf0] sm:$0xff]
    %v2084 = vld [vmem:[#allocation16 + $0xf8] sm:$0xff]
    %v2085 = vld [vmem:[#allocation16 + $0x100] sm:$0xff]
    %v2086 = vld [vmem:[#allocation16 + $0x108] sm:$0xff]
    %v2087 = vld [vmem:[#allocation16 + $0x110] sm:$0xff]
    %v2088 = vld [vmem:[#allocation16 + $0x118] sm:$0xff]
    %v2089 = vld [vmem:[#allocation16 + $0x120] sm:$0xff]
    %v2090 = vld [vmem:[#allocation16 + $0x128] sm:$0xff]
    %v2091 = vld [vmem:[#allocation16 + $0x130] sm:$0xff]
    %v2092 = vld [vmem:[#allocation16 + $0x138] sm:$0xff]
    %v2093 = vld [vmem:[#allocation16 + $0x140] sm:$0xff]
    %v2094 = vld [vmem:[#allocation16 + $0x148] sm:$0xff]
    %v2095 = vld [vmem:[#allocation16 + $0x150] sm:$0xff]
    %v2096 = vld [vmem:[#allocation16 + $0x158] sm:$0xff]
    %v2097 = vld [vmem:[#allocation16 + $0x160] sm:$0xff]
    %v2098 = vld [vmem:[#allocation16 + $0x168] sm:$0xff]
    %v2099 = vld [vmem:[#allocation16 + $0x170] sm:$0xff]
    %v2100 = vld [vmem:[#allocation16 + $0x178] sm:$0xff]
    %v2101 = vld [vmem:[#allocation16 + $0x180] sm:$0xff]
    %v2102 = vld [vmem:[#allocation16 + $0x188] sm:$0xff]
    %v2103 = vld [vmem:[#allocation16 + $0x190] sm:$0xff]
    %v2104 = vld [vmem:[#allocation16 + $0x198] sm:$0xff]
    %v2105 = vld [vmem:[#allocation16 + $0x1a0] sm:$0xff]
    %v2106 = vld [vmem:[#allocation16 + $0x1a8] sm:$0xff]
    %v2107 = vld [vmem:[#allocation16 + $0x1b0] sm:$0xff]
    %v2108 = vld [vmem:[#allocation16 + $0x1b8] sm:$0xff]
    %v2109 = vld [vmem:[#allocation16 + $0x1c0] sm:$0xff]
    %v2110 = vld [vmem:[#allocation16 + $0x1c8] sm:$0xff]
    %v2111 = vld [vmem:[#allocation16 + $0x1d0] sm:$0xff]
    %v2112 = vld [vmem:[#allocation16 + $0x1d8] sm:$0xff]
    %v2113 = vld [vmem:[#allocation16 + $0x1e0] sm:$0xff]
    %v2114 = vld [vmem:[#allocation16 + $0x1e8] sm:$0xff]
    %v2115 = vld [vmem:[#allocation16 + $0x1f0] sm:$0xff]
    %v2116 = vld [vmem:[#allocation16 + $0x1f8] sm:$0xff]
    %v2117 = vld [vmem:[#allocation16 + $0x200] sm:$0xff]
    %v2118 = vld [vmem:[#allocation16 + $0x208] sm:$0xff]
    %v2119 = vld [vmem:[#allocation16 + $0x210] sm:$0xff]
    %v2120 = vld [vmem:[#allocation16 + $0x218] sm:$0xff]
    %v2121 = vld [vmem:[#allocation16 + $0x220] sm:$0xff]
    %v2122 = vld [vmem:[#allocation16 + $0x228] sm:$0xff]
    %v2123 = vld [vmem:[#allocation16 + $0x230] sm:$0xff]
    %v2124 = vld [vmem:[#allocation16 + $0x238] sm:$0xff]
    %v2125 = vld [vmem:[#allocation16 + $0x240] sm:$0xff]
    %v2126 = vld [vmem:[#allocation16 + $0x248] sm:$0xff]
    %v2127 = vld [vmem:[#allocation16 + $0x250] sm:$0xff]
    %v2128 = vld [vmem:[#allocation16 + $0x258] sm:$0xff]
    %v2129 = vld [vmem:[#allocation16 + $0x260] sm:$0xff]
    %v2130 = vld [vmem:[#allocation16 + $0x268] sm:$0xff]
    %v2131 = vld [vmem:[#allocation16 + $0x270] sm:$0xff]
    %v2132 = vld [vmem:[#allocation16 + $0x278] sm:$0xff]
    %v2133 = vld [vmem:[#allocation4] sm:$0xc]
    %v2134 = vld [vmem:[#allocation4 + $0x8] sm:$0xc]
    %v2135 = vld [vmem:[#allocation4 + $0x10] sm:$0xc]
    %s2136 = scalar_lea.vmem [#allocation16], 640
    %v2137 = vld [vmem:[%s2136] sm:$0xff]
    %v2138 = vld [vmem:[%s2136 + $0x8] sm:$0xff]
    %v2139 = vld [vmem:[%s2136 + $0x10] sm:$0xff]
    %v2140 = vld [vmem:[%s2136 + $0x18] sm:$0xff]
    %v2141 = vld [vmem:[%s2136 + $0x20] sm:$0xff]
    %v2142 = vld [vmem:[%s2136 + $0x28] sm:$0xff]
    %v2143 = vld [vmem:[%s2136 + $0x30] sm:$0xff]
    %v2144 = vld [vmem:[%s2136 + $0x38] sm:$0xff]
    %v2145 = vld [vmem:[%s2136 + $0x40] sm:$0xff]
    %v2146 = vld [vmem:[%s2136 + $0x48] sm:$0xff]
    %v2147 = vld [vmem:[%s2136 + $0x50] sm:$0xff]
    %v2148 = vld [vmem:[%s2136 + $0x58] sm:$0xff]
    %v2149 = vld [vmem:[%s2136 + $0x60] sm:$0xff]
    %v2150 = vld [vmem:[%s2136 + $0x68] sm:$0xff]
    %v2151 = vld [vmem:[%s2136 + $0x70] sm:$0xff]
    %v2152 = vld [vmem:[%s2136 + $0x78] sm:$0xff]
    %v2153 = vld [vmem:[%s2136 + $0x80] sm:$0xff]
    %v2154 = vld [vmem:[%s2136 + $0x88] sm:$0xff]
    %v2155 = vld [vmem:[%s2136 + $0x90] sm:$0xff]
    %v2156 = vld [vmem:[%s2136 + $0x98] sm:$0xff]
    %v2157 = vld [vmem:[%s2136 + $0xa0] sm:$0xff]
    %v2158 = vld [vmem:[%s2136 + $0xa8] sm:$0xff]
    %v2159 = vld [vmem:[%s2136 + $0xb0] sm:$0xff]
    %v2160 = vld [vmem:[%s2136 + $0xb8] sm:$0xff]
    %v2161 = vld [vmem:[%s2136 + $0xc0] sm:$0xff]
    %v2162 = vld [vmem:[%s2136 + $0xc8] sm:$0xff]
    %v2163 = vld [vmem:[%s2136 + $0xd0] sm:$0xff]
    %v2164 = vld [vmem:[%s2136 + $0xd8] sm:$0xff]
    %v2165 = vld [vmem:[%s2136 + $0xe0] sm:$0xff]
    %v2166 = vld [vmem:[%s2136 + $0xe8] sm:$0xff]
    %v2167 = vld [vmem:[%s2136 + $0xf0] sm:$0xff]
    %v2168 = vld [vmem:[%s2136 + $0xf8] sm:$0xff]
    %v2169 = vld [vmem:[%s2136 + $0x100] sm:$0xff]
    %v2170 = vld [vmem:[%s2136 + $0x108] sm:$0xff]
    %v2171 = vld [vmem:[%s2136 + $0x110] sm:$0xff]
    %v2172 = vld [vmem:[%s2136 + $0x118] sm:$0xff]
    %v2173 = vld [vmem:[%s2136 + $0x120] sm:$0xff]
    %v2174 = vld [vmem:[%s2136 + $0x128] sm:$0xff]
    %v2175 = vld [vmem:[%s2136 + $0x130] sm:$0xff]
    %v2176 = vld [vmem:[%s2136 + $0x138] sm:$0xff]
    %v2177 = vld [vmem:[%s2136 + $0x140] sm:$0xff]
    %v2178 = vld [vmem:[%s2136 + $0x148] sm:$0xff]
    %v2179 = vld [vmem:[%s2136 + $0x150] sm:$0xff]
    %v2180 = vld [vmem:[%s2136 + $0x158] sm:$0xff]
    %v2181 = vld [vmem:[%s2136 + $0x160] sm:$0xff]
    %v2182 = vld [vmem:[%s2136 + $0x168] sm:$0xff]
    %v2183 = vld [vmem:[%s2136 + $0x170] sm:$0xff]
    %v2184 = vld [vmem:[%s2136 + $0x178] sm:$0xff]
    %v2185 = vld [vmem:[%s2136 + $0x180] sm:$0xff]
    %v2186 = vld [vmem:[%s2136 + $0x188] sm:$0xff]
    %v2187 = vld [vmem:[%s2136 + $0x190] sm:$0xff]
    %v2188 = vld [vmem:[%s2136 + $0x198] sm:$0xff]
    %v2189 = vld [vmem:[%s2136 + $0x1a0] sm:$0xff]
    %v2190 = vld [vmem:[%s2136 + $0x1a8] sm:$0xff]
    %v2191 = vld [vmem:[%s2136 + $0x1b0] sm:$0xff]
    %v2192 = vld [vmem:[%s2136 + $0x1b8] sm:$0xff]
    %v2193 = vld [vmem:[%s2136 + $0x1c0] sm:$0xff]
    %v2194 = vld [vmem:[%s2136 + $0x1c8] sm:$0xff]
    %v2195 = vld [vmem:[%s2136 + $0x1d0] sm:$0xff]
    %v2196 = vld [vmem:[%s2136 + $0x1d8] sm:$0xff]
    %v2197 = vld [vmem:[%s2136 + $0x1e0] sm:$0xff]
    %v2198 = vld [vmem:[%s2136 + $0x1e8] sm:$0xff]
    %v2199 = vld [vmem:[%s2136 + $0x1f0] sm:$0xff]
    %v2200 = vld [vmem:[%s2136 + $0x1f8] sm:$0xff]
    %v2201 = vld [vmem:[%s2136 + $0x200] sm:$0xff]
    %v2202 = vld [vmem:[%s2136 + $0x208] sm:$0xff]
    %v2203 = vld [vmem:[%s2136 + $0x210] sm:$0xff]
    %v2204 = vld [vmem:[%s2136 + $0x218] sm:$0xff]
    %v2205 = vld [vmem:[%s2136 + $0x220] sm:$0xff]
    %v2206 = vld [vmem:[%s2136 + $0x228] sm:$0xff]
    %v2207 = vld [vmem:[%s2136 + $0x230] sm:$0xff]
    %v2208 = vld [vmem:[%s2136 + $0x238] sm:$0xff]
    %v2209 = vld [vmem:[%s2136 + $0x240] sm:$0xff]
    %v2210 = vld [vmem:[%s2136 + $0x248] sm:$0xff]
    %v2211 = vld [vmem:[%s2136 + $0x250] sm:$0xff]
    %v2212 = vld [vmem:[%s2136 + $0x258] sm:$0xff]
    %v2213 = vld [vmem:[%s2136 + $0x260] sm:$0xff]
    %v2214 = vld [vmem:[%s2136 + $0x268] sm:$0xff]
    %v2215 = vld [vmem:[%s2136 + $0x270] sm:$0xff]
    %v2216 = vld [vmem:[%s2136 + $0x278] sm:$0xff]
    %v2220 = vrot.slane %v2133, 2
    %v2221 = vrot.slane %v2134, 2
    %v2222 = vrot.slane %v2135, 2
    %v2225 = vsel %vm190, %v2222, 0
    %2227 = vmatprep.subr.mxu0 %v2138
    %2228 = vmatpush1.msra.mxu0 %v2137
    %2229 = vmatprep.subr.mxu0 %v2140
    %2230 = vmatpush1.msra.mxu0 %v2139
    %2231 = vmatprep.subr.mxu0 %v2142
    %2232 = vmatpush1.msra.mxu0 %v2141
    %2233 = vmatprep.subr.mxu0 %v2144
    %2234 = vmatpush1.msra.mxu0 %v2143
    %2235 = vmatprep.subr.mxu0 %v2146
    %2236 = vmatpush1.msra.mxu0 %v2145
    %2237 = vmatprep.subr.mxu0 %v2148
    %2238 = vmatpush1.msra.mxu0 %v2147
    %2239 = vmatprep.subr.mxu0 %v2150
    %2240 = vmatpush1.msra.mxu0 %v2149
    %2241 = vmatprep.subr.mxu0 %v2152
    %2242 = vmatpush1.msra.mxu0 %v2151
    %2243 = vmatprep.subr.mxu0 %v2154
    %2244 = vmatpush1.msra.mxu0 %v2153
    %2245 = vmatprep.subr.mxu0 %v2156
    %2246 = vmatpush1.msra.mxu0 %v2155
    %2247 = vmatprep.subr.mxu0 %v2158
    %2248 = vmatpush1.msra.mxu0 %v2157
    %2249 = vmatprep.subr.mxu0 %v2160
    %2250 = vmatpush1.msra.mxu0 %v2159
    %2251 = vmatprep.subr.mxu0 %v2162
    %2252 = vmatpush1.msra.mxu0 %v2161
    %2253 = vmatprep.subr.mxu0 %v2164
    %2254 = vmatpush1.msra.mxu0 %v2163
    %2255 = vmatprep.subr.mxu0 %v2166
    %2256 = vmatpush1.msra.mxu0 %v2165
    %2257 = vmatprep.subr.mxu0 %v2168
    %2258 = vmatpush1.msra.mxu0 %v2167
    %2259 = vmatprep.subr.mxu0 %v2170
    %2260 = vmatpush1.msra.mxu0 %v2169
    %2261 = vmatprep.subr.mxu0 %v2172
    %2262 = vmatpush1.msra.mxu0 %v2171
    %2263 = vmatprep.subr.mxu0 %v2174
    %2264 = vmatpush1.msra.mxu0 %v2173
    %2265 = vmatprep.subr.mxu0 %v2176
    %2266 = vmatpush1.msra.mxu0 %v2175
    %2267 = vmatprep.subr.mxu0 %v2178
    %2268 = vmatpush1.msra.mxu0 %v2177
    %2269 = vmatprep.subr.mxu0 %v2180
    %2270 = vmatpush1.msra.mxu0 %v2179
    %2271 = vmatprep.subr.mxu0 %v2182
    %2272 = vmatpush1.msra.mxu0 %v2181
    %2273 = vmatprep.subr.mxu0 %v2184
    %2274 = vmatpush1.msra.mxu0 %v2183
    %2275 = vmatprep.subr.mxu0 %v2186
    %2276 = vmatpush1.msra.mxu0 %v2185
    %2277 = vmatprep.subr.mxu0 %v2188
    %2278 = vmatpush1.msra.mxu0 %v2187
    %2279 = vmatprep.subr.mxu0 %v2190
    %2280 = vmatpush1.msra.mxu0 %v2189
    %2281 = vmatprep.subr.mxu0 %v2192
    %2282 = vmatpush1.msra.mxu0 %v2191
    %2283 = vmatprep.subr.mxu0 %v2194
    %2284 = vmatpush1.msra.mxu0 %v2193
    %2285 = vmatprep.subr.mxu0 %v2196
    %2286 = vmatpush1.msra.mxu0 %v2195
    %2287 = vmatprep.subr.mxu0 %v2198
    %2288 = vmatpush1.msra.mxu0 %v2197
    %2289 = vmatprep.subr.mxu0 %v2200
    %2290 = vmatpush1.msra.mxu0 %v2199
    %2291 = vmatprep.mubr.f32.mxu0 %v2221
    %2292 = vmatmul.mubr.f32.gmra.mrb[0].mxu0 %v2220
    %v2293 = vpop.f32.mrb[0].mxu0
    %v2294 = vadd.f32 0.0, %v2293
    %v2295 = vpop.f32.mrb[0].mxu0
    %v2296 = vadd.f32 0.0, %v2295
    %2297 = vdwg.mxu0
    %2298 = vmatprep.subr.mxu0 %v2202
    %2299 = vmatpush1.msra.mxu0 %v2201
    %2300 = vmatprep.subr.mxu0 %v2204
    %2301 = vmatpush1.msra.mxu0 %v2203
    %2302 = vmatprep.subr.mxu0 %v2206
    %2303 = vmatpush1.msra.mxu0 %v2205
    %2304 = vmatprep.subr.mxu0 %v2208
    %2305 = vmatpush1.msra.mxu0 %v2207
    %2306 = vmatprep.subr.mxu0 %v2210
    %2307 = vmatpush1.msra.mxu0 %v2209
    %2308 = vmatprep.subr.mxu0 %v2212
    %2309 = vmatpush1.msra.mxu0 %v2211
    %2310 = vmatprep.subr.mxu0 %v2214
    %2311 = vmatpush1.msra.mxu0 %v2213
    %2312 = vmatprep.subr.mxu0 %v2216
    %2313 = vmatpush1.msra.mxu0 %v2215
    %2314 = vmatprep.subr.mxu0 0.0
    %2315 = vmatpush1.msra.mxu0 0.0
    %2316 = vmatprep.subr.mxu0 0.0
    %2317 = vmatpush1.msra.mxu0 0.0
    %2318 = vmatprep.subr.mxu0 0.0
    %2319 = vmatpush1.msra.mxu0 0.0
    %2320 = vmatprep.subr.mxu0 0.0
    %2321 = vmatpush1.msra.mxu0 0.0
    %2322 = vmatprep.subr.mxu0 0.0
    %2323 = vmatpush1.msra.mxu0 0.0
    %2324 = vmatprep.subr.mxu0 0.0
    %2325 = vmatpush1.msra.mxu0 0.0
    %2326 = vmatprep.subr.mxu0 0.0
    %2327 = vmatpush1.msra.mxu0 0.0
    %2328 = vmatprep.subr.mxu0 0.0
    %2329 = vmatpush1.msra.mxu0 0.0
    %2330 = vmatprep.subr.mxu0 0.0
    %2331 = vmatpush1.msra.mxu0 0.0
    %2332 = vmatprep.subr.mxu0 0.0
    %2333 = vmatpush1.msra.mxu0 0.0
    %2334 = vmatprep.subr.mxu0 0.0
    %2335 = vmatpush1.msra.mxu0 0.0
    %2336 = vmatprep.subr.mxu0 0.0
    %2337 = vmatpush1.msra.mxu0 0.0
    %2338 = vmatprep.subr.mxu0 0.0
    %2339 = vmatpush1.msra.mxu0 0.0
    %2340 = vmatprep.subr.mxu0 0.0
    %2341 = vmatpush1.msra.mxu0 0.0
    %2342 = vmatprep.subr.mxu0 0.0
    %2343 = vmatpush1.msra.mxu0 0.0
    %2344 = vmatprep.subr.mxu0 0.0
    %2345 = vmatpush1.msra.mxu0 0.0
    %2346 = vmatprep.subr.mxu0 0.0
    %2347 = vmatpush1.msra.mxu0 0.0
    %2348 = vmatprep.subr.mxu0 0.0
    %2349 = vmatpush1.msra.mxu0 0.0
    %2350 = vmatprep.subr.mxu0 0.0
    %2351 = vmatpush1.msra.mxu0 0.0
    %2352 = vmatprep.subr.mxu0 0.0
    %2353 = vmatpush1.msra.mxu0 0.0
    %2354 = vmatprep.subr.mxu0 0.0
    %2355 = vmatpush1.msra.mxu0 0.0
    %2356 = vmatprep.subr.mxu0 0.0
    %2357 = vmatpush1.msra.mxu0 0.0
    %2358 = vmatprep.subr.mxu0 0.0
    %2359 = vmatpush1.msra.mxu0 0.0
    %2360 = vmatprep.subr.mxu0 0.0
    %2361 = vmatpush1.msra.mxu0 0.0
    %2362 = vmatprep.mubr.f32.mxu0 0.0
    %2363 = vmatmul.mubr.f32.gmra.mrb[0].mxu0 %v2225
    %v2364 = vpop.f32.mrb[0].mxu0
    %v2365 = vadd.f32 %v2294, %v2364
    %v2366 = vpop.f32.mrb[0].mxu0
    %v2367 = vadd.f32 %v2296, %v2366
    %2368 = vdwg.mxu0
    %v2370 = vsel %vm190, %v2052, 0
    %2372 = vmatprep.subr.mxu0 %v2054
    %2373 = vmatpush1.msra.mxu0 %v2053
    %2374 = vmatprep.subr.mxu0 %v2056
    %2375 = vmatpush1.msra.mxu0 %v2055
    %2376 = vmatprep.subr.mxu0 %v2058
    %2377 = vmatpush1.msra.mxu0 %v2057
    %2378 = vmatprep.subr.mxu0 %v2060
    %2379 = vmatpush1.msra.mxu0 %v2059
    %2380 = vmatprep.subr.mxu0 %v2062
    %2381 = vmatpush1.msra.mxu0 %v2061
    %2382 = vmatprep.subr.mxu0 %v2064
    %2383 = vmatpush1.msra.mxu0 %v2063
    %2384 = vmatprep.subr.mxu0 %v2066
    %2385 = vmatpush1.msra.mxu0 %v2065
    %2386 = vmatprep.subr.mxu0 %v2068
    %2387 = vmatpush1.msra.mxu0 %v2067
    %2388 = vmatprep.subr.mxu0 %v2070
    %2389 = vmatpush1.msra.mxu0 %v2069
    %2390 = vmatprep.subr.mxu0 %v2072
    %2391 = vmatpush1.msra.mxu0 %v2071
    %2392 = vmatprep.subr.mxu0 %v2074
    %2393 = vmatpush1.msra.mxu0 %v2073
    %2394 = vmatprep.subr.mxu0 %v2076
    %2395 = vmatpush1.msra.mxu0 %v2075
    %2396 = vmatprep.subr.mxu0 %v2078
    %2397 = vmatpush1.msra.mxu0 %v2077
    %2398 = vmatprep.subr.mxu0 %v2080
    %2399 = vmatpush1.msra.mxu0 %v2079
    %2400 = vmatprep.subr.mxu0 %v2082
    %2401 = vmatpush1.msra.mxu0 %v2081
    %2402 = vmatprep.subr.mxu0 %v2084
    %2403 = vmatpush1.msra.mxu0 %v2083
    %2404 = vmatprep.subr.mxu0 %v2086
    %2405 = vmatpush1.msra.mxu0 %v2085
    %2406 = vmatprep.subr.mxu0 %v2088
    %2407 = vmatpush1.msra.mxu0 %v2087
    %2408 = vmatprep.subr.mxu0 %v2090
    %2409 = vmatpush1.msra.mxu0 %v2089
    %2410 = vmatprep.subr.mxu0 %v2092
    %2411 = vmatpush1.msra.mxu0 %v2091
    %2412 = vmatprep.subr.mxu0 %v2094
    %2413 = vmatpush1.msra.mxu0 %v2093
    %2414 = vmatprep.subr.mxu0 %v2096
    %2415 = vmatpush1.msra.mxu0 %v2095
    %2416 = vmatprep.subr.mxu0 %v2098
    %2417 = vmatpush1.msra.mxu0 %v2097
    %2418 = vmatprep.subr.mxu0 %v2100
    %2419 = vmatpush1.msra.mxu0 %v2099
    %2420 = vmatprep.subr.mxu0 %v2102
    %2421 = vmatpush1.msra.mxu0 %v2101
    %2422 = vmatprep.subr.mxu0 %v2104
    %2423 = vmatpush1.msra.mxu0 %v2103
    %2424 = vmatprep.subr.mxu0 %v2106
    %2425 = vmatpush1.msra.mxu0 %v2105
    %2426 = vmatprep.subr.mxu0 %v2108
    %2427 = vmatpush1.msra.mxu0 %v2107
    %2428 = vmatprep.subr.mxu0 %v2110
    %2429 = vmatpush1.msra.mxu0 %v2109
    %2430 = vmatprep.subr.mxu0 %v2112
    %2431 = vmatpush1.msra.mxu0 %v2111
    %2432 = vmatprep.subr.mxu0 %v2114
    %2433 = vmatpush1.msra.mxu0 %v2113
    %2434 = vmatprep.subr.mxu0 %v2116
    %2435 = vmatpush1.msra.mxu0 %v2115
    %2436 = vmatprep.mubr.f32.mxu0 %v2051
    %2437 = vmatmul.mubr.f32.gmra.mrb[0].mxu0 %v2050
    %v2438 = vpop.f32.mrb[0].mxu0
    %v2439 = vadd.f32 %v2365, %v2438
    %v2440 = vpop.f32.mrb[0].mxu0
    %v2441 = vadd.f32 %v2367, %v2440
    %2442 = vdwg.mxu0
    %2443 = vmatprep.subr.mxu0 %v2118
    %2444 = vmatpush1.msra.mxu0 %v2117
    %2445 = vmatprep.subr.mxu0 %v2120
    %2446 = vmatpush1.msra.mxu0 %v2119
    %2447 = vmatprep.subr.mxu0 %v2122
    %2448 = vmatpush1.msra.mxu0 %v2121
    %2449 = vmatprep.subr.mxu0 %v2124
    %2450 = vmatpush1.msra.mxu0 %v2123
    %2451 = vmatprep.subr.mxu0 %v2126
    %2452 = vmatpush1.msra.mxu0 %v2125
    %2453 = vmatprep.subr.mxu0 %v2128
    %2454 = vmatpush1.msra.mxu0 %v2127
    %2455 = vmatprep.subr.mxu0 %v2130
    %2456 = vmatpush1.msra.mxu0 %v2129
    %2457 = vmatprep.subr.mxu0 %v2132
    %2458 = vmatpush1.msra.mxu0 %v2131
    %2459 = vmatprep.subr.mxu0 0.0
    %2460 = vmatpush1.msra.mxu0 0.0
    %2461 = vmatprep.subr.mxu0 0.0
    %2462 = vmatpush1.msra.mxu0 0.0
    %2463 = vmatprep.subr.mxu0 0.0
    %2464 = vmatpush1.msra.mxu0 0.0
    %2465 = vmatprep.subr.mxu0 0.0
    %2466 = vmatpush1.msra.mxu0 0.0
    %2467 = vmatprep.subr.mxu0 0.0
    %2468 = vmatpush1.msra.mxu0 0.0
    %2469 = vmatprep.subr.mxu0 0.0
    %2470 = vmatpush1.msra.mxu0 0.0
    %2471 = vmatprep.subr.mxu0 0.0
    %2472 = vmatpush1.msra.mxu0 0.0
    %2473 = vmatprep.subr.mxu0 0.0
    %2474 = vmatpush1.msra.mxu0 0.0
    %2475 = vmatprep.subr.mxu0 0.0
    %2476 = vmatpush1.msra.mxu0 0.0
    %2477 = vmatprep.subr.mxu0 0.0
    %2478 = vmatpush1.msra.mxu0 0.0
    %2479 = vmatprep.subr.mxu0 0.0
    %2480 = vmatpush1.msra.mxu0 0.0
    %2481 = vmatprep.subr.mxu0 0.0
    %2482 = vmatpush1.msra.mxu0 0.0
    %2483 = vmatprep.subr.mxu0 0.0
    %2484 = vmatpush1.msra.mxu0 0.0
    %2485 = vmatprep.subr.mxu0 0.0
    %2486 = vmatpush1.msra.mxu0 0.0
    %2487 = vmatprep.subr.mxu0 0.0
    %2488 = vmatpush1.msra.mxu0 0.0
    %2489 = vmatprep.subr.mxu0 0.0
    %2490 = vmatpush1.msra.mxu0 0.0
    %2491 = vmatprep.subr.mxu0 0.0
    %2492 = vmatpush1.msra.mxu0 0.0
    %2493 = vmatprep.subr.mxu0 0.0
    %2494 = vmatpush1.msra.mxu0 0.0
    %2495 = vmatprep.subr.mxu0 0.0
    %2496 = vmatpush1.msra.mxu0 0.0
    %2497 = vmatprep.subr.mxu0 0.0
    %2498 = vmatpush1.msra.mxu0 0.0
    %2499 = vmatprep.subr.mxu0 0.0
    %2500 = vmatpush1.msra.mxu0 0.0
    %2501 = vmatprep.subr.mxu0 0.0
    %2502 = vmatpush1.msra.mxu0 0.0
    %2503 = vmatprep.subr.mxu0 0.0
    %2504 = vmatpush1.msra.mxu0 0.0
    %2505 = vmatprep.subr.mxu0 0.0
    %2506 = vmatpush1.msra.mxu0 0.0
    %2507 = vmatprep.mubr.f32.mxu0 0.0
    %2508 = vmatmul.mubr.f32.gmra.mrb[0].mxu0 %v2370
    %v2509 = vpop.f32.mrb[0].mxu0
    %v2510 = vadd.f32 %v2439, %v2509
    %v2511 = vpop.f32.mrb[0].mxu0
    %v2512 = vadd.f32 %v2441, %v2511
    %2513 = vdwg.mxu0
    %v2514 = vld [vmem:[#allocation4] sm:$0x30]
    %v2515 = vld [vmem:[#allocation4 + $0x8] sm:$0x30]
    %v2516 = vld [vmem:[#allocation4 + $0x10] sm:$0x30]
    %s2517 = scalar_lea.vmem [#allocation16], 1280
    %v2518 = vld [vmem:[%s2517] sm:$0xff]
    %v2519 = vld [vmem:[%s2517 + $0x8] sm:$0xff]
    %v2520 = vld [vmem:[%s2517 + $0x10] sm:$0xff]
    %v2521 = vld [vmem:[%s2517 + $0x18] sm:$0xff]
    %v2522 = vld [vmem:[%s2517 + $0x20] sm:$0xff]
    %v2523 = vld [vmem:[%s2517 + $0x28] sm:$0xff]
    %v2524 = vld [vmem:[%s2517 + $0x30] sm:$0xff]
    %v2525 = vld [vmem:[%s2517 + $0x38] sm:$0xff]
    %v2526 = vld [vmem:[%s2517 + $0x40] sm:$0xff]
    %v2527 = vld [vmem:[%s2517 + $0x48] sm:$0xff]
    %v2528 = vld [vmem:[%s2517 + $0x50] sm:$0xff]
    %v2529 = vld [vmem:[%s2517 + $0x58] sm:$0xff]
    %v2530 = vld [vmem:[%s2517 + $0x60] sm:$0xff]
    %v2531 = vld [vmem:[%s2517 + $0x68] sm:$0xff]
    %v2532 = vld [vmem:[%s2517 + $0x70] sm:$0xff]
    %v2533 = vld [vmem:[%s2517 + $0x78] sm:$0xff]
    %v2534 = vld [vmem:[%s2517 + $0x80] sm:$0xff]
    %v2535 = vld [vmem:[%s2517 + $0x88] sm:$0xff]
    %v2536 = vld [vmem:[%s2517 + $0x90] sm:$0xff]
    %v2537 = vld [vmem:[%s2517 + $0x98] sm:$0xff]
    %v2538 = vld [vmem:[%s2517 + $0xa0] sm:$0xff]
    %v2539 = vld [vmem:[%s2517 + $0xa8] sm:$0xff]
    %v2540 = vld [vmem:[%s2517 + $0xb0] sm:$0xff]
    %v2541 = vld [vmem:[%s2517 + $0xb8] sm:$0xff]
    %v2542 = vld [vmem:[%s2517 + $0xc0] sm:$0xff]
    %v2543 = vld [vmem:[%s2517 + $0xc8] sm:$0xff]
    %v2544 = vld [vmem:[%s2517 + $0xd0] sm:$0xff]
    %v2545 = vld [vmem:[%s2517 + $0xd8] sm:$0xff]
    %v2546 = vld [vmem:[%s2517 + $0xe0] sm:$0xff]
    %v2547 = vld [vmem:[%s2517 + $0xe8] sm:$0xff]
    %v2548 = vld [vmem:[%s2517 + $0xf0] sm:$0xff]
    %v2549 = vld [vmem:[%s2517 + $0xf8] sm:$0xff]
    %v2550 = vld [vmem:[%s2517 + $0x100] sm:$0xff]
    %v2551 = vld [vmem:[%s2517 + $0x108] sm:$0xff]
    %v2552 = vld [vmem:[%s2517 + $0x110] sm:$0xff]
    %v2553 = vld [vmem:[%s2517 + $0x118] sm:$0xff]
    %v2554 = vld [vmem:[%s2517 + $0x120] sm:$0xff]
    %v2555 = vld [vmem:[%s2517 + $0x128] sm:$0xff]
    %v2556 = vld [vmem:[%s2517 + $0x130] sm:$0xff]
    %v2557 = vld [vmem:[%s2517 + $0x138] sm:$0xff]
    %v2558 = vld [vmem:[%s2517 + $0x140] sm:$0xff]
    %v2559 = vld [vmem:[%s2517 + $0x148] sm:$0xff]
    %v2560 = vld [vmem:[%s2517 + $0x150] sm:$0xff]
    %v2561 = vld [vmem:[%s2517 + $0x158] sm:$0xff]
    %v2562 = vld [vmem:[%s2517 + $0x160] sm:$0xff]
    %v2563 = vld [vmem:[%s2517 + $0x168] sm:$0xff]
    %v2564 = vld [vmem:[%s2517 + $0x170] sm:$0xff]
    %v2565 = vld [vmem:[%s2517 + $0x178] sm:$0xff]
    %v2566 = vld [vmem:[%s2517 + $0x180] sm:$0xff]
    %v2567 = vld [vmem:[%s2517 + $0x188] sm:$0xff]
    %v2568 = vld [vmem:[%s2517 + $0x190] sm:$0xff]
    %v2569 = vld [vmem:[%s2517 + $0x198] sm:$0xff]
    %v2570 = vld [vmem:[%s2517 + $0x1a0] sm:$0xff]
    %v2571 = vld [vmem:[%s2517 + $0x1a8] sm:$0xff]
    %v2572 = vld [vmem:[%s2517 + $0x1b0] sm:$0xff]
    %v2573 = vld [vmem:[%s2517 + $0x1b8] sm:$0xff]
    %v2574 = vld [vmem:[%s2517 + $0x1c0] sm:$0xff]
    %v2575 = vld [vmem:[%s2517 + $0x1c8] sm:$0xff]
    %v2576 = vld [vmem:[%s2517 + $0x1d0] sm:$0xff]
    %v2577 = vld [vmem:[%s2517 + $0x1d8] sm:$0xff]
    %v2578 = vld [vmem:[%s2517 + $0x1e0] sm:$0xff]
    %v2579 = vld [vmem:[%s2517 + $0x1e8] sm:$0xff]
    %v2580 = vld [vmem:[%s2517 + $0x1f0] sm:$0xff]
    %v2581 = vld [vmem:[%s2517 + $0x1f8] sm:$0xff]
    %v2582 = vld [vmem:[%s2517 + $0x200] sm:$0xff]
    %v2583 = vld [vmem:[%s2517 + $0x208] sm:$0xff]
    %v2584 = vld [vmem:[%s2517 + $0x210] sm:$0xff]
    %v2585 = vld [vmem:[%s2517 + $0x218] sm:$0xff]
    %v2586 = vld [vmem:[%s2517 + $0x220] sm:$0xff]
    %v2587 = vld [vmem:[%s2517 + $0x228] sm:$0xff]
    %v2588 = vld [vmem:[%s2517 + $0x230] sm:$0xff]
    %v2589 = vld [vmem:[%s2517 + $0x238] sm:$0xff]
    %v2590 = vld [vmem:[%s2517 + $0x240] sm:$0xff]
    %v2591 = vld [vmem:[%s2517 + $0x248] sm:$0xff]
    %v2592 = vld [vmem:[%s2517 + $0x250] sm:$0xff]
    %v2593 = vld [vmem:[%s2517 + $0x258] sm:$0xff]
    %v2594 = vld [vmem:[%s2517 + $0x260] sm:$0xff]
    %v2595 = vld [vmem:[%s2517 + $0x268] sm:$0xff]
    %v2596 = vld [vmem:[%s2517 + $0x270] sm:$0xff]
    %v2597 = vld [vmem:[%s2517 + $0x278] sm:$0xff]
    %v2601 = vrot.slane %v2514, 4
    %v2602 = vrot.slane %v2515, 4
    %v2603 = vrot.slane %v2516, 4
    %v2606 = vsel %vm190, %v2603, 0
    %2608 = vmatprep.subr.mxu0 %v2519
    %2609 = vmatpush1.msra.mxu0 %v2518
    %2610 = vmatprep.subr.mxu0 %v2521
    %2611 = vmatpush1.msra.mxu0 %v2520
    %2612 = vmatprep.subr.mxu0 %v2523
    %2613 = vmatpush1.msra.mxu0 %v2522
    %2614 = vmatprep.subr.mxu0 %v2525
    %2615 = vmatpush1.msra.mxu0 %v2524
    %2616 = vmatprep.subr.mxu0 %v2527
    %2617 = vmatpush1.msra.mxu0 %v2526
    %2618 = vmatprep.subr.mxu0 %v2529
    %2619 = vmatpush1.msra.mxu0 %v2528
    %2620 = vmatprep.subr.mxu0 %v2531
    %2621 = vmatpush1.msra.mxu0 %v2530
    %2622 = vmatprep.subr.mxu0 %v2533
    %2623 = vmatpush1.msra.mxu0 %v2532
    %2624 = vmatprep.subr.mxu0 %v2535
    %2625 = vmatpush1.msra.mxu0 %v2534
    %2626 = vmatprep.subr.mxu0 %v2537
    %2627 = vmatpush1.msra.mxu0 %v2536
    %2628 = vmatprep.subr.mxu0 %v2539
    %2629 = vmatpush1.msra.mxu0 %v2538
    %2630 = vmatprep.subr.mxu0 %v2541
    %2631 = vmatpush1.msra.mxu0 %v2540
    %2632 = vmatprep.subr.mxu0 %v2543
    %2633 = vmatpush1.msra.mxu0 %v2542
    %2634 = vmatprep.subr.mxu0 %v2545
    %2635 = vmatpush1.msra.mxu0 %v2544
    %2636 = vmatprep.subr.mxu0 %v2547
    %2637 = vmatpush1.msra.mxu0 %v2546
    %2638 = vmatprep.subr.mxu0 %v2549
    %2639 = vmatpush1.msra.mxu0 %v2548
    %2640 = vmatprep.subr.mxu0 %v2551
    %2641 = vmatpush1.msra.mxu0 %v2550
    %2642 = vmatprep.subr.mxu0 %v2553
    %2643 = vmatpush1.msra.mxu0 %v2552
    %2644 = vmatprep.subr.mxu0 %v2555
    %2645 = vmatpush1.msra.mxu0 %v2554
    %2646 = vmatprep.subr.mxu0 %v2557
    %2647 = vmatpush1.msra.mxu0 %v2556
    %2648 = vmatprep.subr.mxu0 %v2559
    %2649 = vmatpush1.msra.mxu0 %v2558
    %2650 = vmatprep.subr.mxu0 %v2561
    %2651 = vmatpush1.msra.mxu0 %v2560
    %2652 = vmatprep.subr.mxu0 %v2563
    %2653 = vmatpush1.msra.mxu0 %v2562
    %2654 = vmatprep.subr.mxu0 %v2565
    %2655 = vmatpush1.msra.mxu0 %v2564
    %2656 = vmatprep.subr.mxu0 %v2567
    %2657 = vmatpush1.msra.mxu0 %v2566
    %2658 = vmatprep.subr.mxu0 %v2569
    %2659 = vmatpush1.msra.mxu0 %v2568
    %2660 = vmatprep.subr.mxu0 %v2571
    %2661 = vmatpush1.msra.mxu0 %v2570
    %2662 = vmatprep.subr.mxu0 %v2573
    %2663 = vmatpush1.msra.mxu0 %v2572
    %2664 = vmatprep.subr.mxu0 %v2575
    %2665 = vmatpush1.msra.mxu0 %v2574
    %2666 = vmatprep.subr.mxu0 %v2577
    %2667 = vmatpush1.msra.mxu0 %v2576
    %2668 = vmatprep.subr.mxu0 %v2579
    %2669 = vmatpush1.msra.mxu0 %v2578
    %2670 = vmatprep.subr.mxu0 %v2581
    %2671 = vmatpush1.msra.mxu0 %v2580
    %2672 = vmatprep.mubr.f32.mxu0 %v2602
    %2673 = vmatmul.mubr.f32.gmra.mrb[0].mxu0 %v2601
    %v2674 = vpop.f32.mrb[0].mxu0
    %v2675 = vadd.f32 0.0, %v2674
    %v2676 = vpop.f32.mrb[0].mxu0
    %v2677 = vadd.f32 0.0, %v2676
    %2678 = vdwg.mxu0
    %2679 = vmatprep.subr.mxu0 %v2583
    %2680 = vmatpush1.msra.mxu0 %v2582
    %2681 = vmatprep.subr.mxu0 %v2585
    %2682 = vmatpush1.msra.mxu0 %v2584
    %2683 = vmatprep.subr.mxu0 %v2587
    %2684 = vmatpush1.msra.mxu0 %v2586
    %2685 = vmatprep.subr.mxu0 %v2589
    %2686 = vmatpush1.msra.mxu0 %v2588
    %2687 = vmatprep.subr.mxu0 %v2591
    %2688 = vmatpush1.msra.mxu0 %v2590
    %2689 = vmatprep.subr.mxu0 %v2593
    %2690 = vmatpush1.msra.mxu0 %v2592
    %2691 = vmatprep.subr.mxu0 %v2595
    %2692 = vmatpush1.msra.mxu0 %v2594
    %2693 = vmatprep.subr.mxu0 %v2597
    %2694 = vmatpush1.msra.mxu0 %v2596
    %2695 = vmatprep.subr.mxu0 0.0
    %2696 = vmatpush1.msra.mxu0 0.0
    %2697 = vmatprep.subr.mxu0 0.0
    %2698 = vmatpush1.msra.mxu0 0.0
    %2699 = vmatprep.subr.mxu0 0.0
    %2700 = vmatpush1.msra.mxu0 0.0
    %2701 = vmatprep.subr.mxu0 0.0
    %2702 = vmatpush1.msra.mxu0 0.0
    %2703 = vmatprep.subr.mxu0 0.0
    %2704 = vmatpush1.msra.mxu0 0.0
    %2705 = vmatprep.subr.mxu0 0.0
    %2706 = vmatpush1.msra.mxu0 0.0
    %2707 = vmatprep.subr.mxu0 0.0
    %2708 = vmatpush1.msra.mxu0 0.0
    %2709 = vmatprep.subr.mxu0 0.0
    %2710 = vmatpush1.msra.mxu0 0.0
    %2711 = vmatprep.subr.mxu0 0.0
    %2712 = vmatpush1.msra.mxu0 0.0
    %2713 = vmatprep.subr.mxu0 0.0
    %2714 = vmatpush1.msra.mxu0 0.0
    %2715 = vmatprep.subr.mxu0 0.0
    %2716 = vmatpush1.msra.mxu0 0.0
    %2717 = vmatprep.subr.mxu0 0.0
    %2718 = vmatpush1.msra.mxu0 0.0
    %2719 = vmatprep.subr.mxu0 0.0
    %2720 = vmatpush1.msra.mxu0 0.0
    %2721 = vmatprep.subr.mxu0 0.0
    %2722 = vmatpush1.msra.mxu0 0.0
    %2723 = vmatprep.subr.mxu0 0.0
    %2724 = vmatpush1.msra.mxu0 0.0
    %2725 = vmatprep.subr.mxu0 0.0
    %2726 = vmatpush1.msra.mxu0 0.0
    %2727 = vmatprep.subr.mxu0 0.0
    %2728 = vmatpush1.msra.mxu0 0.0
    %2729 = vmatprep.subr.mxu0 0.0
    %2730 = vmatpush1.msra.mxu0 0.0
    %2731 = vmatprep.subr.mxu0 0.0
    %2732 = vmatpush1.msra.mxu0 0.0
    %2733 = vmatprep.subr.mxu0 0.0
    %2734 = vmatpush1.msra.mxu0 0.0
    %2735 = vmatprep.subr.mxu0 0.0
    %2736 = vmatpush1.msra.mxu0 0.0
    %2737 = vmatprep.subr.mxu0 0.0
    %2738 = vmatpush1.msra.mxu0 0.0
    %2739 = vmatprep.subr.mxu0 0.0
    %2740 = vmatpush1.msra.mxu0 0.0
    %2741 = vmatprep.subr.mxu0 0.0
    %2742 = vmatpush1.msra.mxu0 0.0
    %2743 = vmatprep.mubr.f32.mxu0 0.0
    %2744 = vmatmul.mubr.f32.gmra.mrb[0].mxu0 %v2606
    %v2745 = vpop.f32.mrb[0].mxu0
    %v2746 = vadd.f32 %v2675, %v2745
    %v2747 = vpop.f32.mrb[0].mxu0
    %v2748 = vadd.f32 %v2677, %v2747
    %2749 = vdwg.mxu0
    %v2750 = vadd.f32 %v2510, %v2746
    %v2751 = vadd.f32 %v2512, %v2748
    %v2752 = vld [vmem:[#allocation4] sm:$0xc0]
    %v2753 = vld [vmem:[#allocation4 + $0x8] sm:$0xc0]
    %v2754 = vld [vmem:[#allocation4 + $0x10] sm:$0xc0]
    %s2755 = scalar_lea.vmem [#allocation16], 1920
    %v2756 = vld [vmem:[%s2755] sm:$0xff]
    %v2757 = vld [vmem:[%s2755 + $0x8] sm:$0xff]
    %v2758 = vld [vmem:[%s2755 + $0x10] sm:$0xff]
    %v2759 = vld [vmem:[%s2755 + $0x18] sm:$0xff]
    %v2760 = vld [vmem:[%s2755 + $0x20] sm:$0xff]
    %v2761 = vld [vmem:[%s2755 + $0x28] sm:$0xff]
    %v2762 = vld [vmem:[%s2755 + $0x30] sm:$0xff]
    %v2763 = vld [vmem:[%s2755 + $0x38] sm:$0xff]
    %v2764 = vld [vmem:[%s2755 + $0x40] sm:$0xff]
    %v2765 = vld [vmem:[%s2755 + $0x48] sm:$0xff]
    %v2766 = vld [vmem:[%s2755 + $0x50] sm:$0xff]
    %v2767 = vld [vmem:[%s2755 + $0x58] sm:$0xff]
    %v2768 = vld [vmem:[%s2755 + $0x60] sm:$0xff]
    %v2769 = vld [vmem:[%s2755 + $0x68] sm:$0xff]
    %v2770 = vld [vmem:[%s2755 + $0x70] sm:$0xff]
    %v2771 = vld [vmem:[%s2755 + $0x78] sm:$0xff]
    %v2772 = vld [vmem:[%s2755 + $0x80] sm:$0xff]
    %v2773 = vld [vmem:[%s2755 + $0x88] sm:$0xff]
    %v2774 = vld [vmem:[%s2755 + $0x90] sm:$0xff]
    %v2775 = vld [vmem:[%s2755 + $0x98] sm:$0xff]
    %v2776 = vld [vmem:[%s2755 + $0xa0] sm:$0xff]
    %v2777 = vld [vmem:[%s2755 + $0xa8] sm:$0xff]
    %v2778 = vld [vmem:[%s2755 + $0xb0] sm:$0xff]
    %v2779 = vld [vmem:[%s2755 + $0xb8] sm:$0xff]
    %v2780 = vld [vmem:[%s2755 + $0xc0] sm:$0xff]
    %v2781 = vld [vmem:[%s2755 + $0xc8] sm:$0xff]
    %v2782 = vld [vmem:[%s2755 + $0xd0] sm:$0xff]
    %v2783 = vld [vmem:[%s2755 + $0xd8] sm:$0xff]
    %v2784 = vld [vmem:[%s2755 + $0xe0] sm:$0xff]
    %v2785 = vld [vmem:[%s2755 + $0xe8] sm:$0xff]
    %v2786 = vld [vmem:[%s2755 + $0xf0] sm:$0xff]
    %v2787 = vld [vmem:[%s2755 + $0xf8] sm:$0xff]
    %v2788 = vld [vmem:[%s2755 + $0x100] sm:$0xff]
    %v2789 = vld [vmem:[%s2755 + $0x108] sm:$0xff]
    %v2790 = vld [vmem:[%s2755 + $0x110] sm:$0xff]
    %v2791 = vld [vmem:[%s2755 + $0x118] sm:$0xff]
    %v2792 = vld [vmem:[%s2755 + $0x120] sm:$0xff]
    %v2793 = vld [vmem:[%s2755 + $0x128] sm:$0xff]
    %v2794 = vld [vmem:[%s2755 + $0x130] sm:$0xff]
    %v2795 = vld [vmem:[%s2755 + $0x138] sm:$0xff]
    %v2796 = vld [vmem:[%s2755 + $0x140] sm:$0xff]
    %v2797 = vld [vmem:[%s2755 + $0x148] sm:$0xff]
    %v2798 = vld [vmem:[%s2755 + $0x150] sm:$0xff]
    %v2799 = vld [vmem:[%s2755 + $0x158] sm:$0xff]
    %v2800 = vld [vmem:[%s2755 + $0x160] sm:$0xff]
    %v2801 = vld [vmem:[%s2755 + $0x168] sm:$0xff]
    %v2802 = vld [vmem:[%s2755 + $0x170] sm:$0xff]
    %v2803 = vld [vmem:[%s2755 + $0x178] sm:$0xff]
    %v2804 = vld [vmem:[%s2755 + $0x180] sm:$0xff]
    %v2805 = vld [vmem:[%s2755 + $0x188] sm:$0xff]
    %v2806 = vld [vmem:[%s2755 + $0x190] sm:$0xff]
    %v2807 = vld [vmem:[%s2755 + $0x198] sm:$0xff]
    %v2808 = vld [vmem:[%s2755 + $0x1a0] sm:$0xff]
    %v2809 = vld [vmem:[%s2755 + $0x1a8] sm:$0xff]
    %v2810 = vld [vmem:[%s2755 + $0x1b0] sm:$0xff]
    %v2811 = vld [vmem:[%s2755 + $0x1b8] sm:$0xff]
    %v2812 = vld [vmem:[%s2755 + $0x1c0] sm:$0xff]
    %v2813 = vld [vmem:[%s2755 + $0x1c8] sm:$0xff]
    %v2814 = vld [vmem:[%s2755 + $0x1d0] sm:$0xff]
    %v2815 = vld [vmem:[%s2755 + $0x1d8] sm:$0xff]
    %v2816 = vld [vmem:[%s2755 + $0x1e0] sm:$0xff]
    %v2817 = vld [vmem:[%s2755 + $0x1e8] sm:$0xff]
    %v2818 = vld [vmem:[%s2755 + $0x1f0] sm:$0xff]
    %v2819 = vld [vmem:[%s2755 + $0x1f8] sm:$0xff]
    %v2820 = vld [vmem:[%s2755 + $0x200] sm:$0xff]
    %v2821 = vld [vmem:[%s2755 + $0x208] sm:$0xff]
    %v2822 = vld [vmem:[%s2755 + $0x210] sm:$0xff]
    %v2823 = vld [vmem:[%s2755 + $0x218] sm:$0xff]
    %v2824 = vld [vmem:[%s2755 + $0x220] sm:$0xff]
    %v2825 = vld [vmem:[%s2755 + $0x228] sm:$0xff]
    %v2826 = vld [vmem:[%s2755 + $0x230] sm:$0xff]
    %v2827 = vld [vmem:[%s2755 + $0x238] sm:$0xff]
    %v2828 = vld [vmem:[%s2755 + $0x240] sm:$0xff]
    %v2829 = vld [vmem:[%s2755 + $0x248] sm:$0xff]
    %v2830 = vld [vmem:[%s2755 + $0x250] sm:$0xff]
    %v2831 = vld [vmem:[%s2755 + $0x258] sm:$0xff]
    %v2832 = vld [vmem:[%s2755 + $0x260] sm:$0xff]
    %v2833 = vld [vmem:[%s2755 + $0x268] sm:$0xff]
    %v2834 = vld [vmem:[%s2755 + $0x270] sm:$0xff]
    %v2835 = vld [vmem:[%s2755 + $0x278] sm:$0xff]
    %v2839 = vrot.slane %v2752, 6
    %v2840 = vrot.slane %v2753, 6
    %v2841 = vrot.slane %v2754, 6
    %v2844 = vsel %vm190, %v2841, 0
    %2846 = vmatprep.subr.mxu0 %v2757
    %2847 = vmatpush1.msra.mxu0 %v2756
    %2848 = vmatprep.subr.mxu0 %v2759
    %2849 = vmatpush1.msra.mxu0 %v2758
    %2850 = vmatprep.subr.mxu0 %v2761
    %2851 = vmatpush1.msra.mxu0 %v2760
    %2852 = vmatprep.subr.mxu0 %v2763
    %2853 = vmatpush1.msra.mxu0 %v2762
    %2854 = vmatprep.subr.mxu0 %v2765
    %2855 = vmatpush1.msra.mxu0 %v2764
    %2856 = vmatprep.subr.mxu0 %v2767
    %2857 = vmatpush1.msra.mxu0 %v2766
    %2858 = vmatprep.subr.mxu0 %v2769
    %2859 = vmatpush1.msra.mxu0 %v2768
    %2860 = vmatprep.subr.mxu0 %v2771
    %2861 = vmatpush1.msra.mxu0 %v2770
    %2862 = vmatprep.subr.mxu0 %v2773
    %2863 = vmatpush1.msra.mxu0 %v2772
    %2864 = vmatprep.subr.mxu0 %v2775
    %2865 = vmatpush1.msra.mxu0 %v2774
    %2866 = vmatprep.subr.mxu0 %v2777
    %2867 = vmatpush1.msra.mxu0 %v2776
    %2868 = vmatprep.subr.mxu0 %v2779
    %2869 = vmatpush1.msra.mxu0 %v2778
    %2870 = vmatprep.subr.mxu0 %v2781
    %2871 = vmatpush1.msra.mxu0 %v2780
    %2872 = vmatprep.subr.mxu0 %v2783
    %2873 = vmatpush1.msra.mxu0 %v2782
    %2874 = vmatprep.subr.mxu0 %v2785
    %2875 = vmatpush1.msra.mxu0 %v2784
    %2876 = vmatprep.subr.mxu0 %v2787
    %2877 = vmatpush1.msra.mxu0 %v2786
    %2878 = vmatprep.subr.mxu0 %v2789
    %2879 = vmatpush1.msra.mxu0 %v2788
    %2880 = vmatprep.subr.mxu0 %v2791
    %2881 = vmatpush1.msra.mxu0 %v2790
    %2882 = vmatprep.subr.mxu0 %v2793
    %2883 = vmatpush1.msra.mxu0 %v2792
    %2884 = vmatprep.subr.mxu0 %v2795
    %2885 = vmatpush1.msra.mxu0 %v2794
    %2886 = vmatprep.subr.mxu0 %v2797
    %2887 = vmatpush1.msra.mxu0 %v2796
    %2888 = vmatprep.subr.mxu0 %v2799
    %2889 = vmatpush1.msra.mxu0 %v2798
    %2890 = vmatprep.subr.mxu0 %v2801
    %2891 = vmatpush1.msra.mxu0 %v2800
    %2892 = vmatprep.subr.mxu0 %v2803
    %2893 = vmatpush1.msra.mxu0 %v2802
    %2894 = vmatprep.subr.mxu0 %v2805
    %2895 = vmatpush1.msra.mxu0 %v2804
    %2896 = vmatprep.subr.mxu0 %v2807
    %2897 = vmatpush1.msra.mxu0 %v2806
    %2898 = vmatprep.subr.mxu0 %v2809
    %2899 = vmatpush1.msra.mxu0 %v2808
    %2900 = vmatprep.subr.mxu0 %v2811
    %2901 = vmatpush1.msra.mxu0 %v2810
    %2902 = vmatprep.subr.mxu0 %v2813
    %2903 = vmatpush1.msra.mxu0 %v2812
    %2904 = vmatprep.subr.mxu0 %v2815
    %2905 = vmatpush1.msra.mxu0 %v2814
    %2906 = vmatprep.subr.mxu0 %v2817
    %2907 = vmatpush1.msra.mxu0 %v2816
    %2908 = vmatprep.subr.mxu0 %v2819
    %2909 = vmatpush1.msra.mxu0 %v2818
    %2910 = vmatprep.mubr.f32.mxu0 %v2840
    %2911 = vmatmul.mubr.f32.gmra.mrb[0].mxu0 %v2839
    %v2912 = vpop.f32.mrb[0].mxu0
    %v2913 = vadd.f32 0.0, %v2912
    %v2914 = vpop.f32.mrb[0].mxu0
    %v2915 = vadd.f32 0.0, %v2914
    %2916 = vdwg.mxu0
    %2917 = vmatprep.subr.mxu0 %v2821
    %2918 = vmatpush1.msra.mxu0 %v2820
    %2919 = vmatprep.subr.mxu0 %v2823
    %2920 = vmatpush1.msra.mxu0 %v2822
    %2921 = vmatprep.subr.mxu0 %v2825
    %2922 = vmatpush1.msra.mxu0 %v2824
    %2923 = vmatprep.subr.mxu0 %v2827
    %2924 = vmatpush1.msra.mxu0 %v2826
    %2925 = vmatprep.subr.mxu0 %v2829
    %2926 = vmatpush1.msra.mxu0 %v2828
    %2927 = vmatprep.subr.mxu0 %v2831
    %2928 = vmatpush1.msra.mxu0 %v2830
    %2929 = vmatprep.subr.mxu0 %v2833
    %2930 = vmatpush1.msra.mxu0 %v2832
    %2931 = vmatprep.subr.mxu0 %v2835
    %2932 = vmatpush1.msra.mxu0 %v2834
    %2933 = vmatprep.subr.mxu0 0.0
    %2934 = vmatpush1.msra.mxu0 0.0
    %2935 = vmatprep.subr.mxu0 0.0
    %2936 = vmatpush1.msra.mxu0 0.0
    %2937 = vmatprep.subr.mxu0 0.0
    %2938 = vmatpush1.msra.mxu0 0.0
    %2939 = vmatprep.subr.mxu0 0.0
    %2940 = vmatpush1.msra.mxu0 0.0
    %2941 = vmatprep.subr.mxu0 0.0
    %2942 = vmatpush1.msra.mxu0 0.0
    %2943 = vmatprep.subr.mxu0 0.0
    %2944 = vmatpush1.msra.mxu0 0.0
    %2945 = vmatprep.subr.mxu0 0.0
    %2946 = vmatpush1.msra.mxu0 0.0
    %2947 = vmatprep.subr.mxu0 0.0
    %2948 = vmatpush1.msra.mxu0 0.0
    %2949 = vmatprep.subr.mxu0 0.0
    %2950 = vmatpush1.msra.mxu0 0.0
    %2951 = vmatprep.subr.mxu0 0.0
    %2952 = vmatpush1.msra.mxu0 0.0
    %2953 = vmatprep.subr.mxu0 0.0
    %2954 = vmatpush1.msra.mxu0 0.0
    %2955 = vmatprep.subr.mxu0 0.0
    %2956 = vmatpush1.msra.mxu0 0.0
    %2957 = vmatprep.subr.mxu0 0.0
    %2958 = vmatpush1.msra.mxu0 0.0
    %2959 = vmatprep.subr.mxu0 0.0
    %2960 = vmatpush1.msra.mxu0 0.0
    %2961 = vmatprep.subr.mxu0 0.0
    %2962 = vmatpush1.msra.mxu0 0.0
    %2963 = vmatprep.subr.mxu0 0.0
    %2964 = vmatpush1.msra.mxu0 0.0
    %2965 = vmatprep.subr.mxu0 0.0
    %2966 = vmatpush1.msra.mxu0 0.0
    %2967 = vmatprep.subr.mxu0 0.0
    %2968 = vmatpush1.msra.mxu0 0.0
    %2969 = vmatprep.subr.mxu0 0.0
    %2970 = vmatpush1.msra.mxu0 0.0
    %2971 = vmatprep.subr.mxu0 0.0
    %2972 = vmatpush1.msra.mxu0 0.0
    %2973 = vmatprep.subr.mxu0 0.0
    %2974 = vmatpush1.msra.mxu0 0.0
    %2975 = vmatprep.subr.mxu0 0.0
    %2976 = vmatpush1.msra.mxu0 0.0
    %2977 = vmatprep.subr.mxu0 0.0
    %2978 = vmatpush1.msra.mxu0 0.0
    %2979 = vmatprep.subr.mxu0 0.0
    %2980 = vmatpush1.msra.mxu0 0.0
    %2981 = vmatprep.mubr.f32.mxu0 0.0
    %2982 = vmatmul.mubr.f32.gmra.mrb[0].mxu0 %v2844
    %v2983 = vpop.f32.mrb[0].mxu0
    %v2984 = vadd.f32 %v2913, %v2983
    %v2985 = vpop.f32.mrb[0].mxu0
    %v2986 = vadd.f32 %v2915, %v2985
    %2987 = vdwg.mxu0
    %v2988 = vadd.f32 %v2750, %v2984
    %v2989 = vadd.f32 %v2751, %v2986
    %v2990 = vld [vmem:[#allocation4 + $0x20] sm:$0x3]
    %v2991 = vld [vmem:[#allocation4 + $0x28] sm:$0x3]
    %v2992 = vld [vmem:[#allocation4 + $0x30] sm:$0x3]
    %s2993 = scalar_lea.vmem [#allocation16], 2560
    %v2994 = vld [vmem:[%s2993] sm:$0xff]
    %v2995 = vld [vmem:[%s2993 + $0x8] sm:$0xff]
    %v2996 = vld [vmem:[%s2993 + $0x10] sm:$0xff]
    %v2997 = vld [vmem:[%s2993 + $0x18] sm:$0xff]
    %v2998 = vld [vmem:[%s2993 + $0x20] sm:$0xff]
    %v2999 = vld [vmem:[%s2993 + $0x28] sm:$0xff]
    %v3000 = vld [vmem:[%s2993 + $0x30] sm:$0xff]
    %v3001 = vld [vmem:[%s2993 + $0x38] sm:$0xff]
    %v3002 = vld [vmem:[%s2993 + $0x40] sm:$0xff]
    %v3003 = vld [vmem:[%s2993 + $0x48] sm:$0xff]
    %v3004 = vld [vmem:[%s2993 + $0x50] sm:$0xff]
    %v3005 = vld [vmem:[%s2993 + $0x58] sm:$0xff]
    %v3006 = vld [vmem:[%s2993 + $0x60] sm:$0xff]
    %v3007 = vld [vmem:[%s2993 + $0x68] sm:$0xff]
    %v3008 = vld [vmem:[%s2993 + $0x70] sm:$0xff]
    %v3009 = vld [vmem:[%s2993 + $0x78] sm:$0xff]
    %v3010 = vld [vmem:[%s2993 + $0x80] sm:$0xff]
    %v3011 = vld [vmem:[%s2993 + $0x88] sm:$0xff]
    %v3012 = vld [vmem:[%s2993 + $0x90] sm:$0xff]
    %v3013 = vld [vmem:[%s2993 + $0x98] sm:$0xff]
    %v3014 = vld [vmem:[%s2993 + $0xa0] sm:$0xff]
    %v3015 = vld [vmem:[%s2993 + $0xa8] sm:$0xff]
    %v3016 = vld [vmem:[%s2993 + $0xb0] sm:$0xff]
    %v3017 = vld [vmem:[%s2993 + $0xb8] sm:$0xff]
    %v3018 = vld [vmem:[%s2993 + $0xc0] sm:$0xff]
    %v3019 = vld [vmem:[%s2993 + $0xc8] sm:$0xff]
    %v3020 = vld [vmem:[%s2993 + $0xd0] sm:$0xff]
    %v3021 = vld [vmem:[%s2993 + $0xd8] sm:$0xff]
    %v3022 = vld [vmem:[%s2993 + $0xe0] sm:$0xff]
    %v3023 = vld [vmem:[%s2993 + $0xe8] sm:$0xff]
    %v3024 = vld [vmem:[%s2993 + $0xf0] sm:$0xff]
    %v3025 = vld [vmem:[%s2993 + $0xf8] sm:$0xff]
    %v3026 = vld [vmem:[%s2993 + $0x100] sm:$0xff]
    %v3027 = vld [vmem:[%s2993 + $0x108] sm:$0xff]
    %v3028 = vld [vmem:[%s2993 + $0x110] sm:$0xff]
    %v3029 = vld [vmem:[%s2993 + $0x118] sm:$0xff]
    %v3030 = vld [vmem:[%s2993 + $0x120] sm:$0xff]
    %v3031 = vld [vmem:[%s2993 + $0x128] sm:$0xff]
    %v3032 = vld [vmem:[%s2993 + $0x130] sm:$0xff]
    %v3033 = vld [vmem:[%s2993 + $0x138] sm:$0xff]
    %v3034 = vld [vmem:[%s2993 + $0x140] sm:$0xff]
    %v3035 = vld [vmem:[%s2993 + $0x148] sm:$0xff]
    %v3036 = vld [vmem:[%s2993 + $0x150] sm:$0xff]
    %v3037 = vld [vmem:[%s2993 + $0x158] sm:$0xff]
    %v3038 = vld [vmem:[%s2993 + $0x160] sm:$0xff]
    %v3039 = vld [vmem:[%s2993 + $0x168] sm:$0xff]
    %v3040 = vld [vmem:[%s2993 + $0x170] sm:$0xff]
    %v3041 = vld [vmem:[%s2993 + $0x178] sm:$0xff]
    %v3042 = vld [vmem:[%s2993 + $0x180] sm:$0xff]
    %v3043 = vld [vmem:[%s2993 + $0x188] sm:$0xff]
    %v3044 = vld [vmem:[%s2993 + $0x190] sm:$0xff]
    %v3045 = vld [vmem:[%s2993 + $0x198] sm:$0xff]
    %v3046 = vld [vmem:[%s2993 + $0x1a0] sm:$0xff]
    %v3047 = vld [vmem:[%s2993 + $0x1a8] sm:$0xff]
    %v3048 = vld [vmem:[%s2993 + $0x1b0] sm:$0xff]
    %v3049 = vld [vmem:[%s2993 + $0x1b8] sm:$0xff]
    %v3050 = vld [vmem:[%s2993 + $0x1c0] sm:$0xff]
    %v3051 = vld [vmem:[%s2993 + $0x1c8] sm:$0xff]
    %v3052 = vld [vmem:[%s2993 + $0x1d0] sm:$0xff]
    %v3053 = vld [vmem:[%s2993 + $0x1d8] sm:$0xff]
    %v3054 = vld [vmem:[%s2993 + $0x1e0] sm:$0xff]
    %v3055 = vld [vmem:[%s2993 + $0x1e8] sm:$0xff]
    %v3056 = vld [vmem:[%s2993 + $0x1f0] sm:$0xff]
    %v3057 = vld [vmem:[%s2993 + $0x1f8] sm:$0xff]
    %v3058 = vld [vmem:[%s2993 + $0x200] sm:$0xff]
    %v3059 = vld [vmem:[%s2993 + $0x208] sm:$0xff]
    %v3060 = vld [vmem:[%s2993 + $0x210] sm:$0xff]
    %v3061 = vld [vmem:[%s2993 + $0x218] sm:$0xff]
    %v3062 = vld [vmem:[%s2993 + $0x220] sm:$0xff]
    %v3063 = vld [vmem:[%s2993 + $0x228] sm:$0xff]
    %v3064 = vld [vmem:[%s2993 + $0x230] sm:$0xff]
    %v3065 = vld [vmem:[%s2993 + $0x238] sm:$0xff]
    %v3066 = vld [vmem:[%s2993 + $0x240] sm:$0xff]
    %v3067 = vld [vmem:[%s2993 + $0x248] sm:$0xff]
    %v3068 = vld [vmem:[%s2993 + $0x250] sm:$0xff]
    %v3069 = vld [vmem:[%s2993 + $0x258] sm:$0xff]
    %v3070 = vld [vmem:[%s2993 + $0x260] sm:$0xff]
    %v3071 = vld [vmem:[%s2993 + $0x268] sm:$0xff]
    %v3072 = vld [vmem:[%s2993 + $0x270] sm:$0xff]
    %v3073 = vld [vmem:[%s2993 + $0x278] sm:$0xff]
    %v3075 = vsel %vm190, %v2992, 0
    %3077 = vmatprep.subr.mxu0 %v2995
    %3078 = vmatpush1.msra.mxu0 %v2994
    %3079 = vmatprep.subr.mxu0 %v2997
    %3080 = vmatpush1.msra.mxu0 %v2996
    %3081 = vmatprep.subr.mxu0 %v2999
    %3082 = vmatpush1.msra.mxu0 %v2998
    %3083 = vmatprep.subr.mxu0 %v3001
    %3084 = vmatpush1.msra.mxu0 %v3000
    %3085 = vmatprep.subr.mxu0 %v3003
    %3086 = vmatpush1.msra.mxu0 %v3002
    %3087 = vmatprep.subr.mxu0 %v3005
    %3088 = vmatpush1.msra.mxu0 %v3004
    %3089 = vmatprep.subr.mxu0 %v3007
    %3090 = vmatpush1.msra.mxu0 %v3006
    %3091 = vmatprep.subr.mxu0 %v3009
    %3092 = vmatpush1.msra.mxu0 %v3008
    %3093 = vmatprep.subr.mxu0 %v3011
    %3094 = vmatpush1.msra.mxu0 %v3010
    %3095 = vmatprep.subr.mxu0 %v3013
    %3096 = vmatpush1.msra.mxu0 %v3012
    %3097 = vmatprep.subr.mxu0 %v3015
    %3098 = vmatpush1.msra.mxu0 %v3014
    %3099 = vmatprep.subr.mxu0 %v3017
    %3100 = vmatpush1.msra.mxu0 %v3016
    %3101 = vmatprep.subr.mxu0 %v3019
    %3102 = vmatpush1.msra.mxu0 %v3018
    %3103 = vmatprep.subr.mxu0 %v3021
    %3104 = vmatpush1.msra.mxu0 %v3020
    %3105 = vmatprep.subr.mxu0 %v3023
    %3106 = vmatpush1.msra.mxu0 %v3022
    %3107 = vmatprep.subr.mxu0 %v3025
    %3108 = vmatpush1.msra.mxu0 %v3024
    %3109 = vmatprep.subr.mxu0 %v3027
    %3110 = vmatpush1.msra.mxu0 %v3026
    %3111 = vmatprep.subr.mxu0 %v3029
    %3112 = vmatpush1.msra.mxu0 %v3028
    %3113 = vmatprep.subr.mxu0 %v3031
    %3114 = vmatpush1.msra.mxu0 %v3030
    %3115 = vmatprep.subr.mxu0 %v3033
    %3116 = vmatpush1.msra.mxu0 %v3032
    %3117 = vmatprep.subr.mxu0 %v3035
    %3118 = vmatpush1.msra.mxu0 %v3034
    %3119 = vmatprep.subr.mxu0 %v3037
    %3120 = vmatpush1.msra.mxu0 %v3036
    %3121 = vmatprep.subr.mxu0 %v3039
    %3122 = vmatpush1.msra.mxu0 %v3038
    %3123 = vmatprep.subr.mxu0 %v3041
    %3124 = vmatpush1.msra.mxu0 %v3040
    %3125 = vmatprep.subr.mxu0 %v3043
    %3126 = vmatpush1.msra.mxu0 %v3042
    %3127 = vmatprep.subr.mxu0 %v3045
    %3128 = vmatpush1.msra.mxu0 %v3044
    %3129 = vmatprep.subr.mxu0 %v3047
    %3130 = vmatpush1.msra.mxu0 %v3046
    %3131 = vmatprep.subr.mxu0 %v3049
    %3132 = vmatpush1.msra.mxu0 %v3048
    %3133 = vmatprep.subr.mxu0 %v3051
    %3134 = vmatpush1.msra.mxu0 %v3050
    %3135 = vmatprep.subr.mxu0 %v3053
    %3136 = vmatpush1.msra.mxu0 %v3052
    %3137 = vmatprep.subr.mxu0 %v3055
    %3138 = vmatpush1.msra.mxu0 %v3054
    %3139 = vmatprep.subr.mxu0 %v3057
    %3140 = vmatpush1.msra.mxu0 %v3056
    %3141 = vmatprep.mubr.f32.mxu0 %v2991
    %3142 = vmatmul.mubr.f32.gmra.mrb[0].mxu0 %v2990
    %v3143 = vpop.f32.mrb[0].mxu0
    %v3144 = vadd.f32 0.0, %v3143
    %v3145 = vpop.f32.mrb[0].mxu0
    %v3146 = vadd.f32 0.0, %v3145
    %3147 = vdwg.mxu0
    %3148 = vmatprep.subr.mxu0 %v3059
    %3149 = vmatpush1.msra.mxu0 %v3058
    %3150 = vmatprep.subr.mxu0 %v3061
    %3151 = vmatpush1.msra.mxu0 %v3060
    %3152 = vmatprep.subr.mxu0 %v3063
    %3153 = vmatpush1.msra.mxu0 %v3062
    %3154 = vmatprep.subr.mxu0 %v3065
    %3155 = vmatpush1.msra.mxu0 %v3064
    %3156 = vmatprep.subr.mxu0 %v3067
    %3157 = vmatpush1.msra.mxu0 %v3066
    %3158 = vmatprep.subr.mxu0 %v3069
    %3159 = vmatpush1.msra.mxu0 %v3068
    %3160 = vmatprep.subr.mxu0 %v3071
    %3161 = vmatpush1.msra.mxu0 %v3070
    %3162 = vmatprep.subr.mxu0 %v3073
    %3163 = vmatpush1.msra.mxu0 %v3072
    %3164 = vmatprep.subr.mxu0 0.0
    %3165 = vmatpush1.msra.mxu0 0.0
    %3166 = vmatprep.subr.mxu0 0.0
    %3167 = vmatpush1.msra.mxu0 0.0
    %3168 = vmatprep.subr.mxu0 0.0
    %3169 = vmatpush1.msra.mxu0 0.0
    %3170 = vmatprep.subr.mxu0 0.0
    %3171 = vmatpush1.msra.mxu0 0.0
    %3172 = vmatprep.subr.mxu0 0.0
    %3173 = vmatpush1.msra.mxu0 0.0
    %3174 = vmatprep.subr.mxu0 0.0
    %3175 = vmatpush1.msra.mxu0 0.0
    %3176 = vmatprep.subr.mxu0 0.0
    %3177 = vmatpush1.msra.mxu0 0.0
    %3178 = vmatprep.subr.mxu0 0.0
    %3179 = vmatpush1.msra.mxu0 0.0
    %3180 = vmatprep.subr.mxu0 0.0
    %3181 = vmatpush1.msra.mxu0 0.0
    %3182 = vmatprep.subr.mxu0 0.0
    %3183 = vmatpush1.msra.mxu0 0.0
    %3184 = vmatprep.subr.mxu0 0.0
    %3185 = vmatpush1.msra.mxu0 0.0
    %3186 = vmatprep.subr.mxu0 0.0
    %3187 = vmatpush1.msra.mxu0 0.0
    %3188 = vmatprep.subr.mxu0 0.0
    %3189 = vmatpush1.msra.mxu0 0.0
    %3190 = vmatprep.subr.mxu0 0.0
    %3191 = vmatpush1.msra.mxu0 0.0
    %3192 = vmatprep.subr.mxu0 0.0
    %3193 = vmatpush1.msra.mxu0 0.0
    %3194 = vmatprep.subr.mxu0 0.0
    %3195 = vmatpush1.msra.mxu0 0.0
    %3196 = vmatprep.subr.mxu0 0.0
    %3197 = vmatpush1.msra.mxu0 0.0
    %3198 = vmatprep.subr.mxu0 0.0
    %3199 = vmatpush1.msra.mxu0 0.0
    %3200 = vmatprep.subr.mxu0 0.0
    %3201 = vmatpush1.msra.mxu0 0.0
    %3202 = vmatprep.subr.mxu0 0.0
    %3203 = vmatpush1.msra.mxu0 0.0
    %3204 = vmatprep.subr.mxu0 0.0
    %3205 = vmatpush1.msra.mxu0 0.0
    %3206 = vmatprep.subr.mxu0 0.0
    %3207 = vmatpush1.msra.mxu0 0.0
    %3208 = vmatprep.subr.mxu0 0.0
    %3209 = vmatpush1.msra.mxu0 0.0
    %3210 = vmatprep.subr.mxu0 0.0
    %3211 = vmatpush1.msra.mxu0 0.0
    %3212 = vmatprep.mubr.f32.mxu0 0.0
    %3213 = vmatmul.mubr.f32.gmra.mrb[0].mxu0 %v3075
    %v3214 = vpop.f32.mrb[0].mxu0
    %v3215 = vadd.f32 %v3144, %v3214
    %v3216 = vpop.f32.mrb[0].mxu0
    %v3217 = vadd.f32 %v3146, %v3216
    %3218 = vdwg.mxu0
    %v3219 = vadd.f32 %v2988, %v3215
    %v3220 = vadd.f32 %v2989, %v3217
    %v3221 = vld [vmem:[#allocation4 + $0x20] sm:$0xc]
    %v3222 = vld [vmem:[#allocation4 + $0x28] sm:$0xc]
    %v3223 = vld [vmem:[#allocation4 + $0x30] sm:$0xc]
    %s3224 = scalar_lea.vmem [#allocation16], 3200
    %v3225 = vld [vmem:[%s3224] sm:$0xff]
    %v3226 = vld [vmem:[%s3224 + $0x8] sm:$0xff]
    %v3227 = vld [vmem:[%s3224 + $0x10] sm:$0xff]
    %v3228 = vld [vmem:[%s3224 + $0x18] sm:$0xff]
    %v3229 = vld [vmem:[%s3224 + $0x20] sm:$0xff]
    %v3230 = vld [vmem:[%s3224 + $0x28] sm:$0xff]
    %v3231 = vld [vmem:[%s3224 + $0x30] sm:$0xff]
    %v3232 = vld [vmem:[%s3224 + $0x38] sm:$0xff]
    %v3233 = vld [vmem:[%s3224 + $0x40] sm:$0xff]
    %v3234 = vld [vmem:[%s3224 + $0x48] sm:$0xff]
    %v3235 = vld [vmem:[%s3224 + $0x50] sm:$0xff]
    %v3236 = vld [vmem:[%s3224 + $0x58] sm:$0xff]
    %v3237 = vld [vmem:[%s3224 + $0x60] sm:$0xff]
    %v3238 = vld [vmem:[%s3224 + $0x68] sm:$0xff]
    %v3239 = vld [vmem:[%s3224 + $0x70] sm:$0xff]
    %v3240 = vld [vmem:[%s3224 + $0x78] sm:$0xff]
    %v3241 = vld [vmem:[%s3224 + $0x80] sm:$0xff]
    %v3242 = vld [vmem:[%s3224 + $0x88] sm:$0xff]
    %v3243 = vld [vmem:[%s3224 + $0x90] sm:$0xff]
    %v3244 = vld [vmem:[%s3224 + $0x98] sm:$0xff]
    %v3245 = vld [vmem:[%s3224 + $0xa0] sm:$0xff]
    %v3246 = vld [vmem:[%s3224 + $0xa8] sm:$0xff]
    %v3247 = vld [vmem:[%s3224 + $0xb0] sm:$0xff]
    %v3248 = vld [vmem:[%s3224 + $0xb8] sm:$0xff]
    %v3249 = vld [vmem:[%s3224 + $0xc0] sm:$0xff]
    %v3250 = vld [vmem:[%s3224 + $0xc8] sm:$0xff]
    %v3251 = vld [vmem:[%s3224 + $0xd0] sm:$0xff]
    %v3252 = vld [vmem:[%s3224 + $0xd8] sm:$0xff]
    %v3253 = vld [vmem:[%s3224 + $0xe0] sm:$0xff]
    %v3254 = vld [vmem:[%s3224 + $0xe8] sm:$0xff]
    %v3255 = vld [vmem:[%s3224 + $0xf0] sm:$0xff]
    %v3256 = vld [vmem:[%s3224 + $0xf8] sm:$0xff]
    %v3257 = vld [vmem:[%s3224 + $0x100] sm:$0xff]
    %v3258 = vld [vmem:[%s3224 + $0x108] sm:$0xff]
    %v3259 = vld [vmem:[%s3224 + $0x110] sm:$0xff]
    %v3260 = vld [vmem:[%s3224 + $0x118] sm:$0xff]
    %v3261 = vld [vmem:[%s3224 + $0x120] sm:$0xff]
    %v3262 = vld [vmem:[%s3224 + $0x128] sm:$0xff]
    %v3263 = vld [vmem:[%s3224 + $0x130] sm:$0xff]
    %v3264 = vld [vmem:[%s3224 + $0x138] sm:$0xff]
    %v3265 = vld [vmem:[%s3224 + $0x140] sm:$0xff]
    %v3266 = vld [vmem:[%s3224 + $0x148] sm:$0xff]
    %v3267 = vld [vmem:[%s3224 + $0x150] sm:$0xff]
    %v3268 = vld [vmem:[%s3224 + $0x158] sm:$0xff]
    %v3269 = vld [vmem:[%s3224 + $0x160] sm:$0xff]
    %v3270 = vld [vmem:[%s3224 + $0x168] sm:$0xff]
    %v3271 = vld [vmem:[%s3224 + $0x170] sm:$0xff]
    %v3272 = vld [vmem:[%s3224 + $0x178] sm:$0xff]
    %v3273 = vld [vmem:[%s3224 + $0x180] sm:$0xff]
    %v3274 = vld [vmem:[%s3224 + $0x188] sm:$0xff]
    %v3275 = vld [vmem:[%s3224 + $0x190] sm:$0xff]
    %v3276 = vld [vmem:[%s3224 + $0x198] sm:$0xff]
    %v3277 = vld [vmem:[%s3224 + $0x1a0] sm:$0xff]
    %v3278 = vld [vmem:[%s3224 + $0x1a8] sm:$0xff]
    %v3279 = vld [vmem:[%s3224 + $0x1b0] sm:$0xff]
    %v3280 = vld [vmem:[%s3224 + $0x1b8] sm:$0xff]
    %v3281 = vld [vmem:[%s3224 + $0x1c0] sm:$0xff]
    %v3282 = vld [vmem:[%s3224 + $0x1c8] sm:$0xff]
    %v3283 = vld [vmem:[%s3224 + $0x1d0] sm:$0xff]
    %v3284 = vld [vmem:[%s3224 + $0x1d8] sm:$0xff]
    %v3285 = vld [vmem:[%s3224 + $0x1e0] sm:$0xff]
    %v3286 = vld [vmem:[%s3224 + $0x1e8] sm:$0xff]
    %v3287 = vld [vmem:[%s3224 + $0x1f0] sm:$0xff]
    %v3288 = vld [vmem:[%s3224 + $0x1f8] sm:$0xff]
    %v3289 = vld [vmem:[%s3224 + $0x200] sm:$0xff]
    %v3290 = vld [vmem:[%s3224 + $0x208] sm:$0xff]
    %v3291 = vld [vmem:[%s3224 + $0x210] sm:$0xff]
    %v3292 = vld [vmem:[%s3224 + $0x218] sm:$0xff]
    %v3293 = vld [vmem:[%s3224 + $0x220] sm:$0xff]
    %v3294 = vld [vmem:[%s3224 + $0x228] sm:$0xff]
    %v3295 = vld [vmem:[%s3224 + $0x230] sm:$0xff]
    %v3296 = vld [vmem:[%s3224 + $0x238] sm:$0xff]
    %v3297 = vld [vmem:[%s3224 + $0x240] sm:$0xff]
    %v3298 = vld [vmem:[%s3224 + $0x248] sm:$0xff]
    %v3299 = vld [vmem:[%s3224 + $0x250] sm:$0xff]
    %v3300 = vld [vmem:[%s3224 + $0x258] sm:$0xff]
    %v3301 = vld [vmem:[%s3224 + $0x260] sm:$0xff]
    %v3302 = vld [vmem:[%s3224 + $0x268] sm:$0xff]
    %v3303 = vld [vmem:[%s3224 + $0x270] sm:$0xff]
    %v3304 = vld [vmem:[%s3224 + $0x278] sm:$0xff]
    %v3308 = vrot.slane %v3221, 2
    %v3309 = vrot.slane %v3222, 2
    %v3310 = vrot.slane %v3223, 2
    %v3313 = vsel %vm190, %v3310, 0
    %3315 = vmatprep.subr.mxu0 %v3226
    %3316 = vmatpush1.msra.mxu0 %v3225
    %3317 = vmatprep.subr.mxu0 %v3228
    %3318 = vmatpush1.msra.mxu0 %v3227
    %3319 = vmatprep.subr.mxu0 %v3230
    %3320 = vmatpush1.msra.mxu0 %v3229
    %3321 = vmatprep.subr.mxu0 %v3232
    %3322 = vmatpush1.msra.mxu0 %v3231
    %3323 = vmatprep.subr.mxu0 %v3234
    %3324 = vmatpush1.msra.mxu0 %v3233
    %3325 = vmatprep.subr.mxu0 %v3236
    %3326 = vmatpush1.msra.mxu0 %v3235
    %3327 = vmatprep.subr.mxu0 %v3238
    %3328 = vmatpush1.msra.mxu0 %v3237
    %3329 = vmatprep.subr.mxu0 %v3240
    %3330 = vmatpush1.msra.mxu0 %v3239
    %3331 = vmatprep.subr.mxu0 %v3242
    %3332 = vmatpush1.msra.mxu0 %v3241
    %3333 = vmatprep.subr.mxu0 %v3244
    %3334 = vmatpush1.msra.mxu0 %v3243
    %3335 = vmatprep.subr.mxu0 %v3246
    %3336 = vmatpush1.msra.mxu0 %v3245
    %3337 = vmatprep.subr.mxu0 %v3248
    %3338 = vmatpush1.msra.mxu0 %v3247
    %3339 = vmatprep.subr.mxu0 %v3250
    %3340 = vmatpush1.msra.mxu0 %v3249
    %3341 = vmatprep.subr.mxu0 %v3252
    %3342 = vmatpush1.msra.mxu0 %v3251
    %3343 = vmatprep.subr.mxu0 %v3254
    %3344 = vmatpush1.msra.mxu0 %v3253
    %3345 = vmatprep.subr.mxu0 %v3256
    %3346 = vmatpush1.msra.mxu0 %v3255
    %3347 = vmatprep.subr.mxu0 %v3258
    %3348 = vmatpush1.msra.mxu0 %v3257
    %3349 = vmatprep.subr.mxu0 %v3260
    %3350 = vmatpush1.msra.mxu0 %v3259
    %3351 = vmatprep.subr.mxu0 %v3262
    %3352 = vmatpush1.msra.mxu0 %v3261
    %3353 = vmatprep.subr.mxu0 %v3264
    %3354 = vmatpush1.msra.mxu0 %v3263
    %3355 = vmatprep.subr.mxu0 %v3266
    %3356 = vmatpush1.msra.mxu0 %v3265
    %3357 = vmatprep.subr.mxu0 %v3268
    %3358 = vmatpush1.msra.mxu0 %v3267
    %3359 = vmatprep.subr.mxu0 %v3270
    %3360 = vmatpush1.msra.mxu0 %v3269
    %3361 = vmatprep.subr.mxu0 %v3272
    %3362 = vmatpush1.msra.mxu0 %v3271
    %3363 = vmatprep.subr.mxu0 %v3274
    %3364 = vmatpush1.msra.mxu0 %v3273
    %3365 = vmatprep.subr.mxu0 %v3276
    %3366 = vmatpush1.msra.mxu0 %v3275
    %3367 = vmatprep.subr.mxu0 %v3278
    %3368 = vmatpush1.msra.mxu0 %v3277
    %3369 = vmatprep.subr.mxu0 %v3280
    %3370 = vmatpush1.msra.mxu0 %v3279
    %3371 = vmatprep.subr.mxu0 %v3282
    %3372 = vmatpush1.msra.mxu0 %v3281
    %3373 = vmatprep.subr.mxu0 %v3284
    %3374 = vmatpush1.msra.mxu0 %v3283
    %3375 = vmatprep.subr.mxu0 %v3286
    %3376 = vmatpush1.msra.mxu0 %v3285
    %3377 = vmatprep.subr.mxu0 %v3288
    %3378 = vmatpush1.msra.mxu0 %v3287
    %3379 = vmatprep.mubr.f32.mxu0 %v3309
    %3380 = vmatmul.mubr.f32.gmra.mrb[0].mxu0 %v3308
    %v3381 = vpop.f32.mrb[0].mxu0
    %v3382 = vadd.f32 0.0, %v3381
    %v3383 = vpop.f32.mrb[0].mxu0
    %v3384 = vadd.f32 0.0, %v3383
    %3385 = vdwg.mxu0
    %3386 = vmatprep.subr.mxu0 %v3290
    %3387 = vmatpush1.msra.mxu0 %v3289
    %3388 = vmatprep.subr.mxu0 %v3292
    %3389 = vmatpush1.msra.mxu0 %v3291
    %3390 = vmatprep.subr.mxu0 %v3294
    %3391 = vmatpush1.msra.mxu0 %v3293
    %3392 = vmatprep.subr.mxu0 %v3296
    %3393 = vmatpush1.msra.mxu0 %v3295
    %3394 = vmatprep.subr.mxu0 %v3298
    %3395 = vmatpush1.msra.mxu0 %v3297
    %3396 = vmatprep.subr.mxu0 %v3300
    %3397 = vmatpush1.msra.mxu0 %v3299
    %3398 = vmatprep.subr.mxu0 %v3302
    %3399 = vmatpush1.msra.mxu0 %v3301
    %3400 = vmatprep.subr.mxu0 %v3304
    %3401 = vmatpush1.msra.mxu0 %v3303
    %3402 = vmatprep.subr.mxu0 0.0
    %3403 = vmatpush1.msra.mxu0 0.0
    %3404 = vmatprep.subr.mxu0 0.0
    %3405 = vmatpush1.msra.mxu0 0.0
    %3406 = vmatprep.subr.mxu0 0.0
    %3407 = vmatpush1.msra.mxu0 0.0
    %3408 = vmatprep.subr.mxu0 0.0
    %3409 = vmatpush1.msra.mxu0 0.0
    %3410 = vmatprep.subr.mxu0 0.0
    %3411 = vmatpush1.msra.mxu0 0.0
    %3412 = vmatprep.subr.mxu0 0.0
    %3413 = vmatpush1.msra.mxu0 0.0
    %3414 = vmatprep.subr.mxu0 0.0
    %3415 = vmatpush1.msra.mxu0 0.0
    %3416 = vmatprep.subr.mxu0 0.0
    %3417 = vmatpush1.msra.mxu0 0.0
    %3418 = vmatprep.subr.mxu0 0.0
    %3419 = vmatpush1.msra.mxu0 0.0
    %3420 = vmatprep.subr.mxu0 0.0
    %3421 = vmatpush1.msra.mxu0 0.0
    %3422 = vmatprep.subr.mxu0 0.0
    %3423 = vmatpush1.msra.mxu0 0.0
    %3424 = vmatprep.subr.mxu0 0.0
    %3425 = vmatpush1.msra.mxu0 0.0
    %3426 = vmatprep.subr.mxu0 0.0
    %3427 = vmatpush1.msra.mxu0 0.0
    %3428 = vmatprep.subr.mxu0 0.0
    %3429 = vmatpush1.msra.mxu0 0.0
    %3430 = vmatprep.subr.mxu0 0.0
    %3431 = vmatpush1.msra.mxu0 0.0
    %3432 = vmatprep.subr.mxu0 0.0
    %3433 = vmatpush1.msra.mxu0 0.0
    %3434 = vmatprep.subr.mxu0 0.0
    %3435 = vmatpush1.msra.mxu0 0.0
    %3436 = vmatprep.subr.mxu0 0.0
    %3437 = vmatpush1.msra.mxu0 0.0
    %3438 = vmatprep.subr.mxu0 0.0
    %3439 = vmatpush1.msra.mxu0 0.0
    %3440 = vmatprep.subr.mxu0 0.0
    %3441 = vmatpush1.msra.mxu0 0.0
    %3442 = vmatprep.subr.mxu0 0.0
    %3443 = vmatpush1.msra.mxu0 0.0
    %3444 = vmatprep.subr.mxu0 0.0
    %3445 = vmatpush1.msra.mxu0 0.0
    %3446 = vmatprep.subr.mxu0 0.0
    %3447 = vmatpush1.msra.mxu0 0.0
    %3448 = vmatprep.subr.mxu0 0.0
    %3449 = vmatpush1.msra.mxu0 0.0
    %3450 = vmatprep.mubr.f32.mxu0 0.0
    %3451 = vmatmul.mubr.f32.gmra.mrb[0].mxu0 %v3313
    %v3452 = vpop.f32.mrb[0].mxu0
    %v3453 = vadd.f32 %v3382, %v3452
    %v3454 = vpop.f32.mrb[0].mxu0
    %v3455 = vadd.f32 %v3384, %v3454
    %3456 = vdwg.mxu0
    %v3457 = vadd.f32 %v3219, %v3453
    %v3458 = vadd.f32 %v3220, %v3455
    %v3459 = vld [vmem:[#allocation4 + $0x20] sm:$0x30]
    %v3460 = vld [vmem:[#allocation4 + $0x28] sm:$0x30]
    %v3461 = vld [vmem:[#allocation4 + $0x30] sm:$0x30]
    %s3462 = scalar_lea.vmem [#allocation16], 3840
    %v3463 = vld [vmem:[%s3462] sm:$0xff]
    %v3464 = vld [vmem:[%s3462 + $0x8] sm:$0xff]
    %v3465 = vld [vmem:[%s3462 + $0x10] sm:$0xff]
    %v3466 = vld [vmem:[%s3462 + $0x18] sm:$0xff]
    %v3467 = vld [vmem:[%s3462 + $0x20] sm:$0xff]
    %v3468 = vld [vmem:[%s3462 + $0x28] sm:$0xff]
    %v3469 = vld [vmem:[%s3462 + $0x30] sm:$0xff]
    %v3470 = vld [vmem:[%s3462 + $0x38] sm:$0xff]
    %v3471 = vld [vmem:[%s3462 + $0x40] sm:$0xff]
    %v3472 = vld [vmem:[%s3462 + $0x48] sm:$0xff]
    %v3473 = vld [vmem:[%s3462 + $0x50] sm:$0xff]
    %v3474 = vld [vmem:[%s3462 + $0x58] sm:$0xff]
    %v3475 = vld [vmem:[%s3462 + $0x60] sm:$0xff]
    %v3476 = vld [vmem:[%s3462 + $0x68] sm:$0xff]
    %v3477 = vld [vmem:[%s3462 + $0x70] sm:$0xff]
    %v3478 = vld [vmem:[%s3462 + $0x78] sm:$0xff]
    %v3479 = vld [vmem:[%s3462 + $0x80] sm:$0xff]
    %v3480 = vld [vmem:[%s3462 + $0x88] sm:$0xff]
    %v3481 = vld [vmem:[%s3462 + $0x90] sm:$0xff]
    %v3482 = vld [vmem:[%s3462 + $0x98] sm:$0xff]
    %v3483 = vld [vmem:[%s3462 + $0xa0] sm:$0xff]
    %v3484 = vld [vmem:[%s3462 + $0xa8] sm:$0xff]
    %v3485 = vld [vmem:[%s3462 + $0xb0] sm:$0xff]
    %v3486 = vld [vmem:[%s3462 + $0xb8] sm:$0xff]
    %v3487 = vld [vmem:[%s3462 + $0xc0] sm:$0xff]
    %v3488 = vld [vmem:[%s3462 + $0xc8] sm:$0xff]
    %v3489 = vld [vmem:[%s3462 + $0xd0] sm:$0xff]
    %v3490 = vld [vmem:[%s3462 + $0xd8] sm:$0xff]
    %v3491 = vld [vmem:[%s3462 + $0xe0] sm:$0xff]
    %v3492 = vld [vmem:[%s3462 + $0xe8] sm:$0xff]
    %v3493 = vld [vmem:[%s3462 + $0xf0] sm:$0xff]
    %v3494 = vld [vmem:[%s3462 + $0xf8] sm:$0xff]
    %v3495 = vld [vmem:[%s3462 + $0x100] sm:$0xff]
    %v3496 = vld [vmem:[%s3462 + $0x108] sm:$0xff]
    %v3497 = vld [vmem:[%s3462 + $0x110] sm:$0xff]
    %v3498 = vld [vmem:[%s3462 + $0x118] sm:$0xff]
    %v3499 = vld [vmem:[%s3462 + $0x120] sm:$0xff]
    %v3500 = vld [vmem:[%s3462 + $0x128] sm:$0xff]
    %v3501 = vld [vmem:[%s3462 + $0x130] sm:$0xff]
    %v3502 = vld [vmem:[%s3462 + $0x138] sm:$0xff]
    %v3503 = vld [vmem:[%s3462 + $0x140] sm:$0xff]
    %v3504 = vld [vmem:[%s3462 + $0x148] sm:$0xff]
    %v3505 = vld [vmem:[%s3462 + $0x150] sm:$0xff]
    %v3506 = vld [vmem:[%s3462 + $0x158] sm:$0xff]
    %v3507 = vld [vmem:[%s3462 + $0x160] sm:$0xff]
    %v3508 = vld [vmem:[%s3462 + $0x168] sm:$0xff]
    %v3509 = vld [vmem:[%s3462 + $0x170] sm:$0xff]
    %v3510 = vld [vmem:[%s3462 + $0x178] sm:$0xff]
    %v3511 = vld [vmem:[%s3462 + $0x180] sm:$0xff]
    %v3512 = vld [vmem:[%s3462 + $0x188] sm:$0xff]
    %v3513 = vld [vmem:[%s3462 + $0x190] sm:$0xff]
    %v3514 = vld [vmem:[%s3462 + $0x198] sm:$0xff]
    %v3515 = vld [vmem:[%s3462 + $0x1a0] sm:$0xff]
    %v3516 = vld [vmem:[%s3462 + $0x1a8] sm:$0xff]
    %v3517 = vld [vmem:[%s3462 + $0x1b0] sm:$0xff]
    %v3518 = vld [vmem:[%s3462 + $0x1b8] sm:$0xff]
    %v3519 = vld [vmem:[%s3462 + $0x1c0] sm:$0xff]
    %v3520 = vld [vmem:[%s3462 + $0x1c8] sm:$0xff]
    %v3521 = vld [vmem:[%s3462 + $0x1d0] sm:$0xff]
    %v3522 = vld [vmem:[%s3462 + $0x1d8] sm:$0xff]
    %v3523 = vld [vmem:[%s3462 + $0x1e0] sm:$0xff]
    %v3524 = vld [vmem:[%s3462 + $0x1e8] sm:$0xff]
    %v3525 = vld [vmem:[%s3462 + $0x1f0] sm:$0xff]
    %v3526 = vld [vmem:[%s3462 + $0x1f8] sm:$0xff]
    %v3527 = vld [vmem:[%s3462 + $0x200] sm:$0xff]
    %v3528 = vld [vmem:[%s3462 + $0x208] sm:$0xff]
    %v3529 = vld [vmem:[%s3462 + $0x210] sm:$0xff]
    %v3530 = vld [vmem:[%s3462 + $0x218] sm:$0xff]
    %v3531 = vld [vmem:[%s3462 + $0x220] sm:$0xff]
    %v3532 = vld [vmem:[%s3462 + $0x228] sm:$0xff]
    %v3533 = vld [vmem:[%s3462 + $0x230] sm:$0xff]
    %v3534 = vld [vmem:[%s3462 + $0x238] sm:$0xff]
    %v3535 = vld [vmem:[%s3462 + $0x240] sm:$0xff]
    %v3536 = vld [vmem:[%s3462 + $0x248] sm:$0xff]
    %v3537 = vld [vmem:[%s3462 + $0x250] sm:$0xff]
    %v3538 = vld [vmem:[%s3462 + $0x258] sm:$0xff]
    %v3539 = vld [vmem:[%s3462 + $0x260] sm:$0xff]
    %v3540 = vld [vmem:[%s3462 + $0x268] sm:$0xff]
    %v3541 = vld [vmem:[%s3462 + $0x270] sm:$0xff]
    %v3542 = vld [vmem:[%s3462 + $0x278] sm:$0xff]
    %v3546 = vrot.slane %v3459, 4
    %v3547 = vrot.slane %v3460, 4
    %v3548 = vrot.slane %v3461, 4
    %v3551 = vsel %vm190, %v3548, 0
    %3553 = vmatprep.subr.mxu0 %v3464
    %3554 = vmatpush1.msra.mxu0 %v3463
    %3555 = vmatprep.subr.mxu0 %v3466
    %3556 = vmatpush1.msra.mxu0 %v3465
    %3557 = vmatprep.subr.mxu0 %v3468
    %3558 = vmatpush1.msra.mxu0 %v3467
    %3559 = vmatprep.subr.mxu0 %v3470
    %3560 = vmatpush1.msra.mxu0 %v3469
    %3561 = vmatprep.subr.mxu0 %v3472
    %3562 = vmatpush1.msra.mxu0 %v3471
    %3563 = vmatprep.subr.mxu0 %v3474
    %3564 = vmatpush1.msra.mxu0 %v3473
    %3565 = vmatprep.subr.mxu0 %v3476
    %3566 = vmatpush1.msra.mxu0 %v3475
    %3567 = vmatprep.subr.mxu0 %v3478
    %3568 = vmatpush1.msra.mxu0 %v3477
    %3569 = vmatprep.subr.mxu0 %v3480
    %3570 = vmatpush1.msra.mxu0 %v3479
    %3571 = vmatprep.subr.mxu0 %v3482
    %3572 = vmatpush1.msra.mxu0 %v3481
    %3573 = vmatprep.subr.mxu0 %v3484
    %3574 = vmatpush1.msra.mxu0 %v3483
    %3575 = vmatprep.subr.mxu0 %v3486
    %3576 = vmatpush1.msra.mxu0 %v3485
    %3577 = vmatprep.subr.mxu0 %v3488
    %3578 = vmatpush1.msra.mxu0 %v3487
    %3579 = vmatprep.subr.mxu0 %v3490
    %3580 = vmatpush1.msra.mxu0 %v3489
    %3581 = vmatprep.subr.mxu0 %v3492
    %3582 = vmatpush1.msra.mxu0 %v3491
    %3583 = vmatprep.subr.mxu0 %v3494
    %3584 = vmatpush1.msra.mxu0 %v3493
    %3585 = vmatprep.subr.mxu0 %v3496
    %3586 = vmatpush1.msra.mxu0 %v3495
    %3587 = vmatprep.subr.mxu0 %v3498
    %3588 = vmatpush1.msra.mxu0 %v3497
    %3589 = vmatprep.subr.mxu0 %v3500
    %3590 = vmatpush1.msra.mxu0 %v3499
    %3591 = vmatprep.subr.mxu0 %v3502
    %3592 = vmatpush1.msra.mxu0 %v3501
    %3593 = vmatprep.subr.mxu0 %v3504
    %3594 = vmatpush1.msra.mxu0 %v3503
    %3595 = vmatprep.subr.mxu0 %v3506
    %3596 = vmatpush1.msra.mxu0 %v3505
    %3597 = vmatprep.subr.mxu0 %v3508
    %3598 = vmatpush1.msra.mxu0 %v3507
    %3599 = vmatprep.subr.mxu0 %v3510
    %3600 = vmatpush1.msra.mxu0 %v3509
    %3601 = vmatprep.subr.mxu0 %v3512
    %3602 = vmatpush1.msra.mxu0 %v3511
    %3603 = vmatprep.subr.mxu0 %v3514
    %3604 = vmatpush1.msra.mxu0 %v3513
    %3605 = vmatprep.subr.mxu0 %v3516
    %3606 = vmatpush1.msra.mxu0 %v3515
    %3607 = vmatprep.subr.mxu0 %v3518
    %3608 = vmatpush1.msra.mxu0 %v3517
    %3609 = vmatprep.subr.mxu0 %v3520
    %3610 = vmatpush1.msra.mxu0 %v3519
    %3611 = vmatprep.subr.mxu0 %v3522
    %3612 = vmatpush1.msra.mxu0 %v3521
    %3613 = vmatprep.subr.mxu0 %v3524
    %3614 = vmatpush1.msra.mxu0 %v3523
    %3615 = vmatprep.subr.mxu0 %v3526
    %3616 = vmatpush1.msra.mxu0 %v3525
    %3617 = vmatprep.mubr.f32.mxu0 %v3547
    %3618 = vmatmul.mubr.f32.gmra.mrb[0].mxu0 %v3546
    %v3619 = vpop.f32.mrb[0].mxu0
    %v3620 = vadd.f32 0.0, %v3619
    %v3621 = vpop.f32.mrb[0].mxu0
    %v3622 = vadd.f32 0.0, %v3621
    %3623 = vdwg.mxu0
    %3624 = vmatprep.subr.mxu0 %v3528
    %3625 = vmatpush1.msra.mxu0 %v3527
    %3626 = vmatprep.subr.mxu0 %v3530
    %3627 = vmatpush1.msra.mxu0 %v3529
    %3628 = vmatprep.subr.mxu0 %v3532
    %3629 = vmatpush1.msra.mxu0 %v3531
    %3630 = vmatprep.subr.mxu0 %v3534
    %3631 = vmatpush1.msra.mxu0 %v3533
    %3632 = vmatprep.subr.mxu0 %v3536
    %3633 = vmatpush1.msra.mxu0 %v3535
    %3634 = vmatprep.subr.mxu0 %v3538
    %3635 = vmatpush1.msra.mxu0 %v3537
    %3636 = vmatprep.subr.mxu0 %v3540
    %3637 = vmatpush1.msra.mxu0 %v3539
    %3638 = vmatprep.subr.mxu0 %v3542
    %3639 = vmatpush1.msra.mxu0 %v3541
    %3640 = vmatprep.subr.mxu0 0.0
    %3641 = vmatpush1.msra.mxu0 0.0
    %3642 = vmatprep.subr.mxu0 0.0
    %3643 = vmatpush1.msra.mxu0 0.0
    %3644 = vmatprep.subr.mxu0 0.0
    %3645 = vmatpush1.msra.mxu0 0.0
    %3646 = vmatprep.subr.mxu0 0.0
    %3647 = vmatpush1.msra.mxu0 0.0
    %3648 = vmatprep.subr.mxu0 0.0
    %3649 = vmatpush1.msra.mxu0 0.0
    %3650 = vmatprep.subr.mxu0 0.0
    %3651 = vmatpush1.msra.mxu0 0.0
    %3652 = vmatprep.subr.mxu0 0.0
    %3653 = vmatpush1.msra.mxu0 0.0
    %3654 = vmatprep.subr.mxu0 0.0
    %3655 = vmatpush1.msra.mxu0 0.0
    %3656 = vmatprep.subr.mxu0 0.0
    %3657 = vmatpush1.msra.mxu0 0.0
    %3658 = vmatprep.subr.mxu0 0.0
    %3659 = vmatpush1.msra.mxu0 0.0
    %3660 = vmatprep.subr.mxu0 0.0
    %3661 = vmatpush1.msra.mxu0 0.0
    %3662 = vmatprep.subr.mxu0 0.0
    %3663 = vmatpush1.msra.mxu0 0.0
    %3664 = vmatprep.subr.mxu0 0.0
    %3665 = vmatpush1.msra.mxu0 0.0
    %3666 = vmatprep.subr.mxu0 0.0
    %3667 = vmatpush1.msra.mxu0 0.0
    %3668 = vmatprep.subr.mxu0 0.0
    %3669 = vmatpush1.msra.mxu0 0.0
    %3670 = vmatprep.subr.mxu0 0.0
    %3671 = vmatpush1.msra.mxu0 0.0
    %3672 = vmatprep.subr.mxu0 0.0
    %3673 = vmatpush1.msra.mxu0 0.0
    %3674 = vmatprep.subr.mxu0 0.0
    %3675 = vmatpush1.msra.mxu0 0.0
    %3676 = vmatprep.subr.mxu0 0.0
    %3677 = vmatpush1.msra.mxu0 0.0
    %3678 = vmatprep.subr.mxu0 0.0
    %3679 = vmatpush1.msra.mxu0 0.0
    %3680 = vmatprep.subr.mxu0 0.0
    %3681 = vmatpush1.msra.mxu0 0.0
    %3682 = vmatprep.subr.mxu0 0.0
    %3683 = vmatpush1.msra.mxu0 0.0
    %3684 = vmatprep.subr.mxu0 0.0
    %3685 = vmatpush1.msra.mxu0 0.0
    %3686 = vmatprep.subr.mxu0 0.0
    %3687 = vmatpush1.msra.mxu0 0.0
    %3688 = vmatprep.mubr.f32.mxu0 0.0
    %3689 = vmatmul.mubr.f32.gmra.mrb[0].mxu0 %v3551
    %v3690 = vpop.f32.mrb[0].mxu0
    %v3691 = vadd.f32 %v3620, %v3690
    %v3692 = vpop.f32.mrb[0].mxu0
    %v3693 = vadd.f32 %v3622, %v3692
    %3694 = vdwg.mxu0
    %v3695 = vadd.f32 %v3457, %v3691
    %v3696 = vadd.f32 %v3458, %v3693
    %v3697 = vld [vmem:[#allocation4 + $0x20] sm:$0xc0]
    %v3698 = vld [vmem:[#allocation4 + $0x28] sm:$0xc0]
    %v3699 = vld [vmem:[#allocation4 + $0x30] sm:$0xc0]
    %s3700 = scalar_lea.vmem [#allocation16], 4480
    %v3701 = vld [vmem:[%s3700] sm:$0xff]
    %v3702 = vld [vmem:[%s3700 + $0x8] sm:$0xff]
    %v3703 = vld [vmem:[%s3700 + $0x10] sm:$0xff]
    %v3704 = vld [vmem:[%s3700 + $0x18] sm:$0xff]
    %v3705 = vld [vmem:[%s3700 + $0x20] sm:$0xff]
    %v3706 = vld [vmem:[%s3700 + $0x28] sm:$0xff]
    %v3707 = vld [vmem:[%s3700 + $0x30] sm:$0xff]
    %v3708 = vld [vmem:[%s3700 + $0x38] sm:$0xff]
    %v3709 = vld [vmem:[%s3700 + $0x40] sm:$0xff]
    %v3710 = vld [vmem:[%s3700 + $0x48] sm:$0xff]
    %v3711 = vld [vmem:[%s3700 + $0x50] sm:$0xff]
    %v3712 = vld [vmem:[%s3700 + $0x58] sm:$0xff]
    %v3713 = vld [vmem:[%s3700 + $0x60] sm:$0xff]
    %v3714 = vld [vmem:[%s3700 + $0x68] sm:$0xff]
    %v3715 = vld [vmem:[%s3700 + $0x70] sm:$0xff]
    %v3716 = vld [vmem:[%s3700 + $0x78] sm:$0xff]
    %v3717 = vld [vmem:[%s3700 + $0x80] sm:$0xff]
    %v3718 = vld [vmem:[%s3700 + $0x88] sm:$0xff]
    %v3719 = vld [vmem:[%s3700 + $0x90] sm:$0xff]
    %v3720 = vld [vmem:[%s3700 + $0x98] sm:$0xff]
    %v3721 = vld [vmem:[%s3700 + $0xa0] sm:$0xff]
    %v3722 = vld [vmem:[%s3700 + $0xa8] sm:$0xff]
    %v3723 = vld [vmem:[%s3700 + $0xb0] sm:$0xff]
    %v3724 = vld [vmem:[%s3700 + $0xb8] sm:$0xff]
    %v3725 = vld [vmem:[%s3700 + $0xc0] sm:$0xff]
    %v3726 = vld [vmem:[%s3700 + $0xc8] sm:$0xff]
    %v3727 = vld [vmem:[%s3700 + $0xd0] sm:$0xff]
    %v3728 = vld [vmem:[%s3700 + $0xd8] sm:$0xff]
    %v3729 = vld [vmem:[%s3700 + $0xe0] sm:$0xff]
    %v3730 = vld [vmem:[%s3700 + $0xe8] sm:$0xff]
    %v3731 = vld [vmem:[%s3700 + $0xf0] sm:$0xff]
    %v3732 = vld [vmem:[%s3700 + $0xf8] sm:$0xff]
    %v3733 = vld [vmem:[%s3700 + $0x100] sm:$0xff]
    %v3734 = vld [vmem:[%s3700 + $0x108] sm:$0xff]
    %v3735 = vld [vmem:[%s3700 + $0x110] sm:$0xff]
    %v3736 = vld [vmem:[%s3700 + $0x118] sm:$0xff]
    %v3737 = vld [vmem:[%s3700 + $0x120] sm:$0xff]
    %v3738 = vld [vmem:[%s3700 + $0x128] sm:$0xff]
    %v3739 = vld [vmem:[%s3700 + $0x130] sm:$0xff]
    %v3740 = vld [vmem:[%s3700 + $0x138] sm:$0xff]
    %v3741 = vld [vmem:[%s3700 + $0x140] sm:$0xff]
    %v3742 = vld [vmem:[%s3700 + $0x148] sm:$0xff]
    %v3743 = vld [vmem:[%s3700 + $0x150] sm:$0xff]
    %v3744 = vld [vmem:[%s3700 + $0x158] sm:$0xff]
    %v3745 = vld [vmem:[%s3700 + $0x160] sm:$0xff]
    %v3746 = vld [vmem:[%s3700 + $0x168] sm:$0xff]
    %v3747 = vld [vmem:[%s3700 + $0x170] sm:$0xff]
    %v3748 = vld [vmem:[%s3700 + $0x178] sm:$0xff]
    %v3749 = vld [vmem:[%s3700 + $0x180] sm:$0xff]
    %v3750 = vld [vmem:[%s3700 + $0x188] sm:$0xff]
    %v3751 = vld [vmem:[%s3700 + $0x190] sm:$0xff]
    %v3752 = vld [vmem:[%s3700 + $0x198] sm:$0xff]
    %v3753 = vld [vmem:[%s3700 + $0x1a0] sm:$0xff]
    %v3754 = vld [vmem:[%s3700 + $0x1a8] sm:$0xff]
    %v3755 = vld [vmem:[%s3700 + $0x1b0] sm:$0xff]
    %v3756 = vld [vmem:[%s3700 + $0x1b8] sm:$0xff]
    %v3757 = vld [vmem:[%s3700 + $0x1c0] sm:$0xff]
    %v3758 = vld [vmem:[%s3700 + $0x1c8] sm:$0xff]
    %v3759 = vld [vmem:[%s3700 + $0x1d0] sm:$0xff]
    %v3760 = vld [vmem:[%s3700 + $0x1d8] sm:$0xff]
    %v3761 = vld [vmem:[%s3700 + $0x1e0] sm:$0xff]
    %v3762 = vld [vmem:[%s3700 + $0x1e8] sm:$0xff]
    %v3763 = vld [vmem:[%s3700 + $0x1f0] sm:$0xff]
    %v3764 = vld [vmem:[%s3700 + $0x1f8] sm:$0xff]
    %v3765 = vld [vmem:[%s3700 + $0x200] sm:$0xff]
    %v3766 = vld [vmem:[%s3700 + $0x208] sm:$0xff]
    %v3767 = vld [vmem:[%s3700 + $0x210] sm:$0xff]
    %v3768 = vld [vmem:[%s3700 + $0x218] sm:$0xff]
    %v3769 = vld [vmem:[%s3700 + $0x220] sm:$0xff]
    %v3770 = vld [vmem:[%s3700 + $0x228] sm:$0xff]
    %v3771 = vld [vmem:[%s3700 + $0x230] sm:$0xff]
    %v3772 = vld [vmem:[%s3700 + $0x238] sm:$0xff]
    %v3773 = vld [vmem:[%s3700 + $0x240] sm:$0xff]
    %v3774 = vld [vmem:[%s3700 + $0x248] sm:$0xff]
    %v3775 = vld [vmem:[%s3700 + $0x250] sm:$0xff]
    %v3776 = vld [vmem:[%s3700 + $0x258] sm:$0xff]
    %v3777 = vld [vmem:[%s3700 + $0x260] sm:$0xff]
    %v3778 = vld [vmem:[%s3700 + $0x268] sm:$0xff]
    %v3779 = vld [vmem:[%s3700 + $0x270] sm:$0xff]
    %v3780 = vld [vmem:[%s3700 + $0x278] sm:$0xff]
    %v3784 = vrot.slane %v3697, 6
    %v3785 = vrot.slane %v3698, 6
    %v3786 = vrot.slane %v3699, 6
    %v3789 = vsel %vm190, %v3786, 0
    %3791 = vmatprep.subr.mxu0 %v3702
    %3792 = vmatpush1.msra.mxu0 %v3701
    %3793 = vmatprep.subr.mxu0 %v3704
    %3794 = vmatpush1.msra.mxu0 %v3703
    %3795 = vmatprep.subr.mxu0 %v3706
    %3796 = vmatpush1.msra.mxu0 %v3705
    %3797 = vmatprep.subr.mxu0 %v3708
    %3798 = vmatpush1.msra.mxu0 %v3707
    %3799 = vmatprep.subr.mxu0 %v3710
    %3800 = vmatpush1.msra.mxu0 %v3709
    %3801 = vmatprep.subr.mxu0 %v3712
    %3802 = vmatpush1.msra.mxu0 %v3711
    %3803 = vmatprep.subr.mxu0 %v3714
    %3804 = vmatpush1.msra.mxu0 %v3713
    %3805 = vmatprep.subr.mxu0 %v3716
    %3806 = vmatpush1.msra.mxu0 %v3715
    %3807 = vmatprep.subr.mxu0 %v3718
    %3808 = vmatpush1.msra.mxu0 %v3717
    %3809 = vmatprep.subr.mxu0 %v3720
    %3810 = vmatpush1.msra.mxu0 %v3719
    %3811 = vmatprep.subr.mxu0 %v3722
    %3812 = vmatpush1.msra.mxu0 %v3721
    %3813 = vmatprep.subr.mxu0 %v3724
    %3814 = vmatpush1.msra.mxu0 %v3723
    %3815 = vmatprep.subr.mxu0 %v3726
    %3816 = vmatpush1.msra.mxu0 %v3725
    %3817 = vmatprep.subr.mxu0 %v3728
    %3818 = vmatpush1.msra.mxu0 %v3727
    %3819 = vmatprep.subr.mxu0 %v3730
    %3820 = vmatpush1.msra.mxu0 %v3729
    %3821 = vmatprep.subr.mxu0 %v3732
    %3822 = vmatpush1.msra.mxu0 %v3731
    %3823 = vmatprep.subr.mxu0 %v3734
    %3824 = vmatpush1.msra.mxu0 %v3733
    %3825 = vmatprep.subr.mxu0 %v3736
    %3826 = vmatpush1.msra.mxu0 %v3735
    %3827 = vmatprep.subr.mxu0 %v3738
    %3828 = vmatpush1.msra.mxu0 %v3737
    %3829 = vmatprep.subr.mxu0 %v3740
    %3830 = vmatpush1.msra.mxu0 %v3739
    %3831 = vmatprep.subr.mxu0 %v3742
    %3832 = vmatpush1.msra.mxu0 %v3741
    %3833 = vmatprep.subr.mxu0 %v3744
    %3834 = vmatpush1.msra.mxu0 %v3743
    %3835 = vmatprep.subr.mxu0 %v3746
    %3836 = vmatpush1.msra.mxu0 %v3745
    %3837 = vmatprep.subr.mxu0 %v3748
    %3838 = vmatpush1.msra.mxu0 %v3747
    %3839 = vmatprep.subr.mxu0 %v3750
    %3840 = vmatpush1.msra.mxu0 %v3749
    %3841 = vmatprep.subr.mxu0 %v3752
    %3842 = vmatpush1.msra.mxu0 %v3751
    %3843 = vmatprep.subr.mxu0 %v3754
    %3844 = vmatpush1.msra.mxu0 %v3753
    %3845 = vmatprep.subr.mxu0 %v3756
    %3846 = vmatpush1.msra.mxu0 %v3755
    %3847 = vmatprep.subr.mxu0 %v3758
    %3848 = vmatpush1.msra.mxu0 %v3757
    %3849 = vmatprep.subr.mxu0 %v3760
    %3850 = vmatpush1.msra.mxu0 %v3759
    %3851 = vmatprep.subr.mxu0 %v3762
    %3852 = vmatpush1.msra.mxu0 %v3761
    %3853 = vmatprep.subr.mxu0 %v3764
    %3854 = vmatpush1.msra.mxu0 %v3763
    %3855 = vmatprep.mubr.f32.mxu0 %v3785
    %3856 = vmatmul.mubr.f32.gmra.mrb[0].mxu0 %v3784
    %v3857 = vpop.f32.mrb[0].mxu0
    %v3858 = vadd.f32 0.0, %v3857
    %v3859 = vpop.f32.mrb[0].mxu0
    %v3860 = vadd.f32 0.0, %v3859
    %3861 = vdwg.mxu0
    %3862 = vmatprep.subr.mxu0 %v3766
    %3863 = vmatpush1.msra.mxu0 %v3765
    %3864 = vmatprep.subr.mxu0 %v3768
    %3865 = vmatpush1.msra.mxu0 %v3767
    %3866 = vmatprep.subr.mxu0 %v3770
    %3867 = vmatpush1.msra.mxu0 %v3769
    %3868 = vmatprep.subr.mxu0 %v3772
    %3869 = vmatpush1.msra.mxu0 %v3771
    %3870 = vmatprep.subr.mxu0 %v3774
    %3871 = vmatpush1.msra.mxu0 %v3773
    %3872 = vmatprep.subr.mxu0 %v3776
    %3873 = vmatpush1.msra.mxu0 %v3775
    %3874 = vmatprep.subr.mxu0 %v3778
    %3875 = vmatpush1.msra.mxu0 %v3777
    %3876 = vmatprep.subr.mxu0 %v3780
    %3877 = vmatpush1.msra.mxu0 %v3779
    %3878 = vmatprep.subr.mxu0 0.0
    %3879 = vmatpush1.msra.mxu0 0.0
    %3880 = vmatprep.subr.mxu0 0.0
    %3881 = vmatpush1.msra.mxu0 0.0
    %3882 = vmatprep.subr.mxu0 0.0
    %3883 = vmatpush1.msra.mxu0 0.0
    %3884 = vmatprep.subr.mxu0 0.0
    %3885 = vmatpush1.msra.mxu0 0.0
    %3886 = vmatprep.subr.mxu0 0.0
    %3887 = vmatpush1.msra.mxu0 0.0
    %3888 = vmatprep.subr.mxu0 0.0
    %3889 = vmatpush1.msra.mxu0 0.0
    %3890 = vmatprep.subr.mxu0 0.0
    %3891 = vmatpush1.msra.mxu0 0.0
    %3892 = vmatprep.subr.mxu0 0.0
    %3893 = vmatpush1.msra.mxu0 0.0
    %3894 = vmatprep.subr.mxu0 0.0
    %3895 = vmatpush1.msra.mxu0 0.0
    %3896 = vmatprep.subr.mxu0 0.0
    %3897 = vmatpush1.msra.mxu0 0.0
    %3898 = vmatprep.subr.mxu0 0.0
    %3899 = vmatpush1.msra.mxu0 0.0
    %3900 = vmatprep.subr.mxu0 0.0
    %3901 = vmatpush1.msra.mxu0 0.0
    %3902 = vmatprep.subr.mxu0 0.0
    %3903 = vmatpush1.msra.mxu0 0.0
    %3904 = vmatprep.subr.mxu0 0.0
    %3905 = vmatpush1.msra.mxu0 0.0
    %3906 = vmatprep.subr.mxu0 0.0
    %3907 = vmatpush1.msra.mxu0 0.0
    %3908 = vmatprep.subr.mxu0 0.0
    %3909 = vmatpush1.msra.mxu0 0.0
    %3910 = vmatprep.subr.mxu0 0.0
    %3911 = vmatpush1.msra.mxu0 0.0
    %3912 = vmatprep.subr.mxu0 0.0
    %3913 = vmatpush1.msra.mxu0 0.0
    %3914 = vmatprep.subr.mxu0 0.0
    %3915 = vmatpush1.msra.mxu0 0.0
    %3916 = vmatprep.subr.mxu0 0.0
    %3917 = vmatpush1.msra.mxu0 0.0
    %3918 = vmatprep.subr.mxu0 0.0
    %3919 = vmatpush1.msra.mxu0 0.0
    %3920 = vmatprep.subr.mxu0 0.0
    %3921 = vmatpush1.msra.mxu0 0.0
    %3922 = vmatprep.subr.mxu0 0.0
    %3923 = vmatpush1.msra.mxu0 0.0
    %3924 = vmatprep.subr.mxu0 0.0
    %3925 = vmatpush1.msra.mxu0 0.0
    %3926 = vmatprep.mubr.f32.mxu0 0.0
    %3927 = vmatmul.mubr.f32.gmra.mrb[0].mxu0 %v3789
    %v3928 = vpop.f32.mrb[0].mxu0
    %v3929 = vadd.f32 %v3858, %v3928
    %v3930 = vpop.f32.mrb[0].mxu0
    %v3931 = vadd.f32 %v3860, %v3930
    %3932 = vdwg.mxu0
    %v3933 = vadd.f32 %v3695, %v3929
    %v3934 = vadd.f32 %v3696, %v3931
    %v3935 = vld [vmem:[#allocation4 + $0x40] sm:$0x3]
    %v3936 = vld [vmem:[#allocation4 + $0x48] sm:$0x3]
    %v3937 = vld [vmem:[#allocation4 + $0x50] sm:$0x3]
    %s3938 = scalar_lea.vmem [#allocation16], 5120
    %v3939 = vld [vmem:[%s3938] sm:$0xff]
    %v3940 = vld [vmem:[%s3938 + $0x8] sm:$0xff]
    %v3941 = vld [vmem:[%s3938 + $0x10] sm:$0xff]
    %v3942 = vld [vmem:[%s3938 + $0x18] sm:$0xff]
    %v3943 = vld [vmem:[%s3938 + $0x20] sm:$0xff]
    %v3944 = vld [vmem:[%s3938 + $0x28] sm:$0xff]
    %v3945 = vld [vmem:[%s3938 + $0x30] sm:$0xff]
    %v3946 = vld [vmem:[%s3938 + $0x38] sm:$0xff]
    %v3947 = vld [vmem:[%s3938 + $0x40] sm:$0xff]
    %v3948 = vld [vmem:[%s3938 + $0x48] sm:$0xff]
    %v3949 = vld [vmem:[%s3938 + $0x50] sm:$0xff]
    %v3950 = vld [vmem:[%s3938 + $0x58] sm:$0xff]
    %v3951 = vld [vmem:[%s3938 + $0x60] sm:$0xff]
    %v3952 = vld [vmem:[%s3938 + $0x68] sm:$0xff]
    %v3953 = vld [vmem:[%s3938 + $0x70] sm:$0xff]
    %v3954 = vld [vmem:[%s3938 + $0x78] sm:$0xff]
    %v3955 = vld [vmem:[%s3938 + $0x80] sm:$0xff]
    %v3956 = vld [vmem:[%s3938 + $0x88] sm:$0xff]
    %v3957 = vld [vmem:[%s3938 + $0x90] sm:$0xff]
    %v3958 = vld [vmem:[%s3938 + $0x98] sm:$0xff]
    %v3959 = vld [vmem:[%s3938 + $0xa0] sm:$0xff]
    %v3960 = vld [vmem:[%s3938 + $0xa8] sm:$0xff]
    %v3961 = vld [vmem:[%s3938 + $0xb0] sm:$0xff]
    %v3962 = vld [vmem:[%s3938 + $0xb8] sm:$0xff]
    %v3963 = vld [vmem:[%s3938 + $0xc0] sm:$0xff]
    %v3964 = vld [vmem:[%s3938 + $0xc8] sm:$0xff]
    %v3965 = vld [vmem:[%s3938 + $0xd0] sm:$0xff]
    %v3966 = vld [vmem:[%s3938 + $0xd8] sm:$0xff]
    %v3967 = vld [vmem:[%s3938 + $0xe0] sm:$0xff]
    %v3968 = vld [vmem:[%s3938 + $0xe8] sm:$0xff]
    %v3969 = vld [vmem:[%s3938 + $0xf0] sm:$0xff]
    %v3970 = vld [vmem:[%s3938 + $0xf8] sm:$0xff]
    %v3971 = vld [vmem:[%s3938 + $0x100] sm:$0xff]
    %v3972 = vld [vmem:[%s3938 + $0x108] sm:$0xff]
    %v3973 = vld [vmem:[%s3938 + $0x110] sm:$0xff]
    %v3974 = vld [vmem:[%s3938 + $0x118] sm:$0xff]
    %v3975 = vld [vmem:[%s3938 + $0x120] sm:$0xff]
    %v3976 = vld [vmem:[%s3938 + $0x128] sm:$0xff]
    %v3977 = vld [vmem:[%s3938 + $0x130] sm:$0xff]
    %v3978 = vld [vmem:[%s3938 + $0x138] sm:$0xff]
    %v3979 = vld [vmem:[%s3938 + $0x140] sm:$0xff]
    %v3980 = vld [vmem:[%s3938 + $0x148] sm:$0xff]
    %v3981 = vld [vmem:[%s3938 + $0x150] sm:$0xff]
    %v3982 = vld [vmem:[%s3938 + $0x158] sm:$0xff]
    %v3983 = vld [vmem:[%s3938 + $0x160] sm:$0xff]
    %v3984 = vld [vmem:[%s3938 + $0x168] sm:$0xff]
    %v3985 = vld [vmem:[%s3938 + $0x170] sm:$0xff]
    %v3986 = vld [vmem:[%s3938 + $0x178] sm:$0xff]
    %v3987 = vld [vmem:[%s3938 + $0x180] sm:$0xff]
    %v3988 = vld [vmem:[%s3938 + $0x188] sm:$0xff]
    %v3989 = vld [vmem:[%s3938 + $0x190] sm:$0xff]
    %v3990 = vld [vmem:[%s3938 + $0x198] sm:$0xff]
    %v3991 = vld [vmem:[%s3938 + $0x1a0] sm:$0xff]
    %v3992 = vld [vmem:[%s3938 + $0x1a8] sm:$0xff]
    %v3993 = vld [vmem:[%s3938 + $0x1b0] sm:$0xff]
    %v3994 = vld [vmem:[%s3938 + $0x1b8] sm:$0xff]
    %v3995 = vld [vmem:[%s3938 + $0x1c0] sm:$0xff]
    %v3996 = vld [vmem:[%s3938 + $0x1c8] sm:$0xff]
    %v3997 = vld [vmem:[%s3938 + $0x1d0] sm:$0xff]
    %v3998 = vld [vmem:[%s3938 + $0x1d8] sm:$0xff]
    %v3999 = vld [vmem:[%s3938 + $0x1e0] sm:$0xff]
    %v4000 = vld [vmem:[%s3938 + $0x1e8] sm:$0xff]
    %v4001 = vld [vmem:[%s3938 + $0x1f0] sm:$0xff]
    %v4002 = vld [vmem:[%s3938 + $0x1f8] sm:$0xff]
    %v4003 = vld [vmem:[%s3938 + $0x200] sm:$0xff]
    %v4004 = vld [vmem:[%s3938 + $0x208] sm:$0xff]
    %v4005 = vld [vmem:[%s3938 + $0x210] sm:$0xff]
    %v4006 = vld [vmem:[%s3938 + $0x218] sm:$0xff]
    %v4007 = vld [vmem:[%s3938 + $0x220] sm:$0xff]
    %v4008 = vld [vmem:[%s3938 + $0x228] sm:$0xff]
    %v4009 = vld [vmem:[%s3938 + $0x230] sm:$0xff]
    %v4010 = vld [vmem:[%s3938 + $0x238] sm:$0xff]
    %v4011 = vld [vmem:[%s3938 + $0x240] sm:$0xff]
    %v4012 = vld [vmem:[%s3938 + $0x248] sm:$0xff]
    %v4013 = vld [vmem:[%s3938 + $0x250] sm:$0xff]
    %v4014 = vld [vmem:[%s3938 + $0x258] sm:$0xff]
    %v4015 = vld [vmem:[%s3938 + $0x260] sm:$0xff]
    %v4016 = vld [vmem:[%s3938 + $0x268] sm:$0xff]
    %v4017 = vld [vmem:[%s3938 + $0x270] sm:$0xff]
    %v4018 = vld [vmem:[%s3938 + $0x278] sm:$0xff]
    %v4020 = vsel %vm190, %v3937, 0
    %4022 = vmatprep.subr.mxu0 %v3940
    %4023 = vmatpush1.msra.mxu0 %v3939
    %4024 = vmatprep.subr.mxu0 %v3942
    %4025 = vmatpush1.msra.mxu0 %v3941
    %4026 = vmatprep.subr.mxu0 %v3944
    %4027 = vmatpush1.msra.mxu0 %v3943
    %4028 = vmatprep.subr.mxu0 %v3946
    %4029 = vmatpush1.msra.mxu0 %v3945
    %4030 = vmatprep.subr.mxu0 %v3948
    %4031 = vmatpush1.msra.mxu0 %v3947
    %4032 = vmatprep.subr.mxu0 %v3950
    %4033 = vmatpush1.msra.mxu0 %v3949
    %4034 = vmatprep.subr.mxu0 %v3952
    %4035 = vmatpush1.msra.mxu0 %v3951
    %4036 = vmatprep.subr.mxu0 %v3954
    %4037 = vmatpush1.msra.mxu0 %v3953
    %4038 = vmatprep.subr.mxu0 %v3956
    %4039 = vmatpush1.msra.mxu0 %v3955
    %4040 = vmatprep.subr.mxu0 %v3958
    %4041 = vmatpush1.msra.mxu0 %v3957
    %4042 = vmatprep.subr.mxu0 %v3960
    %4043 = vmatpush1.msra.mxu0 %v3959
    %4044 = vmatprep.subr.mxu0 %v3962
    %4045 = vmatpush1.msra.mxu0 %v3961
    %4046 = vmatprep.subr.mxu0 %v3964
    %4047 = vmatpush1.msra.mxu0 %v3963
    %4048 = vmatprep.subr.mxu0 %v3966
    %4049 = vmatpush1.msra.mxu0 %v3965
    %4050 = vmatprep.subr.mxu0 %v3968
    %4051 = vmatpush1.msra.mxu0 %v3967
    %4052 = vmatprep.subr.mxu0 %v3970
    %4053 = vmatpush1.msra.mxu0 %v3969
    %4054 = vmatprep.subr.mxu0 %v3972
    %4055 = vmatpush1.msra.mxu0 %v3971
    %4056 = vmatprep.subr.mxu0 %v3974
    %4057 = vmatpush1.msra.mxu0 %v3973
    %4058 = vmatprep.subr.mxu0 %v3976
    %4059 = vmatpush1.msra.mxu0 %v3975
    %4060 = vmatprep.subr.mxu0 %v3978
    %4061 = vmatpush1.msra.mxu0 %v3977
    %4062 = vmatprep.subr.mxu0 %v3980
    %4063 = vmatpush1.msra.mxu0 %v3979
    %4064 = vmatprep.subr.mxu0 %v3982
    %4065 = vmatpush1.msra.mxu0 %v3981
    %4066 = vmatprep.subr.mxu0 %v3984
    %4067 = vmatpush1.msra.mxu0 %v3983
    %4068 = vmatprep.subr.mxu0 %v3986
    %4069 = vmatpush1.msra.mxu0 %v3985
    %4070 = vmatprep.subr.mxu0 %v3988
    %4071 = vmatpush1.msra.mxu0 %v3987
    %4072 = vmatprep.subr.mxu0 %v3990
    %4073 = vmatpush1.msra.mxu0 %v3989
    %4074 = vmatprep.subr.mxu0 %v3992
    %4075 = vmatpush1.msra.mxu0 %v3991
    %4076 = vmatprep.subr.mxu0 %v3994
    %4077 = vmatpush1.msra.mxu0 %v3993
    %4078 = vmatprep.subr.mxu0 %v3996
    %4079 = vmatpush1.msra.mxu0 %v3995
    %4080 = vmatprep.subr.mxu0 %v3998
    %4081 = vmatpush1.msra.mxu0 %v3997
    %4082 = vmatprep.subr.mxu0 %v4000
    %4083 = vmatpush1.msra.mxu0 %v3999
    %4084 = vmatprep.subr.mxu0 %v4002
    %4085 = vmatpush1.msra.mxu0 %v4001
    %4086 = vmatprep.mubr.f32.mxu0 %v3936
    %4087 = vmatmul.mubr.f32.gmra.mrb[0].mxu0 %v3935
    %v4088 = vpop.f32.mrb[0].mxu0
    %v4089 = vadd.f32 0.0, %v4088
    %v4090 = vpop.f32.mrb[0].mxu0
    %v4091 = vadd.f32 0.0, %v4090
    %4092 = vdwg.mxu0
    %4093 = vmatprep.subr.mxu0 %v4004
    %4094 = vmatpush1.msra.mxu0 %v4003
    %4095 = vmatprep.subr.mxu0 %v4006
    %4096 = vmatpush1.msra.mxu0 %v4005
    %4097 = vmatprep.subr.mxu0 %v4008
    %4098 = vmatpush1.msra.mxu0 %v4007
    %4099 = vmatprep.subr.mxu0 %v4010
    %4100 = vmatpush1.msra.mxu0 %v4009
    %4101 = vmatprep.subr.mxu0 %v4012
    %4102 = vmatpush1.msra.mxu0 %v4011
    %4103 = vmatprep.subr.mxu0 %v4014
    %4104 = vmatpush1.msra.mxu0 %v4013
    %4105 = vmatprep.subr.mxu0 %v4016
    %4106 = vmatpush1.msra.mxu0 %v4015
    %4107 = vmatprep.subr.mxu0 %v4018
    %4108 = vmatpush1.msra.mxu0 %v4017
    %4109 = vmatprep.subr.mxu0 0.0
    %4110 = vmatpush1.msra.mxu0 0.0
    %4111 = vmatprep.subr.mxu0 0.0
    %4112 = vmatpush1.msra.mxu0 0.0
    %4113 = vmatprep.subr.mxu0 0.0
    %4114 = vmatpush1.msra.mxu0 0.0
    %4115 = vmatprep.subr.mxu0 0.0
    %4116 = vmatpush1.msra.mxu0 0.0
    %4117 = vmatprep.subr.mxu0 0.0
    %4118 = vmatpush1.msra.mxu0 0.0
    %4119 = vmatprep.subr.mxu0 0.0
    %4120 = vmatpush1.msra.mxu0 0.0
    %4121 = vmatprep.subr.mxu0 0.0
    %4122 = vmatpush1.msra.mxu0 0.0
    %4123 = vmatprep.subr.mxu0 0.0
    %4124 = vmatpush1.msra.mxu0 0.0
    %4125 = vmatprep.subr.mxu0 0.0
    %4126 = vmatpush1.msra.mxu0 0.0
    %4127 = vmatprep.subr.mxu0 0.0
    %4128 = vmatpush1.msra.mxu0 0.0
    %4129 = vmatprep.subr.mxu0 0.0
    %4130 = vmatpush1.msra.mxu0 0.0
    %4131 = vmatprep.subr.mxu0 0.0
    %4132 = vmatpush1.msra.mxu0 0.0
    %4133 = vmatprep.subr.mxu0 0.0
    %4134 = vmatpush1.msra.mxu0 0.0
    %4135 = vmatprep.subr.mxu0 0.0
    %4136 = vmatpush1.msra.mxu0 0.0
    %4137 = vmatprep.subr.mxu0 0.0
    %4138 = vmatpush1.msra.mxu0 0.0
    %4139 = vmatprep.subr.mxu0 0.0
    %4140 = vmatpush1.msra.mxu0 0.0
    %4141 = vmatprep.subr.mxu0 0.0
    %4142 = vmatpush1.msra.mxu0 0.0
    %4143 = vmatprep.subr.mxu0 0.0
    %4144 = vmatpush1.msra.mxu0 0.0
    %4145 = vmatprep.subr.mxu0 0.0
    %4146 = vmatpush1.msra.mxu0 0.0
    %4147 = vmatprep.subr.mxu0 0.0
    %4148 = vmatpush1.msra.mxu0 0.0
    %4149 = vmatprep.subr.mxu0 0.0
    %4150 = vmatpush1.msra.mxu0 0.0
    %4151 = vmatprep.subr.mxu0 0.0
    %4152 = vmatpush1.msra.mxu0 0.0
    %4153 = vmatprep.subr.mxu0 0.0
    %4154 = vmatpush1.msra.mxu0 0.0
    %4155 = vmatprep.subr.mxu0 0.0
    %4156 = vmatpush1.msra.mxu0 0.0
    %4157 = vmatprep.mubr.f32.mxu0 0.0
    %4158 = vmatmul.mubr.f32.gmra.mrb[0].mxu0 %v4020
    %v4159 = vpop.f32.mrb[0].mxu0
    %v4160 = vadd.f32 %v4089, %v4159
    %v4161 = vpop.f32.mrb[0].mxu0
    %v4162 = vadd.f32 %v4091, %v4161
    %4163 = vdwg.mxu0
    %v4164 = vadd.f32 %v3933, %v4160
    %v4165 = vadd.f32 %v3934, %v4162
    %v4166 = vld [vmem:[#allocation4 + $0x40] sm:$0xc]
    %v4167 = vld [vmem:[#allocation4 + $0x48] sm:$0xc]
    %v4168 = vld [vmem:[#allocation4 + $0x50] sm:$0xc]
    %s4169 = scalar_lea.vmem [#allocation16], 5760
    %v4170 = vld [vmem:[%s4169] sm:$0xff]
    %v4171 = vld [vmem:[%s4169 + $0x8] sm:$0xff]
    %v4172 = vld [vmem:[%s4169 + $0x10] sm:$0xff]
    %v4173 = vld [vmem:[%s4169 + $0x18] sm:$0xff]
    %v4174 = vld [vmem:[%s4169 + $0x20] sm:$0xff]
    %v4175 = vld [vmem:[%s4169 + $0x28] sm:$0xff]
    %v4176 = vld [vmem:[%s4169 + $0x30] sm:$0xff]
    %v4177 = vld [vmem:[%s4169 + $0x38] sm:$0xff]
    %v4178 = vld [vmem:[%s4169 + $0x40] sm:$0xff]
    %v4179 = vld [vmem:[%s4169 + $0x48] sm:$0xff]
    %v4180 = vld [vmem:[%s4169 + $0x50] sm:$0xff]
    %v4181 = vld [vmem:[%s4169 + $0x58] sm:$0xff]
    %v4182 = vld [vmem:[%s4169 + $0x60] sm:$0xff]
    %v4183 = vld [vmem:[%s4169 + $0x68] sm:$0xff]
    %v4184 = vld [vmem:[%s4169 + $0x70] sm:$0xff]
    %v4185 = vld [vmem:[%s4169 + $0x78] sm:$0xff]
    %v4186 = vld [vmem:[%s4169 + $0x80] sm:$0xff]
    %v4187 = vld [vmem:[%s4169 + $0x88] sm:$0xff]
    %v4188 = vld [vmem:[%s4169 + $0x90] sm:$0xff]
    %v4189 = vld [vmem:[%s4169 + $0x98] sm:$0xff]
    %v4190 = vld [vmem:[%s4169 + $0xa0] sm:$0xff]
    %v4191 = vld [vmem:[%s4169 + $0xa8] sm:$0xff]
    %v4192 = vld [vmem:[%s4169 + $0xb0] sm:$0xff]
    %v4193 = vld [vmem:[%s4169 + $0xb8] sm:$0xff]
    %v4194 = vld [vmem:[%s4169 + $0xc0] sm:$0xff]
    %v4195 = vld [vmem:[%s4169 + $0xc8] sm:$0xff]
    %v4196 = vld [vmem:[%s4169 + $0xd0] sm:$0xff]
    %v4197 = vld [vmem:[%s4169 + $0xd8] sm:$0xff]
    %v4198 = vld [vmem:[%s4169 + $0xe0] sm:$0xff]
    %v4199 = vld [vmem:[%s4169 + $0xe8] sm:$0xff]
    %v4200 = vld [vmem:[%s4169 + $0xf0] sm:$0xff]
    %v4201 = vld [vmem:[%s4169 + $0xf8] sm:$0xff]
    %v4202 = vld [vmem:[%s4169 + $0x100] sm:$0xff]
    %v4203 = vld [vmem:[%s4169 + $0x108] sm:$0xff]
    %v4204 = vld [vmem:[%s4169 + $0x110] sm:$0xff]
    %v4205 = vld [vmem:[%s4169 + $0x118] sm:$0xff]
    %v4206 = vld [vmem:[%s4169 + $0x120] sm:$0xff]
    %v4207 = vld [vmem:[%s4169 + $0x128] sm:$0xff]
    %v4208 = vld [vmem:[%s4169 + $0x130] sm:$0xff]
    %v4209 = vld [vmem:[%s4169 + $0x138] sm:$0xff]
    %v4210 = vld [vmem:[%s4169 + $0x140] sm:$0xff]
    %v4211 = vld [vmem:[%s4169 + $0x148] sm:$0xff]
    %v4212 = vld [vmem:[%s4169 + $0x150] sm:$0xff]
    %v4213 = vld [vmem:[%s4169 + $0x158] sm:$0xff]
    %v4214 = vld [vmem:[%s4169 + $0x160] sm:$0xff]
    %v4215 = vld [vmem:[%s4169 + $0x168] sm:$0xff]
    %v4216 = vld [vmem:[%s4169 + $0x170] sm:$0xff]
    %v4217 = vld [vmem:[%s4169 + $0x178] sm:$0xff]
    %v4218 = vld [vmem:[%s4169 + $0x180] sm:$0xff]
    %v4219 = vld [vmem:[%s4169 + $0x188] sm:$0xff]
    %v4220 = vld [vmem:[%s4169 + $0x190] sm:$0xff]
    %v4221 = vld [vmem:[%s4169 + $0x198] sm:$0xff]
    %v4222 = vld [vmem:[%s4169 + $0x1a0] sm:$0xff]
    %v4223 = vld [vmem:[%s4169 + $0x1a8] sm:$0xff]
    %v4224 = vld [vmem:[%s4169 + $0x1b0] sm:$0xff]
    %v4225 = vld [vmem:[%s4169 + $0x1b8] sm:$0xff]
    %v4226 = vld [vmem:[%s4169 + $0x1c0] sm:$0xff]
    %v4227 = vld [vmem:[%s4169 + $0x1c8] sm:$0xff]
    %v4228 = vld [vmem:[%s4169 + $0x1d0] sm:$0xff]
    %v4229 = vld [vmem:[%s4169 + $0x1d8] sm:$0xff]
    %v4230 = vld [vmem:[%s4169 + $0x1e0] sm:$0xff]
    %v4231 = vld [vmem:[%s4169 + $0x1e8] sm:$0xff]
    %v4232 = vld [vmem:[%s4169 + $0x1f0] sm:$0xff]
    %v4233 = vld [vmem:[%s4169 + $0x1f8] sm:$0xff]
    %v4234 = vld [vmem:[%s4169 + $0x200] sm:$0xff]
    %v4235 = vld [vmem:[%s4169 + $0x208] sm:$0xff]
    %v4236 = vld [vmem:[%s4169 + $0x210] sm:$0xff]
    %v4237 = vld [vmem:[%s4169 + $0x218] sm:$0xff]
    %v4238 = vld [vmem:[%s4169 + $0x220] sm:$0xff]
    %v4239 = vld [vmem:[%s4169 + $0x228] sm:$0xff]
    %v4240 = vld [vmem:[%s4169 + $0x230] sm:$0xff]
    %v4241 = vld [vmem:[%s4169 + $0x238] sm:$0xff]
    %v4242 = vld [vmem:[%s4169 + $0x240] sm:$0xff]
    %v4243 = vld [vmem:[%s4169 + $0x248] sm:$0xff]
    %v4244 = vld [vmem:[%s4169 + $0x250] sm:$0xff]
    %v4245 = vld [vmem:[%s4169 + $0x258] sm:$0xff]
    %v4246 = vld [vmem:[%s4169 + $0x260] sm:$0xff]
    %v4247 = vld [vmem:[%s4169 + $0x268] sm:$0xff]
    %v4248 = vld [vmem:[%s4169 + $0x270] sm:$0xff]
    %v4249 = vld [vmem:[%s4169 + $0x278] sm:$0xff]
    %v4253 = vrot.slane %v4166, 2
    %v4254 = vrot.slane %v4167, 2
    %v4255 = vrot.slane %v4168, 2
    %v4258 = vsel %vm190, %v4255, 0
    %4260 = vmatprep.subr.mxu0 %v4171
    %4261 = vmatpush1.msra.mxu0 %v4170
    %4262 = vmatprep.subr.mxu0 %v4173
    %4263 = vmatpush1.msra.mxu0 %v4172
    %4264 = vmatprep.subr.mxu0 %v4175
    %4265 = vmatpush1.msra.mxu0 %v4174
    %4266 = vmatprep.subr.mxu0 %v4177
    %4267 = vmatpush1.msra.mxu0 %v4176
    %4268 = vmatprep.subr.mxu0 %v4179
    %4269 = vmatpush1.msra.mxu0 %v4178
    %4270 = vmatprep.subr.mxu0 %v4181
    %4271 = vmatpush1.msra.mxu0 %v4180
    %4272 = vmatprep.subr.mxu0 %v4183
    %4273 = vmatpush1.msra.mxu0 %v4182
    %4274 = vmatprep.subr.mxu0 %v4185
    %4275 = vmatpush1.msra.mxu0 %v4184
    %4276 = vmatprep.subr.mxu0 %v4187
    %4277 = vmatpush1.msra.mxu0 %v4186
    %4278 = vmatprep.subr.mxu0 %v4189
    %4279 = vmatpush1.msra.mxu0 %v4188
    %4280 = vmatprep.subr.mxu0 %v4191
    %4281 = vmatpush1.msra.mxu0 %v4190
    %4282 = vmatprep.subr.mxu0 %v4193
    %4283 = vmatpush1.msra.mxu0 %v4192
    %4284 = vmatprep.subr.mxu0 %v4195
    %4285 = vmatpush1.msra.mxu0 %v4194
    %4286 = vmatprep.subr.mxu0 %v4197
    %4287 = vmatpush1.msra.mxu0 %v4196
    %4288 = vmatprep.subr.mxu0 %v4199
    %4289 = vmatpush1.msra.mxu0 %v4198
    %4290 = vmatprep.subr.mxu0 %v4201
    %4291 = vmatpush1.msra.mxu0 %v4200
    %4292 = vmatprep.subr.mxu0 %v4203
    %4293 = vmatpush1.msra.mxu0 %v4202
    %4294 = vmatprep.subr.mxu0 %v4205
    %4295 = vmatpush1.msra.mxu0 %v4204
    %4296 = vmatprep.subr.mxu0 %v4207
    %4297 = vmatpush1.msra.mxu0 %v4206
    %4298 = vmatprep.subr.mxu0 %v4209
    %4299 = vmatpush1.msra.mxu0 %v4208
    %4300 = vmatprep.subr.mxu0 %v4211
    %4301 = vmatpush1.msra.mxu0 %v4210
    %4302 = vmatprep.subr.mxu0 %v4213
    %4303 = vmatpush1.msra.mxu0 %v4212
    %4304 = vmatprep.subr.mxu0 %v4215
    %4305 = vmatpush1.msra.mxu0 %v4214
    %4306 = vmatprep.subr.mxu0 %v4217
    %4307 = vmatpush1.msra.mxu0 %v4216
    %4308 = vmatprep.subr.mxu0 %v4219
    %4309 = vmatpush1.msra.mxu0 %v4218
    %4310 = vmatprep.subr.mxu0 %v4221
    %4311 = vmatpush1.msra.mxu0 %v4220
    %4312 = vmatprep.subr.mxu0 %v4223
    %4313 = vmatpush1.msra.mxu0 %v4222
    %4314 = vmatprep.subr.mxu0 %v4225
    %4315 = vmatpush1.msra.mxu0 %v4224
    %4316 = vmatprep.subr.mxu0 %v4227
    %4317 = vmatpush1.msra.mxu0 %v4226
    %4318 = vmatprep.subr.mxu0 %v4229
    %4319 = vmatpush1.msra.mxu0 %v4228
    %4320 = vmatprep.subr.mxu0 %v4231
    %4321 = vmatpush1.msra.mxu0 %v4230
    %4322 = vmatprep.subr.mxu0 %v4233
    %4323 = vmatpush1.msra.mxu0 %v4232
    %4324 = vmatprep.mubr.f32.mxu0 %v4254
    %4325 = vmatmul.mubr.f32.gmra.mrb[0].mxu0 %v4253
    %v4326 = vpop.f32.mrb[0].mxu0
    %v4327 = vadd.f32 0.0, %v4326
    %v4328 = vpop.f32.mrb[0].mxu0
    %v4329 = vadd.f32 0.0, %v4328
    %4330 = vdwg.mxu0
    %4331 = vmatprep.subr.mxu0 %v4235
    %4332 = vmatpush1.msra.mxu0 %v4234
    %4333 = vmatprep.subr.mxu0 %v4237
    %4334 = vmatpush1.msra.mxu0 %v4236
    %4335 = vmatprep.subr.mxu0 %v4239
    %4336 = vmatpush1.msra.mxu0 %v4238
    %4337 = vmatprep.subr.mxu0 %v4241
    %4338 = vmatpush1.msra.mxu0 %v4240
    %4339 = vmatprep.subr.mxu0 %v4243
    %4340 = vmatpush1.msra.mxu0 %v4242
    %4341 = vmatprep.subr.mxu0 %v4245
    %4342 = vmatpush1.msra.mxu0 %v4244
    %4343 = vmatprep.subr.mxu0 %v4247
    %4344 = vmatpush1.msra.mxu0 %v4246
    %4345 = vmatprep.subr.mxu0 %v4249
    %4346 = vmatpush1.msra.mxu0 %v4248
    %4347 = vmatprep.subr.mxu0 0.0
    %4348 = vmatpush1.msra.mxu0 0.0
    %4349 = vmatprep.subr.mxu0 0.0
    %4350 = vmatpush1.msra.mxu0 0.0
    %4351 = vmatprep.subr.mxu0 0.0
    %4352 = vmatpush1.msra.mxu0 0.0
    %4353 = vmatprep.subr.mxu0 0.0
    %4354 = vmatpush1.msra.mxu0 0.0
    %4355 = vmatprep.subr.mxu0 0.0
    %4356 = vmatpush1.msra.mxu0 0.0
    %4357 = vmatprep.subr.mxu0 0.0
    %4358 = vmatpush1.msra.mxu0 0.0
    %4359 = vmatprep.subr.mxu0 0.0
    %4360 = vmatpush1.msra.mxu0 0.0
    %4361 = vmatprep.subr.mxu0 0.0
    %4362 = vmatpush1.msra.mxu0 0.0
    %4363 = vmatprep.subr.mxu0 0.0
    %4364 = vmatpush1.msra.mxu0 0.0
    %4365 = vmatprep.subr.mxu0 0.0
    %4366 = vmatpush1.msra.mxu0 0.0
    %4367 = vmatprep.subr.mxu0 0.0
    %4368 = vmatpush1.msra.mxu0 0.0
    %4369 = vmatprep.subr.mxu0 0.0
    %4370 = vmatpush1.msra.mxu0 0.0
    %4371 = vmatprep.subr.mxu0 0.0
    %4372 = vmatpush1.msra.mxu0 0.0
    %4373 = vmatprep.subr.mxu0 0.0
    %4374 = vmatpush1.msra.mxu0 0.0
    %4375 = vmatprep.subr.mxu0 0.0
    %4376 = vmatpush1.msra.mxu0 0.0
    %4377 = vmatprep.subr.mxu0 0.0
    %4378 = vmatpush1.msra.mxu0 0.0
    %4379 = vmatprep.subr.mxu0 0.0
    %4380 = vmatpush1.msra.mxu0 0.0
    %4381 = vmatprep.subr.mxu0 0.0
    %4382 = vmatpush1.msra.mxu0 0.0
    %4383 = vmatprep.subr.mxu0 0.0
    %4384 = vmatpush1.msra.mxu0 0.0
    %4385 = vmatprep.subr.mxu0 0.0
    %4386 = vmatpush1.msra.mxu0 0.0
    %4387 = vmatprep.subr.mxu0 0.0
    %4388 = vmatpush1.msra.mxu0 0.0
    %4389 = vmatprep.subr.mxu0 0.0
    %4390 = vmatpush1.msra.mxu0 0.0
    %4391 = vmatprep.subr.mxu0 0.0
    %4392 = vmatpush1.msra.mxu0 0.0
    %4393 = vmatprep.subr.mxu0 0.0
    %4394 = vmatpush1.msra.mxu0 0.0
    %4395 = vmatprep.mubr.f32.mxu0 0.0
    %4396 = vmatmul.mubr.f32.gmra.mrb[0].mxu0 %v4258
    %v4397 = vpop.f32.mrb[0].mxu0
    %v4398 = vadd.f32 %v4327, %v4397
    %v4399 = vpop.f32.mrb[0].mxu0
    %v4400 = vadd.f32 %v4329, %v4399
    %4401 = vdwg.mxu0
    %v4402 = vadd.f32 %v4164, %v4398
    %v4403 = vadd.f32 %v4165, %v4400
    %v4404 = vld [vmem:[#allocation17] sm:$0x3]
    %v4406 = vlaneseq
    %v4407 = vshrl.u32 %v4406, 7
    %v4408 = vsub.s32 0, %v4407
    %v4409 = vrot.slane %v4404, %v4408
    %v4410 = vlaneseq
    %v4411 = vshrl.u32 %v4410, 7
    %v4412 = vsub.s32 1, %v4411
    %v4413 = vrot.slane %v4404, %v4412
    %v4416 = vadd.f32 %v4402, %v4409
    %v4417 = vadd.f32 %v4403, %v4413
    %v4418 = vmax.f32 %v4416, 0.0
    %v4419 = vmax.f32 %v4417, 0.0
    %v4420 = vld [vmem:[#allocation19] sm:$0xff]
    %v4421 = vld [vmem:[#allocation19 + $0x8] sm:$0xff]
    %v4422 = vld [vmem:[#allocation19 + $0x10] sm:$0xff]
    %v4423 = vld [vmem:[#allocation19 + $0x18] sm:$0xff]
    %v4424 = vld [vmem:[#allocation19 + $0x20] sm:$0xff]
    %v4425 = vld [vmem:[#allocation19 + $0x28] sm:$0xff]
    %v4426 = vld [vmem:[#allocation19 + $0x30] sm:$0xff]
    %v4427 = vld [vmem:[#allocation19 + $0x38] sm:$0xff]
    %v4428 = vld [vmem:[#allocation19 + $0x40] sm:$0xff]
    %v4429 = vld [vmem:[#allocation19 + $0x48] sm:$0xff]
    %v4430 = vld [vmem:[#allocation19 + $0x50] sm:$0xff]
    %v4431 = vld [vmem:[#allocation19 + $0x58] sm:$0xff]
    %v4432 = vld [vmem:[#allocation19 + $0x60] sm:$0xff]
    %v4433 = vld [vmem:[#allocation19 + $0x68] sm:$0xff]
    %v4434 = vld [vmem:[#allocation19 + $0x70] sm:$0xff]
    %v4435 = vld [vmem:[#allocation19 + $0x78] sm:$0xff]
    %v4436 = vld [vmem:[#allocation19 + $0x80] sm:$0xff]
    %v4437 = vld [vmem:[#allocation19 + $0x88] sm:$0xff]
    %v4438 = vld [vmem:[#allocation19 + $0x90] sm:$0xff]
    %v4439 = vld [vmem:[#allocation19 + $0x98] sm:$0xff]
    %v4440 = vld [vmem:[#allocation19 + $0xa0] sm:$0xff]
    %v4441 = vld [vmem:[#allocation19 + $0xa8] sm:$0xff]
    %v4442 = vld [vmem:[#allocation19 + $0xb0] sm:$0xff]
    %v4443 = vld [vmem:[#allocation19 + $0xb8] sm:$0xff]
    %v4444 = vld [vmem:[#allocation19 + $0xc0] sm:$0xff]
    %v4445 = vld [vmem:[#allocation19 + $0xc8] sm:$0xff]
    %v4446 = vld [vmem:[#allocation19 + $0xd0] sm:$0xff]
    %v4447 = vld [vmem:[#allocation19 + $0xd8] sm:$0xff]
    %v4448 = vld [vmem:[#allocation19 + $0xe0] sm:$0xff]
    %v4449 = vld [vmem:[#allocation19 + $0xe8] sm:$0xff]
    %v4450 = vld [vmem:[#allocation19 + $0xf0] sm:$0xff]
    %v4451 = vld [vmem:[#allocation19 + $0xf8] sm:$0xff]
    %v4452 = vld [vmem:[#allocation20] sm:$0x1]
    %v4454 = vlaneseq
    %v4455 = vshrl.u32 %v4454, 7
    %v4456 = vsub.s32 0, %v4455
    %v4457 = vrot.slane %v4452, %v4456
    %4459 = vmatprep.subr.mxu0 0.0
    %4460 = vmatpush1.msra.mxu0 %v4420
    %4461 = vmatprep.subr.mxu0 0.0
    %4462 = vmatpush1.msra.mxu0 %v4421
    %4463 = vmatprep.subr.mxu0 0.0
    %4464 = vmatpush1.msra.mxu0 %v4422
    %4465 = vmatprep.subr.mxu0 0.0
    %4466 = vmatpush1.msra.mxu0 %v4423
    %4467 = vmatprep.subr.mxu0 0.0
    %4468 = vmatpush1.msra.mxu0 %v4424
    %4469 = vmatprep.subr.mxu0 0.0
    %4470 = vmatpush1.msra.mxu0 %v4425
    %4471 = vmatprep.subr.mxu0 0.0
    %4472 = vmatpush1.msra.mxu0 %v4426
    %4473 = vmatprep.subr.mxu0 0.0
    %4474 = vmatpush1.msra.mxu0 %v4427
    %4475 = vmatprep.subr.mxu0 0.0
    %4476 = vmatpush1.msra.mxu0 %v4428
    %4477 = vmatprep.subr.mxu0 0.0
    %4478 = vmatpush1.msra.mxu0 %v4429
    %4479 = vmatprep.subr.mxu0 0.0
    %4480 = vmatpush1.msra.mxu0 %v4430
    %4481 = vmatprep.subr.mxu0 0.0
    %4482 = vmatpush1.msra.mxu0 %v4431
    %4483 = vmatprep.subr.mxu0 0.0
    %4484 = vmatpush1.msra.mxu0 %v4432
    %4485 = vmatprep.subr.mxu0 0.0
    %4486 = vmatpush1.msra.mxu0 %v4433
    %4487 = vmatprep.subr.mxu0 0.0
    %4488 = vmatpush1.msra.mxu0 %v4434
    %4489 = vmatprep.subr.mxu0 0.0
    %4490 = vmatpush1.msra.mxu0 %v4435
    %4491 = vmatprep.subr.mxu0 0.0
    %4492 = vmatpush1.msra.mxu0 %v4436
    %4493 = vmatprep.subr.mxu0 0.0
    %4494 = vmatpush1.msra.mxu0 %v4437
    %4495 = vmatprep.subr.mxu0 0.0
    %4496 = vmatpush1.msra.mxu0 %v4438
    %4497 = vmatprep.subr.mxu0 0.0
    %4498 = vmatpush1.msra.mxu0 %v4439
    %4499 = vmatprep.subr.mxu0 0.0
    %4500 = vmatpush1.msra.mxu0 %v4440
    %4501 = vmatprep.subr.mxu0 0.0
    %4502 = vmatpush1.msra.mxu0 %v4441
    %4503 = vmatprep.subr.mxu0 0.0
    %4504 = vmatpush1.msra.mxu0 %v4442
    %4505 = vmatprep.subr.mxu0 0.0
    %4506 = vmatpush1.msra.mxu0 %v4443
    %4507 = vmatprep.subr.mxu0 0.0
    %4508 = vmatpush1.msra.mxu0 %v4444
    %4509 = vmatprep.subr.mxu0 0.0
    %4510 = vmatpush1.msra.mxu0 %v4445
    %4511 = vmatprep.subr.mxu0 0.0
    %4512 = vmatpush1.msra.mxu0 %v4446
    %4513 = vmatprep.subr.mxu0 0.0
    %4514 = vmatpush1.msra.mxu0 %v4447
    %4515 = vmatprep.subr.mxu0 0.0
    %4516 = vmatpush1.msra.mxu0 %v4448
    %4517 = vmatprep.subr.mxu0 0.0
    %4518 = vmatpush1.msra.mxu0 %v4449
    %4519 = vmatprep.subr.mxu0 0.0
    %4520 = vmatpush1.msra.mxu0 %v4450
    %4521 = vmatprep.subr.mxu0 0.0
    %4522 = vmatpush1.msra.mxu0 %v4451
    %4523 = vmatprep.mubr.f32.mxu0 %v4419
    %4524 = vmatmul.mubr.f32.gmra.mrb[0].mxu0 %v4418
    %v4525 = vpop.f32.mrb[0].mxu0
    %v4526 = vadd.f32 %v4457, %v4525
    %v4527 = vpop.f32.mrb[0].mxu0
    %4528 = vdwg.mxu0
    %4529 = vst [vmem:[#allocation22] sm:$0x3] %v4526
    // Predicated region
    $region86: #{dqn_forward.1} parent=1 // pred_check
      _
    $region87: #{dqn_forward.1} parent=1 // pred_check_branch
      %4531 = sbr.rel (0) target = $region89
    $region88: #{dqn_forward.1} parent=1 // pred_region
      %s4533 = ssub.s32 32, 32
      %4534 = vsyncadd [#allocation7], %s4533
      %s4536 = sshll.u32 [#allocation22], 4
      %s4537 = int_to_ptr.vmem [resolvable:$true] %s4536
      %4539 = dma.vmem_to_hbm [thread:$0]  %s4537, 32, %s11, [#allocation7]
    $region89: #{dqn_forward.1} parent=1 // pred_fallthru
      _
    // Predicated region
    $region90: #{dqn_forward.1} parent=1 // pred_check
      _
    $region91: #{dqn_forward.1} parent=1 // pred_check_branch
      %4541 = sbr.rel (0) target = $region93
    $region92: #{dqn_forward.1} parent=1 // pred_region
      %4542 = dma.done [#allocation7], 32
    $region93: #{dqn_forward.1} parent=1 // pred_fallthru
      _
    %4543 = vsyncpa [#allocation6], 1
    %4544 = vsyncpa [#allocation9], 1
    %4545 = vsyncpa [#allocation12], 1
    %4546 = vsyncpa [#allocation15], 1
    %4547 = vsyncpa [#allocation18], 1
    %4548 = vsyncpa [#allocation21], 1
    %4549 = vsyncpa [#allocation7], 1

</llo_original>
